<compile_context>
chip_gen: v5e
topology: v5e:2x2
jax: 0.10.0
libtpu: 0.0.40
codegen_flags: <defaults>
</compile_context>

<pallas_src>
import math
import functools

import jax
import jax.numpy as jnp
from jax import lax
from jax.experimental import pallas as pl
from jax.experimental.pallas import tpu as pltpu

LN_EPS = 1e-5  # nn.LayerNorm default


# ---------------------------------------------------------------------------
# Positional encoding — faithful to the PyTorch helper (which, because of the
# floor-division, uses exponent 0 for every dim < d_model; intentionally kept
# identical to the reference module, not the "standard" sinusoidal PE).
# ---------------------------------------------------------------------------
def positional_encoding(seq_len: int, dim_model: int) -> jnp.ndarray:
    pos = jnp.arange(seq_len, dtype=jnp.float32).reshape(1, -1, 1)
    dim = jnp.arange(dim_model, dtype=jnp.float32).reshape(1, 1, -1)
    phase = pos / jnp.power(10000.0, jnp.floor(dim / dim_model))
    return jnp.where(dim.astype(jnp.int32) % 2 == 0, jnp.sin(phase), jnp.cos(phase))


# ---------------------------------------------------------------------------
# The single fused kernel: whole decoder forward (eval mode).
# ---------------------------------------------------------------------------
def decoder_kernel(src_ref, mem_ref, pos_ref,
                   a1_wqkv, a1_bqkv, a1_wo, a1_bo, a1_g, a1_b,
                   a2_wq, a2_bq, a2_wkv, a2_bkv, a2_wo, a2_bo, a2_g, a2_b,
                   ff_w1, ff_b1, ff_w2, ff_b2, ff_g, ff_b,
                   wf_ref, bf_ref, o_ref, *,
                   num_layers: int, num_heads: int, d_head: int,
                   causal: bool, eps: float):
    B, L, D = src_ref.shape
    HD = num_heads * d_head
    BL = B * L

    def layer_norm(y, g, b):
        mu = jnp.mean(y, axis=-1, keepdims=True)
        yc = y - mu
        var = jnp.mean(yc * yc, axis=-1, keepdims=True)
        return yc * lax.rsqrt(var + eps) * g + b

    # Causal additive bias hoisted: built ONCE, reused by every head & layer.
    # (Faithful to the module: when mask=True the same causal mask is also
    # applied to cross-attention, as the PyTorch AttentionHead does.)
    if causal:
        row = lax.broadcasted_iota(jnp.int32, (L, L), 0)
        col = lax.broadcasted_iota(jnp.int32, (L, L), 1)
        causal_bias = jnp.where(col > row, -1e30, 0.0).astype(jnp.float32)
    else:
        causal_bias = None

    def mha(q_all, k_all, v_all, wo, bo):
        """q_all/k_all/v_all: (B*L, H*dh) packed head-major; returns (B*L, D)."""
        out = None
        for h in range(num_heads):                       # static unroll (H=4)
            lo, hi = h * d_head, (h + 1) * d_head
            qh = q_all[:, lo:hi].reshape(B, L, d_head)
            kh = k_all[:, lo:hi].reshape(B, L, d_head)
            vh = v_all[:, lo:hi].reshape(B, L, d_head)
            # scores (scale already folded into Wq/bq at pack time)
            s = jnp.einsum("bqd,bkd->bqk", qh, kh,
                           preferred_element_type=jnp.float32)        # (B,L,L)
            if causal_bias is not None:
                s = s + causal_bias
            m = jnp.max(s, axis=-1, keepdims=True)
            e = jnp.exp(s - m)
            inv = pl.reciprocal(jnp.sum(e, axis=-1, keepdims=True), approx=True)
            ctx = jnp.einsum("bqk,bkd->bqd", e * inv, vh,
                             preferred_element_type=jnp.float32)      # (B,L,dh)
            # Accumulate through the matching rows of Wo instead of concat.
            contrib = jnp.dot(ctx.reshape(BL, d_head), wo[lo:hi, :],
                              preferred_element_type=jnp.float32)
            out = contrib if out is None else out + contrib
        return out + bo

    # Flatten batch so every projection / FFN / LayerNorm is one (B*L, D) op.
    x = (src_ref[...] + pos_ref[...]).reshape(BL, D)
    mem = mem_ref[...].reshape(BL, D)

    for l in range(num_layers):                          # static unroll
        # ---- self-attention + residual + LayerNorm (dropout = eval identity)
        # TODO(synk): nn.Dropout(p=0.1) omitted (eval-mode identity).
        qkv = jnp.dot(x, a1_wqkv[l], preferred_element_type=jnp.float32) + a1_bqkv[l]
        attn = mha(qkv[:, :HD], qkv[:, HD:2 * HD], qkv[:, 2 * HD:],
                   a1_wo[l], a1_bo[l])
        x = layer_norm(attn + x, a1_g[l], a1_b[l])

        # ---- cross-attention + residual + LayerNorm ----
        q = jnp.dot(x, a2_wq[l], preferred_element_type=jnp.float32) + a2_bq[l]
        kv = jnp.dot(mem, a2_wkv[l], preferred_element_type=jnp.float32) + a2_bkv[l]
        attn = mha(q, kv[:, :HD], kv[:, HD:], a2_wo[l], a2_bo[l])
        x = layer_norm(attn + x, a2_g[l], a2_b[l])

        # ---- feed-forward (Linear -> ReLU -> Linear) + residual + LayerNorm
        h1 = jnp.maximum(
            jnp.dot(x, ff_w1[l], preferred_element_type=jnp.float32) + ff_b1[l], 0.0)
        y = jnp.dot(h1, ff_w2[l], preferred_element_type=jnp.float32) + ff_b2[l] + x
        x = layer_norm(y, ff_g[l], ff_b[l])

    # Final nn.Linear(d_model, d_model).
    # TODO(synk): the PyTorch forward re-initializes this Linear with fresh
    # random weights on every call; fixed deterministic weights are used here.
    out = jnp.dot(x, wf_ref[...], preferred_element_type=jnp.float32) + bf_ref[...]
    o_ref[...] = out.reshape(B, L, D)


# ---------------------------------------------------------------------------
# One-time parameter packing (runs once, OUTSIDE the jitted forward).
# ---------------------------------------------------------------------------
def pack_decoder_params(params, *, num_heads: int, d_head: int, seq_len: int):
    H, dh = num_heads, d_head
    D = params["wf_t"].shape[0]
    HD = H * dh
    scale = 1.0 / math.sqrt(dh)

    def heads_to_cols(w):                      # (H, D, dh) -> (D, H*dh)
        return jnp.transpose(w, (1, 0, 2)).reshape(D, HD)

    a1 = {k: [] for k in ("wqkv", "bqkv", "wo", "bo", "g", "b")}
    a2 = {k: [] for k in ("wq", "bq", "wkv", "bkv", "wo", "bo", "g", "b")}
    ff = {k: [] for k in ("w1", "b1", "w2", "b2", "g", "b")}

    for layer in params["layers"]:
        p = layer["attn1"]
        a1["wqkv"].append(jnp.concatenate(
            [heads_to_cols(p["wq"]) * scale, heads_to_cols(p["wk"]),
             heads_to_cols(p["wv"])], axis=1))
        a1["bqkv"].append(jnp.concatenate(
            [p["bq"].reshape(HD) * scale, p["bk"].reshape(HD),
             p["bv"].reshape(HD)]).reshape(1, 3 * HD))
        a1["wo"].append(p["wo_t"])
        a1["bo"].append(p["bo"].reshape(1, D))
        a1["g"].append(p["ln_g"].reshape(1, D))
        a1["b"].append(p["ln_b"].reshape(1, D))

        p = layer["attn2"]
        a2["wq"].append(heads_to_cols(p["wq"]) * scale)
        a2["bq"].append((p["bq"].reshape(HD) * scale).reshape(1, HD))
        a2["wkv"].append(jnp.concatenate(
            [heads_to_cols(p["wk"]), heads_to_cols(p["wv"])], axis=1))
        a2["bkv"].append(jnp.concatenate(
            [p["bk"].reshape(HD), p["bv"].reshape(HD)]).reshape(1, 2 * HD))
        a2["wo"].append(p["wo_t"])
        a2["bo"].append(p["bo"].reshape(1, D))
        a2["g"].append(p["ln_g"].reshape(1, D))
        a2["b"].append(p["ln_b"].reshape(1, D))

        p = layer["ffn"]
        ff["w1"].append(p["w1_t"])
        ff["b1"].append(p["b1"].reshape(1, -1))
        ff["w2"].append(p["w2_t"])
        ff["b2"].append(p["b2"].reshape(1, D))
        ff["g"].append(p["ln_g"].reshape(1, D))
        ff["b"].append(p["ln_b"].reshape(1, D))

    packed = {"pos": positional_encoding(seq_len, D)}          # (1, L, D)
    for prefix, d in (("a1", a1), ("a2", a2), ("ff", ff)):
        for k, v in d.items():
            packed[f"{prefix}_{k}"] = jnp.stack(v, axis=0)
    packed["wf"] = params["wf_t"]
    packed["bf"] = params["bf"].reshape(1, D)
    return packed


# ---------------------------------------------------------------------------
# Forward wrapper: ONE pallas_call for the whole decoder forward.
# ---------------------------------------------------------------------------
def transformer_decoder_forward(src, memory, packed, *, num_layers: int,
                                num_heads: int, d_head: int, causal: bool):
    B, L, D = src.shape
    kernel = functools.partial(
        decoder_kernel, num_layers=num_layers, num_heads=num_heads,
        d_head=d_head, causal=causal, eps=LN_EPS)

    args = (
        src, memory, packed["pos"],
        packed["a1_wqkv"], packed["a1_bqkv"], packed["a1_wo"], packed["a1_bo"],
        packed["a1_g"], packed["a1_b"],
        packed["a2_wq"], packed["a2_bq"], packed["a2_wkv"], packed["a2_bkv"],
        packed["a2_wo"], packed["a2_bo"], packed["a2_g"], packed["a2_b"],
        packed["ff_w1"], packed["ff_b1"], packed["ff_w2"], packed["ff_b2"],
        packed["ff_g"], packed["ff_b"],
        packed["wf"], packed["bf"],
    )
    vmem_spec = pl.BlockSpec(memory_space=pltpu.MemorySpace.VMEM)
    return pl.pallas_call(
        kernel,
        out_shape=jax.ShapeDtypeStruct((B, L, D), jnp.float32),
        in_specs=[vmem_spec] * len(args),   # whole arrays resident in VMEM
        out_specs=vmem_spec,
    )(*args)


# ---------------------------------------------------------------------------
# Pure-JAX reference (mirrors the PyTorch forward, eval mode)
# ---------------------------------------------------------------------------
def _ref_layernorm(y, g, b, eps=LN_EPS):
    mu = y.mean(-1, keepdims=True)
    var = ((y - mu) ** 2).mean(-1, keepdims=True)
    return (y - mu) / jnp.sqrt(var + eps) * g + b


def _ref_mha(q_in, k_in, v_in, p, causal):
    H = p["wq"].shape[0]
    outs = []
    for h in range(H):
        q = q_in @ p["wq"][h] + p["bq"][h]
        k = k_in @ p["wk"][h] + p["bk"][h]
        v = v_in @ p["wv"][h] + p["bv"][h]
        s = jnp.einsum("bqd,bkd->bqk", q, k) / math.sqrt(q.shape[-1])
        if causal:
            lq, lk = s.shape[-2:]
            mask = jnp.where(jnp.triu(jnp.ones((lq, lk)), 1) > 0, -jnp.inf, 0.0)
            s = s + mask
        outs.append(jnp.einsum("bqk,bkd->bqd", jax.nn.softmax(s, axis=-1), v))
    return jnp.concatenate(outs, axis=-1) @ p["wo_t"] + p["bo"]


def reference_decoder(src, memory, params, *, causal):
    D = src.shape[-1]
    x = src + positional_encoding(src.shape[1], D)
    for layer in params["layers"]:
        a1 = layer["attn1"]
        x = _ref_layernorm(_ref_mha(x, x, x, a1, causal) + x, a1["ln_g"], a1["ln_b"])
        a2 = layer["attn2"]
        x = _ref_layernorm(_ref_mha(x, memory, memory, a2, causal) + x,
                           a2["ln_g"], a2["ln_b"])
        ff = layer["ffn"]
        h = jnp.maximum(x @ ff["w1_t"] + ff["b1"], 0.0)
        x = _ref_layernorm(h @ ff["w2_t"] + ff["b2"] + x, ff["ln_g"], ff["ln_b"])
    return x @ params["wf_t"] + params["bf"]


# ---------------------------------------------------------------------------
# Parameter construction
# ---------------------------------------------------------------------------
def make_attn_params(key, H, D, dh, scale=0.1):
    ks = jax.random.split(key, 10)
    return {
        "wq": scale * jax.random.normal(ks[0], (H, D, dh), jnp.float32),
        "bq": scale * jax.random.normal(ks[1], (H, dh), jnp.float32),
        "wk": scale * jax.random.normal(ks[2], (H, D, dh), jnp.float32),
        "bk": scale * jax.random.normal(ks[3], (H, dh), jnp.float32),
        "wv": scale * jax.random.normal(ks[4], (H, D, dh), jnp.float32),
        "bv": scale * jax.random.normal(ks[5], (H, dh), jnp.float32),
        "wo_t": scale * jax.random.normal(ks[6], (D, D), jnp.float32),
        "bo": scale * jax.random.normal(ks[7], (D,), jnp.float32),
        "ln_g": 1.0 + 0.1 * jax.random.normal(ks[8], (D,), jnp.float32),
        "ln_b": 0.1 * jax.random.normal(ks[9], (D,), jnp.float32),
    }


def make_ffn_params(key, D, Hd, scale=0.1):
    ks = jax.random.split(key, 6)
    return {
        "w1_t": scale * jax.random.normal(ks[0], (D, Hd), jnp.float32),
        "b1": scale * jax.random.normal(ks[1], (Hd,), jnp.float32),
        "w2_t": scale * jax.random.normal(ks[2], (Hd, D), jnp.float32),
        "b2": scale * jax.random.normal(ks[3], (D,), jnp.float32),
        "ln_g": 1.0 + 0.1 * jax.random.normal(ks[4], (D,), jnp.float32),
        "ln_b": 0.1 * jax.random.normal(ks[5], (D,), jnp.float32),
    }


# ---------------------------------------------------------------------------
if __name__ == "__main__":
    num_layers, d_model, num_heads, hidden = 2, 32, 4, 64
    d_head = d_model // num_heads          # dim_q = dim_k = d_model // num_heads
    B, L = 2, 8
    causal = False                         # TransformerDecoder(mask=False) default

    root = jax.random.PRNGKey(0)
    k_layers, k_final, k_src, k_mem = jax.random.split(root, 4)

    layers = []
    for lk in jax.random.split(k_layers, num_layers):
        k1, k2, k3 = jax.random.split(lk, 3)
        layers.append({
            "attn1": make_attn_params(k1, num_heads, d_model, d_head),
            "attn2": make_attn_params(k2, num_heads, d_model, d_head),
            "ffn": make_ffn_params(k3, d_model, hidden),
        })
    kf1, kf2 = jax.random.split(k_final, 2)
    params = {
        "layers": layers,
        "wf_t": 0.1 * jax.random.normal(kf1, (d_model, d_model), jnp.float32),
        "bf": 0.1 * jax.random.normal(kf2, (d_model,), jnp.float32),
    }

    src = jax.random.normal(k_src, (B, L, d_model), jnp.float32)
    memory = jax.random.normal(k_mem, (B, L, d_model), jnp.float32)

    # One-time weight packing, outside the jitted forward.
    packed = pack_decoder_params(params, num_heads=num_heads, d_head=d_head,
                                 seq_len=L)

    fwd = jax.jit(functools.partial(
        transformer_decoder_forward, num_layers=num_layers,
        num_heads=num_heads, d_head=d_head, causal=causal))
    out = jax.block_until_ready(fwd(src, memory, packed))

    ref = reference_decoder(src, memory, params, causal=causal)
    assert out.shape == (B, L, d_model)
    assert jnp.allclose(out, ref, atol=2e-3, rtol=2e-3), "mismatch vs reference"

    print("KERNEL_OK")
</pallas_src>

<mosaic_0001>
module attributes {stable_mosaic.version = 11 : i64} {
  func.func @decoder_kernel(%arg0: memref<2x8x32xf32, #tpu.memory_space<vmem>>, %arg1: memref<2x8x32xf32, #tpu.memory_space<vmem>>, %arg2: memref<1x8x32xf32, #tpu.memory_space<vmem>>, %arg3: memref<2x32x96xf32, #tpu.memory_space<vmem>>, %arg4: memref<2x1x96xf32, #tpu.memory_space<vmem>>, %arg5: memref<2x32x32xf32, #tpu.memory_space<vmem>>, %arg6: memref<2x1x32xf32, #tpu.memory_space<vmem>>, %arg7: memref<2x1x32xf32, #tpu.memory_space<vmem>>, %arg8: memref<2x1x32xf32, #tpu.memory_space<vmem>>, %arg9: memref<2x32x32xf32, #tpu.memory_space<vmem>>, %arg10: memref<2x1x32xf32, #tpu.memory_space<vmem>>, %arg11: memref<2x32x64xf32, #tpu.memory_space<vmem>>, %arg12: memref<2x1x64xf32, #tpu.memory_space<vmem>>, %arg13: memref<2x32x32xf32, #tpu.memory_space<vmem>>, %arg14: memref<2x1x32xf32, #tpu.memory_space<vmem>>, %arg15: memref<2x1x32xf32, #tpu.memory_space<vmem>>, %arg16: memref<2x1x32xf32, #tpu.memory_space<vmem>>, %arg17: memref<2x32x64xf32, #tpu.memory_space<vmem>>, %arg18: memref<2x1x64xf32, #tpu.memory_space<vmem>>, %arg19: memref<2x64x32xf32, #tpu.memory_space<vmem>>, %arg20: memref<2x1x32xf32, #tpu.memory_space<vmem>>, %arg21: memref<2x1x32xf32, #tpu.memory_space<vmem>>, %arg22: memref<2x1x32xf32, #tpu.memory_space<vmem>>, %arg23: memref<32x32xf32, #tpu.memory_space<vmem>>, %arg24: memref<1x32xf32, #tpu.memory_space<vmem>>, %arg25: memref<2x8x32xf32, #tpu.memory_space<vmem>>) attributes {dimension_semantics = [], scalar_prefetch = 0 : i64, scratch_operands = 0 : i64, tpu.core_type = #tpu.core_type<tc>} {
    %c0 = arith.constant 0 : index
    %c0_0 = arith.constant 0 : index
    %c0_1 = arith.constant 0 : index
    %0 = vector.load %arg0[%c0, %c0_0, %c0_1] : memref<2x8x32xf32, #tpu.memory_space<vmem>>, vector<2x8x32xf32>
    %c0_2 = arith.constant 0 : index
    %c0_3 = arith.constant 0 : index
    %c0_4 = arith.constant 0 : index
    %1 = vector.load %arg2[%c0_2, %c0_3, %c0_4] : memref<1x8x32xf32, #tpu.memory_space<vmem>>, vector<1x8x32xf32>
    %2 = vector.broadcast %1 : vector<1x8x32xf32> to vector<2x8x32xf32>
    %3 = arith.addf %0, %2 : vector<2x8x32xf32>
    %4 = vector.shape_cast %3 : vector<2x8x32xf32> to vector<16x32xf32>
    %c0_5 = arith.constant 0 : index
    %c0_6 = arith.constant 0 : index
    %c0_7 = arith.constant 0 : index
    %5 = vector.load %arg1[%c0_5, %c0_6, %c0_7] : memref<2x8x32xf32, #tpu.memory_space<vmem>>, vector<2x8x32xf32>
    %6 = vector.shape_cast %5 : vector<2x8x32xf32> to vector<16x32xf32>
    %c0_8 = arith.constant 0 : index
    %c0_9 = arith.constant 0 : index
    %c0_10 = arith.constant 0 : index
    %7 = vector.load %arg3[%c0_8, %c0_9, %c0_10] : memref<2x32x96xf32, #tpu.memory_space<vmem>>, vector<1x32x96xf32>
    %8 = vector.shape_cast %7 : vector<1x32x96xf32> to vector<32x96xf32>
    %cst = arith.constant dense<0.000000e+00> : vector<16x96xf32>
    %9 = tpu.matmul %4, %8, %cst {dimension_numbers = #tpu.dot_dimension_numbers<[1], [0], [0], [1], [0, 0, 1, 1], [], []>} : vector<16x32xf32>, vector<32x96xf32>, vector<16x96xf32> -> vector<16x96xf32>
    %c0_11 = arith.constant 0 : index
    %c0_12 = arith.constant 0 : index
    %c0_13 = arith.constant 0 : index
    %10 = vector.load %arg4[%c0_11, %c0_12, %c0_13] : memref<2x1x96xf32, #tpu.memory_space<vmem>>, vector<1x1x96xf32>
    %11 = vector.shape_cast %10 : vector<1x1x96xf32> to vector<1x96xf32>
    %12 = vector.broadcast %11 : vector<1x96xf32> to vector<16x96xf32>
    %13 = arith.addf %9, %12 : vector<16x96xf32>
    %14 = vector.extract_strided_slice %13 {offsets = [0, 0], sizes = [16, 32], strides = [1, 1]} : vector<16x96xf32> to vector<16x32xf32>
    %15 = vector.extract_strided_slice %13 {offsets = [0, 32], sizes = [16, 32], strides = [1, 1]} : vector<16x96xf32> to vector<16x32xf32>
    %16 = vector.extract_strided_slice %13 {offsets = [0, 64], sizes = [16, 32], strides = [1, 1]} : vector<16x96xf32> to vector<16x32xf32>
    %c0_14 = arith.constant 0 : index
    %c0_15 = arith.constant 0 : index
    %c0_16 = arith.constant 0 : index
    %17 = vector.load %arg5[%c0_14, %c0_15, %c0_16] : memref<2x32x32xf32, #tpu.memory_space<vmem>>, vector<1x32x32xf32>
    %18 = vector.shape_cast %17 : vector<1x32x32xf32> to vector<32x32xf32>
    %c0_17 = arith.constant 0 : index
    %c0_18 = arith.constant 0 : index
    %c0_19 = arith.constant 0 : index
    %19 = vector.load %arg6[%c0_17, %c0_18, %c0_19] : memref<2x1x32xf32, #tpu.memory_space<vmem>>, vector<1x1x32xf32>
    %20 = vector.shape_cast %19 : vector<1x1x32xf32> to vector<1x32xf32>
    %21 = vector.extract_strided_slice %14 {offsets = [0, 0], sizes = [16, 8], strides = [1, 1]} : vector<16x32xf32> to vector<16x8xf32>
    %22 = vector.shape_cast %21 : vector<16x8xf32> to vector<2x8x8xf32>
    %23 = vector.extract_strided_slice %15 {offsets = [0, 0], sizes = [16, 8], strides = [1, 1]} : vector<16x32xf32> to vector<16x8xf32>
    %24 = vector.shape_cast %23 : vector<16x8xf32> to vector<2x8x8xf32>
    %25 = vector.extract_strided_slice %16 {offsets = [0, 0], sizes = [16, 8], strides = [1, 1]} : vector<16x32xf32> to vector<16x8xf32>
    %26 = vector.shape_cast %25 : vector<16x8xf32> to vector<2x8x8xf32>
    "tpu.trace_start"() <{level = 10 : i32, message = "bqd,bkd->bqk"}> : () -> ()
    %cst_20 = arith.constant dense<0.000000e+00> : vector<2x8x8xf32>
    %27 = tpu.matmul %22, %24, %cst_20 {dimension_numbers = #tpu.dot_dimension_numbers<[2], [2], [1], [1], [0, 0, 0, 1, 1, 1], [0], [0]>} : vector<2x8x8xf32>, vector<2x8x8xf32>, vector<2x8x8xf32> -> vector<2x8x8xf32>
    "tpu.trace_stop"() : () -> ()
    %cst_21 = arith.constant dense<0xFF800000> : vector<2x8xf32>
    %28 = vector.multi_reduction <maximumf>, %27, %cst_21 [2] : vector<2x8x8xf32> to vector<2x8xf32>
    %29 = vector.shape_cast %28 : vector<2x8xf32> to vector<2x8x1xf32>
    %30 = vector.broadcast %29 : vector<2x8x1xf32> to vector<2x8x8xf32>
    %31 = arith.subf %27, %30 : vector<2x8x8xf32>
    %32 = math.exp %31 : vector<2x8x8xf32>
    %cst_22 = arith.constant dense<0.000000e+00> : vector<2x8xf32>
    %33 = vector.multi_reduction <add>, %32, %cst_22 [2] : vector<2x8x8xf32> to vector<2x8xf32>
    %34 = vector.shape_cast %33 : vector<2x8xf32> to vector<2x8x1xf32>
    %35 = tpu.reciprocal %34 {approx = true} : vector<2x8x1xf32> -> vector<2x8x1xf32>
    %36 = vector.broadcast %35 : vector<2x8x1xf32> to vector<2x8x8xf32>
    %37 = arith.mulf %32, %36 : vector<2x8x8xf32>
    "tpu.trace_start"() <{level = 10 : i32, message = "bqk,bkd->bqd"}> : () -> ()
    %cst_23 = arith.constant dense<0.000000e+00> : vector<2x8x8xf32>
    %38 = tpu.matmul %37, %26, %cst_23 {dimension_numbers = #tpu.dot_dimension_numbers<[2], [1], [1], [2], [0, 0, 0, 1, 1, 2], [0], [0]>} : vector<2x8x8xf32>, vector<2x8x8xf32>, vector<2x8x8xf32> -> vector<2x8x8xf32>
    "tpu.trace_stop"() : () -> ()
    %39 = vector.shape_cast %38 : vector<2x8x8xf32> to vector<16x8xf32>
    %40 = vector.extract_strided_slice %18 {offsets = [0, 0], sizes = [8, 32], strides = [1, 1]} : vector<32x32xf32> to vector<8x32xf32>
    %cst_24 = arith.constant dense<0.000000e+00> : vector<16x32xf32>
    %41 = tpu.matmul %39, %40, %cst_24 {dimension_numbers = #tpu.dot_dimension_numbers<[1], [0], [0], [1], [0, 0, 1, 1], [], []>} : vector<16x8xf32>, vector<8x32xf32>, vector<16x32xf32> -> vector<16x32xf32>
    %42 = vector.extract_strided_slice %14 {offsets = [0, 8], sizes = [16, 8], strides = [1, 1]} : vector<16x32xf32> to vector<16x8xf32>
    %43 = vector.shape_cast %42 : vector<16x8xf32> to vector<2x8x8xf32>
    %44 = vector.extract_strided_slice %15 {offsets = [0, 8], sizes = [16, 8], strides = [1, 1]} : vector<16x32xf32> to vector<16x8xf32>
    %45 = vector.shape_cast %44 : vector<16x8xf32> to vector<2x8x8xf32>
    %46 = vector.extract_strided_slice %16 {offsets = [0, 8], sizes = [16, 8], strides = [1, 1]} : vector<16x32xf32> to vector<16x8xf32>
    %47 = vector.shape_cast %46 : vector<16x8xf32> to vector<2x8x8xf32>
    "tpu.trace_start"() <{level = 10 : i32, message = "bqd,bkd->bqk"}> : () -> ()
    %cst_25 = arith.constant dense<0.000000e+00> : vector<2x8x8xf32>
    %48 = tpu.matmul %43, %45, %cst_25 {dimension_numbers = #tpu.dot_dimension_numbers<[2], [2], [1], [1], [0, 0, 0, 1, 1, 1], [0], [0]>} : vector<2x8x8xf32>, vector<2x8x8xf32>, vector<2x8x8xf32> -> vector<2x8x8xf32>
    "tpu.trace_stop"() : () -> ()
    %cst_26 = arith.constant dense<0xFF800000> : vector<2x8xf32>
    %49 = vector.multi_reduction <maximumf>, %48, %cst_26 [2] : vector<2x8x8xf32> to vector<2x8xf32>
    %50 = vector.shape_cast %49 : vector<2x8xf32> to vector<2x8x1xf32>
    %51 = vector.broadcast %50 : vector<2x8x1xf32> to vector<2x8x8xf32>
    %52 = arith.subf %48, %51 : vector<2x8x8xf32>
    %53 = math.exp %52 : vector<2x8x8xf32>
    %cst_27 = arith.constant dense<0.000000e+00> : vector<2x8xf32>
    %54 = vector.multi_reduction <add>, %53, %cst_27 [2] : vector<2x8x8xf32> to vector<2x8xf32>
    %55 = vector.shape_cast %54 : vector<2x8xf32> to vector<2x8x1xf32>
    %56 = tpu.reciprocal %55 {approx = true} : vector<2x8x1xf32> -> vector<2x8x1xf32>
    %57 = vector.broadcast %56 : vector<2x8x1xf32> to vector<2x8x8xf32>
    %58 = arith.mulf %53, %57 : vector<2x8x8xf32>
    "tpu.trace_start"() <{level = 10 : i32, message = "bqk,bkd->bqd"}> : () -> ()
    %cst_28 = arith.constant dense<0.000000e+00> : vector<2x8x8xf32>
    %59 = tpu.matmul %58, %47, %cst_28 {dimension_numbers = #tpu.dot_dimension_numbers<[2], [1], [1], [2], [0, 0, 0, 1, 1, 2], [0], [0]>} : vector<2x8x8xf32>, vector<2x8x8xf32>, vector<2x8x8xf32> -> vector<2x8x8xf32>
    "tpu.trace_stop"() : () -> ()
    %60 = vector.shape_cast %59 : vector<2x8x8xf32> to vector<16x8xf32>
    %61 = vector.extract_strided_slice %18 {offsets = [8, 0], sizes = [8, 32], strides = [1, 1]} : vector<32x32xf32> to vector<8x32xf32>
    %cst_29 = arith.constant dense<0.000000e+00> : vector<16x32xf32>
    %62 = tpu.matmul %60, %61, %cst_29 {dimension_numbers = #tpu.dot_dimension_numbers<[1], [0], [0], [1], [0, 0, 1, 1], [], []>} : vector<16x8xf32>, vector<8x32xf32>, vector<16x32xf32> -> vector<16x32xf32>
    %63 = arith.addf %41, %62 : vector<16x32xf32>
    %64 = vector.extract_strided_slice %14 {offsets = [0, 16], sizes = [16, 8], strides = [1, 1]} : vector<16x32xf32> to vector<16x8xf32>
    %65 = vector.shape_cast %64 : vector<16x8xf32> to vector<2x8x8xf32>
    %66 = vector.extract_strided_slice %15 {offsets = [0, 16], sizes = [16, 8], strides = [1, 1]} : vector<16x32xf32> to vector<16x8xf32>
    %67 = vector.shape_cast %66 : vector<16x8xf32> to vector<2x8x8xf32>
    %68 = vector.extract_strided_slice %16 {offsets = [0, 16], sizes = [16, 8], strides = [1, 1]} : vector<16x32xf32> to vector<16x8xf32>
    %69 = vector.shape_cast %68 : vector<16x8xf32> to vector<2x8x8xf32>
    "tpu.trace_start"() <{level = 10 : i32, message = "bqd,bkd->bqk"}> : () -> ()
    %cst_30 = arith.constant dense<0.000000e+00> : vector<2x8x8xf32>
    %70 = tpu.matmul %65, %67, %cst_30 {dimension_numbers = #tpu.dot_dimension_numbers<[2], [2], [1], [1], [0, 0, 0, 1, 1, 1], [0], [0]>} : vector<2x8x8xf32>, vector<2x8x8xf32>, vector<2x8x8xf32> -> vector<2x8x8xf32>
    "tpu.trace_stop"() : () -> ()
    %cst_31 = arith.constant dense<0xFF800000> : vector<2x8xf32>
    %71 = vector.multi_reduction <maximumf>, %70, %cst_31 [2] : vector<2x8x8xf32> to vector<2x8xf32>
    %72 = vector.shape_cast %71 : vector<2x8xf32> to vector<2x8x1xf32>
    %73 = vector.broadcast %72 : vector<2x8x1xf32> to vector<2x8x8xf32>
    %74 = arith.subf %70, %73 : vector<2x8x8xf32>
    %75 = math.exp %74 : vector<2x8x8xf32>
    %cst_32 = arith.constant dense<0.000000e+00> : vector<2x8xf32>
    %76 = vector.multi_reduction <add>, %75, %cst_32 [2] : vector<2x8x8xf32> to vector<2x8xf32>
    %77 = vector.shape_cast %76 : vector<2x8xf32> to vector<2x8x1xf32>
    %78 = tpu.reciprocal %77 {approx = true} : vector<2x8x1xf32> -> vector<2x8x1xf32>
    %79 = vector.broadcast %78 : vector<2x8x1xf32> to vector<2x8x8xf32>
    %80 = arith.mulf %75, %79 : vector<2x8x8xf32>
    "tpu.trace_start"() <{level = 10 : i32, message = "bqk,bkd->bqd"}> : () -> ()
    %cst_33 = arith.constant dense<0.000000e+00> : vector<2x8x8xf32>
    %81 = tpu.matmul %80, %69, %cst_33 {dimension_numbers = #tpu.dot_dimension_numbers<[2], [1], [1], [2], [0, 0, 0, 1, 1, 2], [0], [0]>} : vector<2x8x8xf32>, vector<2x8x8xf32>, vector<2x8x8xf32> -> vector<2x8x8xf32>
    "tpu.trace_stop"() : () -> ()
    %82 = vector.shape_cast %81 : vector<2x8x8xf32> to vector<16x8xf32>
    %83 = vector.extract_strided_slice %18 {offsets = [16, 0], sizes = [8, 32], strides = [1, 1]} : vector<32x32xf32> to vector<8x32xf32>
    %cst_34 = arith.constant dense<0.000000e+00> : vector<16x32xf32>
    %84 = tpu.matmul %82, %83, %cst_34 {dimension_numbers = #tpu.dot_dimension_numbers<[1], [0], [0], [1], [0, 0, 1, 1], [], []>} : vector<16x8xf32>, vector<8x32xf32>, vector<16x32xf32> -> vector<16x32xf32>
    %85 = arith.addf %63, %84 : vector<16x32xf32>
    %86 = vector.extract_strided_slice %14 {offsets = [0, 24], sizes = [16, 8], strides = [1, 1]} : vector<16x32xf32> to vector<16x8xf32>
    %87 = vector.shape_cast %86 : vector<16x8xf32> to vector<2x8x8xf32>
    %88 = vector.extract_strided_slice %15 {offsets = [0, 24], sizes = [16, 8], strides = [1, 1]} : vector<16x32xf32> to vector<16x8xf32>
    %89 = vector.shape_cast %88 : vector<16x8xf32> to vector<2x8x8xf32>
    %90 = vector.extract_strided_slice %16 {offsets = [0, 24], sizes = [16, 8], strides = [1, 1]} : vector<16x32xf32> to vector<16x8xf32>
    %91 = vector.shape_cast %90 : vector<16x8xf32> to vector<2x8x8xf32>
    "tpu.trace_start"() <{level = 10 : i32, message = "bqd,bkd->bqk"}> : () -> ()
    %cst_35 = arith.constant dense<0.000000e+00> : vector<2x8x8xf32>
    %92 = tpu.matmul %87, %89, %cst_35 {dimension_numbers = #tpu.dot_dimension_numbers<[2], [2], [1], [1], [0, 0, 0, 1, 1, 1], [0], [0]>} : vector<2x8x8xf32>, vector<2x8x8xf32>, vector<2x8x8xf32> -> vector<2x8x8xf32>
    "tpu.trace_stop"() : () -> ()
    %cst_36 = arith.constant dense<0xFF800000> : vector<2x8xf32>
    %93 = vector.multi_reduction <maximumf>, %92, %cst_36 [2] : vector<2x8x8xf32> to vector<2x8xf32>
    %94 = vector.shape_cast %93 : vector<2x8xf32> to vector<2x8x1xf32>
    %95 = vector.broadcast %94 : vector<2x8x1xf32> to vector<2x8x8xf32>
    %96 = arith.subf %92, %95 : vector<2x8x8xf32>
    %97 = math.exp %96 : vector<2x8x8xf32>
    %cst_37 = arith.constant dense<0.000000e+00> : vector<2x8xf32>
    %98 = vector.multi_reduction <add>, %97, %cst_37 [2] : vector<2x8x8xf32> to vector<2x8xf32>
    %99 = vector.shape_cast %98 : vector<2x8xf32> to vector<2x8x1xf32>
    %100 = tpu.reciprocal %99 {approx = true} : vector<2x8x1xf32> -> vector<2x8x1xf32>
    %101 = vector.broadcast %100 : vector<2x8x1xf32> to vector<2x8x8xf32>
    %102 = arith.mulf %97, %101 : vector<2x8x8xf32>
    "tpu.trace_start"() <{level = 10 : i32, message = "bqk,bkd->bqd"}> : () -> ()
    %cst_38 = arith.constant dense<0.000000e+00> : vector<2x8x8xf32>
    %103 = tpu.matmul %102, %91, %cst_38 {dimension_numbers = #tpu.dot_dimension_numbers<[2], [1], [1], [2], [0, 0, 0, 1, 1, 2], [0], [0]>} : vector<2x8x8xf32>, vector<2x8x8xf32>, vector<2x8x8xf32> -> vector<2x8x8xf32>
    "tpu.trace_stop"() : () -> ()
    %104 = vector.shape_cast %103 : vector<2x8x8xf32> to vector<16x8xf32>
    %105 = vector.extract_strided_slice %18 {offsets = [24, 0], sizes = [8, 32], strides = [1, 1]} : vector<32x32xf32> to vector<8x32xf32>
    %cst_39 = arith.constant dense<0.000000e+00> : vector<16x32xf32>
    %106 = tpu.matmul %104, %105, %cst_39 {dimension_numbers = #tpu.dot_dimension_numbers<[1], [0], [0], [1], [0, 0, 1, 1], [], []>} : vector<16x8xf32>, vector<8x32xf32>, vector<16x32xf32> -> vector<16x32xf32>
    %107 = arith.addf %85, %106 : vector<16x32xf32>
    %108 = vector.broadcast %20 : vector<1x32xf32> to vector<16x32xf32>
    %109 = arith.addf %107, %108 : vector<16x32xf32>
    %110 = arith.addf %109, %4 : vector<16x32xf32>
    %c0_40 = arith.constant 0 : index
    %c0_41 = arith.constant 0 : index
    %c0_42 = arith.constant 0 : index
    %111 = vector.load %arg7[%c0_40, %c0_41, %c0_42] : memref<2x1x32xf32, #tpu.memory_space<vmem>>, vector<1x1x32xf32>
    %112 = vector.shape_cast %111 : vector<1x1x32xf32> to vector<1x32xf32>
    %c0_43 = arith.constant 0 : index
    %c0_44 = arith.constant 0 : index
    %c0_45 = arith.constant 0 : index
    %113 = vector.load %arg8[%c0_43, %c0_44, %c0_45] : memref<2x1x32xf32, #tpu.memory_space<vmem>>, vector<1x1x32xf32>
    %114 = vector.shape_cast %113 : vector<1x1x32xf32> to vector<1x32xf32>
    %cst_46 = arith.constant dense<0.000000e+00> : vector<16xf32>
    %115 = vector.multi_reduction <add>, %110, %cst_46 [1] : vector<16x32xf32> to vector<16xf32>
    %116 = vector.shape_cast %115 : vector<16xf32> to vector<16x1xf32>
    %cst_47 = arith.constant 3.200000e+01 : f32
    %117 = vector.broadcast %cst_47 : f32 to vector<16x1xf32>
    %118 = arith.divf %116, %117 : vector<16x1xf32>
    %119 = vector.broadcast %118 : vector<16x1xf32> to vector<16x32xf32>
    %120 = arith.subf %110, %119 : vector<16x32xf32>
    %121 = arith.mulf %120, %120 : vector<16x32xf32>
    %cst_48 = arith.constant dense<0.000000e+00> : vector<16xf32>
    %122 = vector.multi_reduction <add>, %121, %cst_48 [1] : vector<16x32xf32> to vector<16xf32>
    %123 = vector.shape_cast %122 : vector<16xf32> to vector<16x1xf32>
    %cst_49 = arith.constant 3.200000e+01 : f32
    %124 = vector.broadcast %cst_49 : f32 to vector<16x1xf32>
    %125 = arith.divf %123, %124 : vector<16x1xf32>
    %cst_50 = arith.constant 9.99999974E-6 : f32
    %126 = vector.broadcast %cst_50 : f32 to vector<16x1xf32>
    %127 = arith.addf %125, %126 : vector<16x1xf32>
    %128 = math.rsqrt %127 : vector<16x1xf32>
    %129 = vector.broadcast %128 : vector<16x1xf32> to vector<16x32xf32>
    %130 = arith.mulf %120, %129 : vector<16x32xf32>
    %131 = vector.broadcast %112 : vector<1x32xf32> to vector<16x32xf32>
    %132 = arith.mulf %130, %131 : vector<16x32xf32>
    %133 = vector.broadcast %114 : vector<1x32xf32> to vector<16x32xf32>
    %134 = arith.addf %132, %133 : vector<16x32xf32>
    %c0_51 = arith.constant 0 : index
    %c0_52 = arith.constant 0 : index
    %c0_53 = arith.constant 0 : index
    %135 = vector.load %arg9[%c0_51, %c0_52, %c0_53] : memref<2x32x32xf32, #tpu.memory_space<vmem>>, vector<1x32x32xf32>
    %136 = vector.shape_cast %135 : vector<1x32x32xf32> to vector<32x32xf32>
    %cst_54 = arith.constant dense<0.000000e+00> : vector<16x32xf32>
    %137 = tpu.matmul %134, %136, %cst_54 {dimension_numbers = #tpu.dot_dimension_numbers<[1], [0], [0], [1], [0, 0, 1, 1], [], []>} : vector<16x32xf32>, vector<32x32xf32>, vector<16x32xf32> -> vector<16x32xf32>
    %c0_55 = arith.constant 0 : index
    %c0_56 = arith.constant 0 : index
    %c0_57 = arith.constant 0 : index
    %138 = vector.load %arg10[%c0_55, %c0_56, %c0_57] : memref<2x1x32xf32, #tpu.memory_space<vmem>>, vector<1x1x32xf32>
    %139 = vector.shape_cast %138 : vector<1x1x32xf32> to vector<1x32xf32>
    %140 = vector.broadcast %139 : vector<1x32xf32> to vector<16x32xf32>
    %141 = arith.addf %137, %140 : vector<16x32xf32>
    %c0_58 = arith.constant 0 : index
    %c0_59 = arith.constant 0 : index
    %c0_60 = arith.constant 0 : index
    %142 = vector.load %arg11[%c0_58, %c0_59, %c0_60] : memref<2x32x64xf32, #tpu.memory_space<vmem>>, vector<1x32x64xf32>
    %143 = vector.shape_cast %142 : vector<1x32x64xf32> to vector<32x64xf32>
    %cst_61 = arith.constant dense<0.000000e+00> : vector<16x64xf32>
    %144 = tpu.matmul %6, %143, %cst_61 {dimension_numbers = #tpu.dot_dimension_numbers<[1], [0], [0], [1], [0, 0, 1, 1], [], []>} : vector<16x32xf32>, vector<32x64xf32>, vector<16x64xf32> -> vector<16x64xf32>
    %c0_62 = arith.constant 0 : index
    %c0_63 = arith.constant 0 : index
    %c0_64 = arith.constant 0 : index
    %145 = vector.load %arg12[%c0_62, %c0_63, %c0_64] : memref<2x1x64xf32, #tpu.memory_space<vmem>>, vector<1x1x64xf32>
    %146 = vector.shape_cast %145 : vector<1x1x64xf32> to vector<1x64xf32>
    %147 = vector.broadcast %146 : vector<1x64xf32> to vector<16x64xf32>
    %148 = arith.addf %144, %147 : vector<16x64xf32>
    %149 = vector.extract_strided_slice %148 {offsets = [0, 0], sizes = [16, 32], strides = [1, 1]} : vector<16x64xf32> to vector<16x32xf32>
    %150 = vector.extract_strided_slice %148 {offsets = [0, 32], sizes = [16, 32], strides = [1, 1]} : vector<16x64xf32> to vector<16x32xf32>
    %c0_65 = arith.constant 0 : index
    %c0_66 = arith.constant 0 : index
    %c0_67 = arith.constant 0 : index
    %151 = vector.load %arg13[%c0_65, %c0_66, %c0_67] : memref<2x32x32xf32, #tpu.memory_space<vmem>>, vector<1x32x32xf32>
    %152 = vector.shape_cast %151 : vector<1x32x32xf32> to vector<32x32xf32>
    %c0_68 = arith.constant 0 : index
    %c0_69 = arith.constant 0 : index
    %c0_70 = arith.constant 0 : index
    %153 = vector.load %arg14[%c0_68, %c0_69, %c0_70] : memref<2x1x32xf32, #tpu.memory_space<vmem>>, vector<1x1x32xf32>
    %154 = vector.shape_cast %153 : vector<1x1x32xf32> to vector<1x32xf32>
    %155 = vector.extract_strided_slice %141 {offsets = [0, 0], sizes = [16, 8], strides = [1, 1]} : vector<16x32xf32> to vector<16x8xf32>
    %156 = vector.shape_cast %155 : vector<16x8xf32> to vector<2x8x8xf32>
    %157 = vector.extract_strided_slice %149 {offsets = [0, 0], sizes = [16, 8], strides = [1, 1]} : vector<16x32xf32> to vector<16x8xf32>
    %158 = vector.shape_cast %157 : vector<16x8xf32> to vector<2x8x8xf32>
    %159 = vector.extract_strided_slice %150 {offsets = [0, 0], sizes = [16, 8], strides = [1, 1]} : vector<16x32xf32> to vector<16x8xf32>
    %160 = vector.shape_cast %159 : vector<16x8xf32> to vector<2x8x8xf32>
    "tpu.trace_start"() <{level = 10 : i32, message = "bqd,bkd->bqk"}> : () -> ()
    %cst_71 = arith.constant dense<0.000000e+00> : vector<2x8x8xf32>
    %161 = tpu.matmul %156, %158, %cst_71 {dimension_numbers = #tpu.dot_dimension_numbers<[2], [2], [1], [1], [0, 0, 0, 1, 1, 1], [0], [0]>} : vector<2x8x8xf32>, vector<2x8x8xf32>, vector<2x8x8xf32> -> vector<2x8x8xf32>
    "tpu.trace_stop"() : () -> ()
    %cst_72 = arith.constant dense<0xFF800000> : vector<2x8xf32>
    %162 = vector.multi_reduction <maximumf>, %161, %cst_72 [2] : vector<2x8x8xf32> to vector<2x8xf32>
    %163 = vector.shape_cast %162 : vector<2x8xf32> to vector<2x8x1xf32>
    %164 = vector.broadcast %163 : vector<2x8x1xf32> to vector<2x8x8xf32>
    %165 = arith.subf %161, %164 : vector<2x8x8xf32>
    %166 = math.exp %165 : vector<2x8x8xf32>
    %cst_73 = arith.constant dense<0.000000e+00> : vector<2x8xf32>
    %167 = vector.multi_reduction <add>, %166, %cst_73 [2] : vector<2x8x8xf32> to vector<2x8xf32>
    %168 = vector.shape_cast %167 : vector<2x8xf32> to vector<2x8x1xf32>
    %169 = tpu.reciprocal %168 {approx = true} : vector<2x8x1xf32> -> vector<2x8x1xf32>
    %170 = vector.broadcast %169 : vector<2x8x1xf32> to vector<2x8x8xf32>
    %171 = arith.mulf %166, %170 : vector<2x8x8xf32>
    "tpu.trace_start"() <{level = 10 : i32, message = "bqk,bkd->bqd"}> : () -> ()
    %cst_74 = arith.constant dense<0.000000e+00> : vector<2x8x8xf32>
    %172 = tpu.matmul %171, %160, %cst_74 {dimension_numbers = #tpu.dot_dimension_numbers<[2], [1], [1], [2], [0, 0, 0, 1, 1, 2], [0], [0]>} : vector<2x8x8xf32>, vector<2x8x8xf32>, vector<2x8x8xf32> -> vector<2x8x8xf32>
    "tpu.trace_stop"() : () -> ()
    %173 = vector.shape_cast %172 : vector<2x8x8xf32> to vector<16x8xf32>
    %174 = vector.extract_strided_slice %152 {offsets = [0, 0], sizes = [8, 32], strides = [1, 1]} : vector<32x32xf32> to vector<8x32xf32>
    %cst_75 = arith.constant dense<0.000000e+00> : vector<16x32xf32>
    %175 = tpu.matmul %173, %174, %cst_75 {dimension_numbers = #tpu.dot_dimension_numbers<[1], [0], [0], [1], [0, 0, 1, 1], [], []>} : vector<16x8xf32>, vector<8x32xf32>, vector<16x32xf32> -> vector<16x32xf32>
    %176 = vector.extract_strided_slice %141 {offsets = [0, 8], sizes = [16, 8], strides = [1, 1]} : vector<16x32xf32> to vector<16x8xf32>
    %177 = vector.shape_cast %176 : vector<16x8xf32> to vector<2x8x8xf32>
    %178 = vector.extract_strided_slice %149 {offsets = [0, 8], sizes = [16, 8], strides = [1, 1]} : vector<16x32xf32> to vector<16x8xf32>
    %179 = vector.shape_cast %178 : vector<16x8xf32> to vector<2x8x8xf32>
    %180 = vector.extract_strided_slice %150 {offsets = [0, 8], sizes = [16, 8], strides = [1, 1]} : vector<16x32xf32> to vector<16x8xf32>
    %181 = vector.shape_cast %180 : vector<16x8xf32> to vector<2x8x8xf32>
    "tpu.trace_start"() <{level = 10 : i32, message = "bqd,bkd->bqk"}> : () -> ()
    %cst_76 = arith.constant dense<0.000000e+00> : vector<2x8x8xf32>
    %182 = tpu.matmul %177, %179, %cst_76 {dimension_numbers = #tpu.dot_dimension_numbers<[2], [2], [1], [1], [0, 0, 0, 1, 1, 1], [0], [0]>} : vector<2x8x8xf32>, vector<2x8x8xf32>, vector<2x8x8xf32> -> vector<2x8x8xf32>
    "tpu.trace_stop"() : () -> ()
    %cst_77 = arith.constant dense<0xFF800000> : vector<2x8xf32>
    %183 = vector.multi_reduction <maximumf>, %182, %cst_77 [2] : vector<2x8x8xf32> to vector<2x8xf32>
    %184 = vector.shape_cast %183 : vector<2x8xf32> to vector<2x8x1xf32>
    %185 = vector.broadcast %184 : vector<2x8x1xf32> to vector<2x8x8xf32>
    %186 = arith.subf %182, %185 : vector<2x8x8xf32>
    %187 = math.exp %186 : vector<2x8x8xf32>
    %cst_78 = arith.constant dense<0.000000e+00> : vector<2x8xf32>
    %188 = vector.multi_reduction <add>, %187, %cst_78 [2] : vector<2x8x8xf32> to vector<2x8xf32>
    %189 = vector.shape_cast %188 : vector<2x8xf32> to vector<2x8x1xf32>
    %190 = tpu.reciprocal %189 {approx = true} : vector<2x8x1xf32> -> vector<2x8x1xf32>
    %191 = vector.broadcast %190 : vector<2x8x1xf32> to vector<2x8x8xf32>
    %192 = arith.mulf %187, %191 : vector<2x8x8xf32>
    "tpu.trace_start"() <{level = 10 : i32, message = "bqk,bkd->bqd"}> : () -> ()
    %cst_79 = arith.constant dense<0.000000e+00> : vector<2x8x8xf32>
    %193 = tpu.matmul %192, %181, %cst_79 {dimension_numbers = #tpu.dot_dimension_numbers<[2], [1], [1], [2], [0, 0, 0, 1, 1, 2], [0], [0]>} : vector<2x8x8xf32>, vector<2x8x8xf32>, vector<2x8x8xf32> -> vector<2x8x8xf32>
    "tpu.trace_stop"() : () -> ()
    %194 = vector.shape_cast %193 : vector<2x8x8xf32> to vector<16x8xf32>
    %195 = vector.extract_strided_slice %152 {offsets = [8, 0], sizes = [8, 32], strides = [1, 1]} : vector<32x32xf32> to vector<8x32xf32>
    %cst_80 = arith.constant dense<0.000000e+00> : vector<16x32xf32>
    %196 = tpu.matmul %194, %195, %cst_80 {dimension_numbers = #tpu.dot_dimension_numbers<[1], [0], [0], [1], [0, 0, 1, 1], [], []>} : vector<16x8xf32>, vector<8x32xf32>, vector<16x32xf32> -> vector<16x32xf32>
    %197 = arith.addf %175, %196 : vector<16x32xf32>
    %198 = vector.extract_strided_slice %141 {offsets = [0, 16], sizes = [16, 8], strides = [1, 1]} : vector<16x32xf32> to vector<16x8xf32>
    %199 = vector.shape_cast %198 : vector<16x8xf32> to vector<2x8x8xf32>
    %200 = vector.extract_strided_slice %149 {offsets = [0, 16], sizes = [16, 8], strides = [1, 1]} : vector<16x32xf32> to vector<16x8xf32>
    %201 = vector.shape_cast %200 : vector<16x8xf32> to vector<2x8x8xf32>
    %202 = vector.extract_strided_slice %150 {offsets = [0, 16], sizes = [16, 8], strides = [1, 1]} : vector<16x32xf32> to vector<16x8xf32>
    %203 = vector.shape_cast %202 : vector<16x8xf32> to vector<2x8x8xf32>
    "tpu.trace_start"() <{level = 10 : i32, message = "bqd,bkd->bqk"}> : () -> ()
    %cst_81 = arith.constant dense<0.000000e+00> : vector<2x8x8xf32>
    %204 = tpu.matmul %199, %201, %cst_81 {dimension_numbers = #tpu.dot_dimension_numbers<[2], [2], [1], [1], [0, 0, 0, 1, 1, 1], [0], [0]>} : vector<2x8x8xf32>, vector<2x8x8xf32>, vector<2x8x8xf32> -> vector<2x8x8xf32>
    "tpu.trace_stop"() : () -> ()
    %cst_82 = arith.constant dense<0xFF800000> : vector<2x8xf32>
    %205 = vector.multi_reduction <maximumf>, %204, %cst_82 [2] : vector<2x8x8xf32> to vector<2x8xf32>
    %206 = vector.shape_cast %205 : vector<2x8xf32> to vector<2x8x1xf32>
    %207 = vector.broadcast %206 : vector<2x8x1xf32> to vector<2x8x8xf32>
    %208 = arith.subf %204, %207 : vector<2x8x8xf32>
    %209 = math.exp %208 : vector<2x8x8xf32>
    %cst_83 = arith.constant dense<0.000000e+00> : vector<2x8xf32>
    %210 = vector.multi_reduction <add>, %209, %cst_83 [2] : vector<2x8x8xf32> to vector<2x8xf32>
    %211 = vector.shape_cast %210 : vector<2x8xf32> to vector<2x8x1xf32>
    %212 = tpu.reciprocal %211 {approx = true} : vector<2x8x1xf32> -> vector<2x8x1xf32>
    %213 = vector.broadcast %212 : vector<2x8x1xf32> to vector<2x8x8xf32>
    %214 = arith.mulf %209, %213 : vector<2x8x8xf32>
    "tpu.trace_start"() <{level = 10 : i32, message = "bqk,bkd->bqd"}> : () -> ()
    %cst_84 = arith.constant dense<0.000000e+00> : vector<2x8x8xf32>
    %215 = tpu.matmul %214, %203, %cst_84 {dimension_numbers = #tpu.dot_dimension_numbers<[2], [1], [1], [2], [0, 0, 0, 1, 1, 2], [0], [0]>} : vector<2x8x8xf32>, vector<2x8x8xf32>, vector<2x8x8xf32> -> vector<2x8x8xf32>
    "tpu.trace_stop"() : () -> ()
    %216 = vector.shape_cast %215 : vector<2x8x8xf32> to vector<16x8xf32>
    %217 = vector.extract_strided_slice %152 {offsets = [16, 0], sizes = [8, 32], strides = [1, 1]} : vector<32x32xf32> to vector<8x32xf32>
    %cst_85 = arith.constant dense<0.000000e+00> : vector<16x32xf32>
    %218 = tpu.matmul %216, %217, %cst_85 {dimension_numbers = #tpu.dot_dimension_numbers<[1], [0], [0], [1], [0, 0, 1, 1], [], []>} : vector<16x8xf32>, vector<8x32xf32>, vector<16x32xf32> -> vector<16x32xf32>
    %219 = arith.addf %197, %218 : vector<16x32xf32>
    %220 = vector.extract_strided_slice %141 {offsets = [0, 24], sizes = [16, 8], strides = [1, 1]} : vector<16x32xf32> to vector<16x8xf32>
    %221 = vector.shape_cast %220 : vector<16x8xf32> to vector<2x8x8xf32>
    %222 = vector.extract_strided_slice %149 {offsets = [0, 24], sizes = [16, 8], strides = [1, 1]} : vector<16x32xf32> to vector<16x8xf32>
    %223 = vector.shape_cast %222 : vector<16x8xf32> to vector<2x8x8xf32>
    %224 = vector.extract_strided_slice %150 {offsets = [0, 24], sizes = [16, 8], strides = [1, 1]} : vector<16x32xf32> to vector<16x8xf32>
    %225 = vector.shape_cast %224 : vector<16x8xf32> to vector<2x8x8xf32>
    "tpu.trace_start"() <{level = 10 : i32, message = "bqd,bkd->bqk"}> : () -> ()
    %cst_86 = arith.constant dense<0.000000e+00> : vector<2x8x8xf32>
    %226 = tpu.matmul %221, %223, %cst_86 {dimension_numbers = #tpu.dot_dimension_numbers<[2], [2], [1], [1], [0, 0, 0, 1, 1, 1], [0], [0]>} : vector<2x8x8xf32>, vector<2x8x8xf32>, vector<2x8x8xf32> -> vector<2x8x8xf32>
    "tpu.trace_stop"() : () -> ()
    %cst_87 = arith.constant dense<0xFF800000> : vector<2x8xf32>
    %227 = vector.multi_reduction <maximumf>, %226, %cst_87 [2] : vector<2x8x8xf32> to vector<2x8xf32>
    %228 = vector.shape_cast %227 : vector<2x8xf32> to vector<2x8x1xf32>
    %229 = vector.broadcast %228 : vector<2x8x1xf32> to vector<2x8x8xf32>
    %230 = arith.subf %226, %229 : vector<2x8x8xf32>
    %231 = math.exp %230 : vector<2x8x8xf32>
    %cst_88 = arith.constant dense<0.000000e+00> : vector<2x8xf32>
    %232 = vector.multi_reduction <add>, %231, %cst_88 [2] : vector<2x8x8xf32> to vector<2x8xf32>
    %233 = vector.shape_cast %232 : vector<2x8xf32> to vector<2x8x1xf32>
    %234 = tpu.reciprocal %233 {approx = true} : vector<2x8x1xf32> -> vector<2x8x1xf32>
    %235 = vector.broadcast %234 : vector<2x8x1xf32> to vector<2x8x8xf32>
    %236 = arith.mulf %231, %235 : vector<2x8x8xf32>
    "tpu.trace_start"() <{level = 10 : i32, message = "bqk,bkd->bqd"}> : () -> ()
    %cst_89 = arith.constant dense<0.000000e+00> : vector<2x8x8xf32>
    %237 = tpu.matmul %236, %225, %cst_89 {dimension_numbers = #tpu.dot_dimension_numbers<[2], [1], [1], [2], [0, 0, 0, 1, 1, 2], [0], [0]>} : vector<2x8x8xf32>, vector<2x8x8xf32>, vector<2x8x8xf32> -> vector<2x8x8xf32>
    "tpu.trace_stop"() : () -> ()
    %238 = vector.shape_cast %237 : vector<2x8x8xf32> to vector<16x8xf32>
    %239 = vector.extract_strided_slice %152 {offsets = [24, 0], sizes = [8, 32], strides = [1, 1]} : vector<32x32xf32> to vector<8x32xf32>
    %cst_90 = arith.constant dense<0.000000e+00> : vector<16x32xf32>
    %240 = tpu.matmul %238, %239, %cst_90 {dimension_numbers = #tpu.dot_dimension_numbers<[1], [0], [0], [1], [0, 0, 1, 1], [], []>} : vector<16x8xf32>, vector<8x32xf32>, vector<16x32xf32> -> vector<16x32xf32>
    %241 = arith.addf %219, %240 : vector<16x32xf32>
    %242 = vector.broadcast %154 : vector<1x32xf32> to vector<16x32xf32>
    %243 = arith.addf %241, %242 : vector<16x32xf32>
    %244 = arith.addf %243, %134 : vector<16x32xf32>
    %c0_91 = arith.constant 0 : index
    %c0_92 = arith.constant 0 : index
    %c0_93 = arith.constant 0 : index
    %245 = vector.load %arg15[%c0_91, %c0_92, %c0_93] : memref<2x1x32xf32, #tpu.memory_space<vmem>>, vector<1x1x32xf32>
    %246 = vector.shape_cast %245 : vector<1x1x32xf32> to vector<1x32xf32>
    %c0_94 = arith.constant 0 : index
    %c0_95 = arith.constant 0 : index
    %c0_96 = arith.constant 0 : index
    %247 = vector.load %arg16[%c0_94, %c0_95, %c0_96] : memref<2x1x32xf32, #tpu.memory_space<vmem>>, vector<1x1x32xf32>
    %248 = vector.shape_cast %247 : vector<1x1x32xf32> to vector<1x32xf32>
    %cst_97 = arith.constant dense<0.000000e+00> : vector<16xf32>
    %249 = vector.multi_reduction <add>, %244, %cst_97 [1] : vector<16x32xf32> to vector<16xf32>
    %250 = vector.shape_cast %249 : vector<16xf32> to vector<16x1xf32>
    %cst_98 = arith.constant 3.200000e+01 : f32
    %251 = vector.broadcast %cst_98 : f32 to vector<16x1xf32>
    %252 = arith.divf %250, %251 : vector<16x1xf32>
    %253 = vector.broadcast %252 : vector<16x1xf32> to vector<16x32xf32>
    %254 = arith.subf %244, %253 : vector<16x32xf32>
    %255 = arith.mulf %254, %254 : vector<16x32xf32>
    %cst_99 = arith.constant dense<0.000000e+00> : vector<16xf32>
    %256 = vector.multi_reduction <add>, %255, %cst_99 [1] : vector<16x32xf32> to vector<16xf32>
    %257 = vector.shape_cast %256 : vector<16xf32> to vector<16x1xf32>
    %cst_100 = arith.constant 3.200000e+01 : f32
    %258 = vector.broadcast %cst_100 : f32 to vector<16x1xf32>
    %259 = arith.divf %257, %258 : vector<16x1xf32>
    %cst_101 = arith.constant 9.99999974E-6 : f32
    %260 = vector.broadcast %cst_101 : f32 to vector<16x1xf32>
    %261 = arith.addf %259, %260 : vector<16x1xf32>
    %262 = math.rsqrt %261 : vector<16x1xf32>
    %263 = vector.broadcast %262 : vector<16x1xf32> to vector<16x32xf32>
    %264 = arith.mulf %254, %263 : vector<16x32xf32>
    %265 = vector.broadcast %246 : vector<1x32xf32> to vector<16x32xf32>
    %266 = arith.mulf %264, %265 : vector<16x32xf32>
    %267 = vector.broadcast %248 : vector<1x32xf32> to vector<16x32xf32>
    %268 = arith.addf %266, %267 : vector<16x32xf32>
    %c0_102 = arith.constant 0 : index
    %c0_103 = arith.constant 0 : index
    %c0_104 = arith.constant 0 : index
    %269 = vector.load %arg17[%c0_102, %c0_103, %c0_104] : memref<2x32x64xf32, #tpu.memory_space<vmem>>, vector<1x32x64xf32>
    %270 = vector.shape_cast %269 : vector<1x32x64xf32> to vector<32x64xf32>
    %cst_105 = arith.constant dense<0.000000e+00> : vector<16x64xf32>
    %271 = tpu.matmul %268, %270, %cst_105 {dimension_numbers = #tpu.dot_dimension_numbers<[1], [0], [0], [1], [0, 0, 1, 1], [], []>} : vector<16x32xf32>, vector<32x64xf32>, vector<16x64xf32> -> vector<16x64xf32>
    %c0_106 = arith.constant 0 : index
    %c0_107 = arith.constant 0 : index
    %c0_108 = arith.constant 0 : index
    %272 = vector.load %arg18[%c0_106, %c0_107, %c0_108] : memref<2x1x64xf32, #tpu.memory_space<vmem>>, vector<1x1x64xf32>
    %273 = vector.shape_cast %272 : vector<1x1x64xf32> to vector<1x64xf32>
    %274 = vector.broadcast %273 : vector<1x64xf32> to vector<16x64xf32>
    %275 = arith.addf %271, %274 : vector<16x64xf32>
    %cst_109 = arith.constant 0.000000e+00 : f32
    %276 = vector.broadcast %cst_109 : f32 to vector<16x64xf32>
    %277 = arith.maximumf %275, %276 : vector<16x64xf32>
    %c0_110 = arith.constant 0 : index
    %c0_111 = arith.constant 0 : index
    %c0_112 = arith.constant 0 : index
    %278 = vector.load %arg19[%c0_110, %c0_111, %c0_112] : memref<2x64x32xf32, #tpu.memory_space<vmem>>, vector<1x64x32xf32>
    %279 = vector.shape_cast %278 : vector<1x64x32xf32> to vector<64x32xf32>
    %cst_113 = arith.constant dense<0.000000e+00> : vector<16x32xf32>
    %280 = tpu.matmul %277, %279, %cst_113 {dimension_numbers = #tpu.dot_dimension_numbers<[1], [0], [0], [1], [0, 0, 1, 1], [], []>} : vector<16x64xf32>, vector<64x32xf32>, vector<16x32xf32> -> vector<16x32xf32>
    %c0_114 = arith.constant 0 : index
    %c0_115 = arith.constant 0 : index
    %c0_116 = arith.constant 0 : index
    %281 = vector.load %arg20[%c0_114, %c0_115, %c0_116] : memref<2x1x32xf32, #tpu.memory_space<vmem>>, vector<1x1x32xf32>
    %282 = vector.shape_cast %281 : vector<1x1x32xf32> to vector<1x32xf32>
    %283 = vector.broadcast %282 : vector<1x32xf32> to vector<16x32xf32>
    %284 = arith.addf %280, %283 : vector<16x32xf32>
    %285 = arith.addf %284, %268 : vector<16x32xf32>
    %c0_117 = arith.constant 0 : index
    %c0_118 = arith.constant 0 : index
    %c0_119 = arith.constant 0 : index
    %286 = vector.load %arg21[%c0_117, %c0_118, %c0_119] : memref<2x1x32xf32, #tpu.memory_space<vmem>>, vector<1x1x32xf32>
    %287 = vector.shape_cast %286 : vector<1x1x32xf32> to vector<1x32xf32>
    %c0_120 = arith.constant 0 : index
    %c0_121 = arith.constant 0 : index
    %c0_122 = arith.constant 0 : index
    %288 = vector.load %arg22[%c0_120, %c0_121, %c0_122] : memref<2x1x32xf32, #tpu.memory_space<vmem>>, vector<1x1x32xf32>
    %289 = vector.shape_cast %288 : vector<1x1x32xf32> to vector<1x32xf32>
    %cst_123 = arith.constant dense<0.000000e+00> : vector<16xf32>
    %290 = vector.multi_reduction <add>, %285, %cst_123 [1] : vector<16x32xf32> to vector<16xf32>
    %291 = vector.shape_cast %290 : vector<16xf32> to vector<16x1xf32>
    %cst_124 = arith.constant 3.200000e+01 : f32
    %292 = vector.broadcast %cst_124 : f32 to vector<16x1xf32>
    %293 = arith.divf %291, %292 : vector<16x1xf32>
    %294 = vector.broadcast %293 : vector<16x1xf32> to vector<16x32xf32>
    %295 = arith.subf %285, %294 : vector<16x32xf32>
    %296 = arith.mulf %295, %295 : vector<16x32xf32>
    %cst_125 = arith.constant dense<0.000000e+00> : vector<16xf32>
    %297 = vector.multi_reduction <add>, %296, %cst_125 [1] : vector<16x32xf32> to vector<16xf32>
    %298 = vector.shape_cast %297 : vector<16xf32> to vector<16x1xf32>
    %cst_126 = arith.constant 3.200000e+01 : f32
    %299 = vector.broadcast %cst_126 : f32 to vector<16x1xf32>
    %300 = arith.divf %298, %299 : vector<16x1xf32>
    %cst_127 = arith.constant 9.99999974E-6 : f32
    %301 = vector.broadcast %cst_127 : f32 to vector<16x1xf32>
    %302 = arith.addf %300, %301 : vector<16x1xf32>
    %303 = math.rsqrt %302 : vector<16x1xf32>
    %304 = vector.broadcast %303 : vector<16x1xf32> to vector<16x32xf32>
    %305 = arith.mulf %295, %304 : vector<16x32xf32>
    %306 = vector.broadcast %287 : vector<1x32xf32> to vector<16x32xf32>
    %307 = arith.mulf %305, %306 : vector<16x32xf32>
    %308 = vector.broadcast %289 : vector<1x32xf32> to vector<16x32xf32>
    %309 = arith.addf %307, %308 : vector<16x32xf32>
    %c1 = arith.constant 1 : index
    %c0_128 = arith.constant 0 : index
    %c0_129 = arith.constant 0 : index
    %310 = vector.load %arg3[%c1, %c0_128, %c0_129] : memref<2x32x96xf32, #tpu.memory_space<vmem>>, vector<1x32x96xf32>
    %311 = vector.shape_cast %310 : vector<1x32x96xf32> to vector<32x96xf32>
    %cst_130 = arith.constant dense<0.000000e+00> : vector<16x96xf32>
    %312 = tpu.matmul %309, %311, %cst_130 {dimension_numbers = #tpu.dot_dimension_numbers<[1], [0], [0], [1], [0, 0, 1, 1], [], []>} : vector<16x32xf32>, vector<32x96xf32>, vector<16x96xf32> -> vector<16x96xf32>
    %c1_131 = arith.constant 1 : index
    %c0_132 = arith.constant 0 : index
    %c0_133 = arith.constant 0 : index
    %313 = vector.load %arg4[%c1_131, %c0_132, %c0_133] : memref<2x1x96xf32, #tpu.memory_space<vmem>>, vector<1x1x96xf32>
    %314 = vector.shape_cast %313 : vector<1x1x96xf32> to vector<1x96xf32>
    %315 = vector.broadcast %314 : vector<1x96xf32> to vector<16x96xf32>
    %316 = arith.addf %312, %315 : vector<16x96xf32>
    %317 = vector.extract_strided_slice %316 {offsets = [0, 0], sizes = [16, 32], strides = [1, 1]} : vector<16x96xf32> to vector<16x32xf32>
    %318 = vector.extract_strided_slice %316 {offsets = [0, 32], sizes = [16, 32], strides = [1, 1]} : vector<16x96xf32> to vector<16x32xf32>
    %319 = vector.extract_strided_slice %316 {offsets = [0, 64], sizes = [16, 32], strides = [1, 1]} : vector<16x96xf32> to vector<16x32xf32>
    %c1_134 = arith.constant 1 : index
    %c0_135 = arith.constant 0 : index
    %c0_136 = arith.constant 0 : index
    %320 = vector.load %arg5[%c1_134, %c0_135, %c0_136] : memref<2x32x32xf32, #tpu.memory_space<vmem>>, vector<1x32x32xf32>
    %321 = vector.shape_cast %320 : vector<1x32x32xf32> to vector<32x32xf32>
    %c1_137 = arith.constant 1 : index
    %c0_138 = arith.constant 0 : index
    %c0_139 = arith.constant 0 : index
    %322 = vector.load %arg6[%c1_137, %c0_138, %c0_139] : memref<2x1x32xf32, #tpu.memory_space<vmem>>, vector<1x1x32xf32>
    %323 = vector.shape_cast %322 : vector<1x1x32xf32> to vector<1x32xf32>
    %324 = vector.extract_strided_slice %317 {offsets = [0, 0], sizes = [16, 8], strides = [1, 1]} : vector<16x32xf32> to vector<16x8xf32>
    %325 = vector.shape_cast %324 : vector<16x8xf32> to vector<2x8x8xf32>
    %326 = vector.extract_strided_slice %318 {offsets = [0, 0], sizes = [16, 8], strides = [1, 1]} : vector<16x32xf32> to vector<16x8xf32>
    %327 = vector.shape_cast %326 : vector<16x8xf32> to vector<2x8x8xf32>
    %328 = vector.extract_strided_slice %319 {offsets = [0, 0], sizes = [16, 8], strides = [1, 1]} : vector<16x32xf32> to vector<16x8xf32>
    %329 = vector.shape_cast %328 : vector<16x8xf32> to vector<2x8x8xf32>
    "tpu.trace_start"() <{level = 10 : i32, message = "bqd,bkd->bqk"}> : () -> ()
    %cst_140 = arith.constant dense<0.000000e+00> : vector<2x8x8xf32>
    %330 = tpu.matmul %325, %327, %cst_140 {dimension_numbers = #tpu.dot_dimension_numbers<[2], [2], [1], [1], [0, 0, 0, 1, 1, 1], [0], [0]>} : vector<2x8x8xf32>, vector<2x8x8xf32>, vector<2x8x8xf32> -> vector<2x8x8xf32>
    "tpu.trace_stop"() : () -> ()
    %cst_141 = arith.constant dense<0xFF800000> : vector<2x8xf32>
    %331 = vector.multi_reduction <maximumf>, %330, %cst_141 [2] : vector<2x8x8xf32> to vector<2x8xf32>
    %332 = vector.shape_cast %331 : vector<2x8xf32> to vector<2x8x1xf32>
    %333 = vector.broadcast %332 : vector<2x8x1xf32> to vector<2x8x8xf32>
    %334 = arith.subf %330, %333 : vector<2x8x8xf32>
    %335 = math.exp %334 : vector<2x8x8xf32>
    %cst_142 = arith.constant dense<0.000000e+00> : vector<2x8xf32>
    %336 = vector.multi_reduction <add>, %335, %cst_142 [2] : vector<2x8x8xf32> to vector<2x8xf32>
    %337 = vector.shape_cast %336 : vector<2x8xf32> to vector<2x8x1xf32>
    %338 = tpu.reciprocal %337 {approx = true} : vector<2x8x1xf32> -> vector<2x8x1xf32>
    %339 = vector.broadcast %338 : vector<2x8x1xf32> to vector<2x8x8xf32>
    %340 = arith.mulf %335, %339 : vector<2x8x8xf32>
    "tpu.trace_start"() <{level = 10 : i32, message = "bqk,bkd->bqd"}> : () -> ()
    %cst_143 = arith.constant dense<0.000000e+00> : vector<2x8x8xf32>
    %341 = tpu.matmul %340, %329, %cst_143 {dimension_numbers = #tpu.dot_dimension_numbers<[2], [1], [1], [2], [0, 0, 0, 1, 1, 2], [0], [0]>} : vector<2x8x8xf32>, vector<2x8x8xf32>, vector<2x8x8xf32> -> vector<2x8x8xf32>
    "tpu.trace_stop"() : () -> ()
    %342 = vector.shape_cast %341 : vector<2x8x8xf32> to vector<16x8xf32>
    %343 = vector.extract_strided_slice %321 {offsets = [0, 0], sizes = [8, 32], strides = [1, 1]} : vector<32x32xf32> to vector<8x32xf32>
    %cst_144 = arith.constant dense<0.000000e+00> : vector<16x32xf32>
    %344 = tpu.matmul %342, %343, %cst_144 {dimension_numbers = #tpu.dot_dimension_numbers<[1], [0], [0], [1], [0, 0, 1, 1], [], []>} : vector<16x8xf32>, vector<8x32xf32>, vector<16x32xf32> -> vector<16x32xf32>
    %345 = vector.extract_strided_slice %317 {offsets = [0, 8], sizes = [16, 8], strides = [1, 1]} : vector<16x32xf32> to vector<16x8xf32>
    %346 = vector.shape_cast %345 : vector<16x8xf32> to vector<2x8x8xf32>
    %347 = vector.extract_strided_slice %318 {offsets = [0, 8], sizes = [16, 8], strides = [1, 1]} : vector<16x32xf32> to vector<16x8xf32>
    %348 = vector.shape_cast %347 : vector<16x8xf32> to vector<2x8x8xf32>
    %349 = vector.extract_strided_slice %319 {offsets = [0, 8], sizes = [16, 8], strides = [1, 1]} : vector<16x32xf32> to vector<16x8xf32>
    %350 = vector.shape_cast %349 : vector<16x8xf32> to vector<2x8x8xf32>
    "tpu.trace_start"() <{level = 10 : i32, message = "bqd,bkd->bqk"}> : () -> ()
    %cst_145 = arith.constant dense<0.000000e+00> : vector<2x8x8xf32>
    %351 = tpu.matmul %346, %348, %cst_145 {dimension_numbers = #tpu.dot_dimension_numbers<[2], [2], [1], [1], [0, 0, 0, 1, 1, 1], [0], [0]>} : vector<2x8x8xf32>, vector<2x8x8xf32>, vector<2x8x8xf32> -> vector<2x8x8xf32>
    "tpu.trace_stop"() : () -> ()
    %cst_146 = arith.constant dense<0xFF800000> : vector<2x8xf32>
    %352 = vector.multi_reduction <maximumf>, %351, %cst_146 [2] : vector<2x8x8xf32> to vector<2x8xf32>
    %353 = vector.shape_cast %352 : vector<2x8xf32> to vector<2x8x1xf32>
    %354 = vector.broadcast %353 : vector<2x8x1xf32> to vector<2x8x8xf32>
    %355 = arith.subf %351, %354 : vector<2x8x8xf32>
    %356 = math.exp %355 : vector<2x8x8xf32>
    %cst_147 = arith.constant dense<0.000000e+00> : vector<2x8xf32>
    %357 = vector.multi_reduction <add>, %356, %cst_147 [2] : vector<2x8x8xf32> to vector<2x8xf32>
    %358 = vector.shape_cast %357 : vector<2x8xf32> to vector<2x8x1xf32>
    %359 = tpu.reciprocal %358 {approx = true} : vector<2x8x1xf32> -> vector<2x8x1xf32>
    %360 = vector.broadcast %359 : vector<2x8x1xf32> to vector<2x8x8xf32>
    %361 = arith.mulf %356, %360 : vector<2x8x8xf32>
    "tpu.trace_start"() <{level = 10 : i32, message = "bqk,bkd->bqd"}> : () -> ()
    %cst_148 = arith.constant dense<0.000000e+00> : vector<2x8x8xf32>
    %362 = tpu.matmul %361, %350, %cst_148 {dimension_numbers = #tpu.dot_dimension_numbers<[2], [1], [1], [2], [0, 0, 0, 1, 1, 2], [0], [0]>} : vector<2x8x8xf32>, vector<2x8x8xf32>, vector<2x8x8xf32> -> vector<2x8x8xf32>
    "tpu.trace_stop"() : () -> ()
    %363 = vector.shape_cast %362 : vector<2x8x8xf32> to vector<16x8xf32>
    %364 = vector.extract_strided_slice %321 {offsets = [8, 0], sizes = [8, 32], strides = [1, 1]} : vector<32x32xf32> to vector<8x32xf32>
    %cst_149 = arith.constant dense<0.000000e+00> : vector<16x32xf32>
    %365 = tpu.matmul %363, %364, %cst_149 {dimension_numbers = #tpu.dot_dimension_numbers<[1], [0], [0], [1], [0, 0, 1, 1], [], []>} : vector<16x8xf32>, vector<8x32xf32>, vector<16x32xf32> -> vector<16x32xf32>
    %366 = arith.addf %344, %365 : vector<16x32xf32>
    %367 = vector.extract_strided_slice %317 {offsets = [0, 16], sizes = [16, 8], strides = [1, 1]} : vector<16x32xf32> to vector<16x8xf32>
    %368 = vector.shape_cast %367 : vector<16x8xf32> to vector<2x8x8xf32>
    %369 = vector.extract_strided_slice %318 {offsets = [0, 16], sizes = [16, 8], strides = [1, 1]} : vector<16x32xf32> to vector<16x8xf32>
    %370 = vector.shape_cast %369 : vector<16x8xf32> to vector<2x8x8xf32>
    %371 = vector.extract_strided_slice %319 {offsets = [0, 16], sizes = [16, 8], strides = [1, 1]} : vector<16x32xf32> to vector<16x8xf32>
    %372 = vector.shape_cast %371 : vector<16x8xf32> to vector<2x8x8xf32>
    "tpu.trace_start"() <{level = 10 : i32, message = "bqd,bkd->bqk"}> : () -> ()
    %cst_150 = arith.constant dense<0.000000e+00> : vector<2x8x8xf32>
    %373 = tpu.matmul %368, %370, %cst_150 {dimension_numbers = #tpu.dot_dimension_numbers<[2], [2], [1], [1], [0, 0, 0, 1, 1, 1], [0], [0]>} : vector<2x8x8xf32>, vector<2x8x8xf32>, vector<2x8x8xf32> -> vector<2x8x8xf32>
    "tpu.trace_stop"() : () -> ()
    %cst_151 = arith.constant dense<0xFF800000> : vector<2x8xf32>
    %374 = vector.multi_reduction <maximumf>, %373, %cst_151 [2] : vector<2x8x8xf32> to vector<2x8xf32>
    %375 = vector.shape_cast %374 : vector<2x8xf32> to vector<2x8x1xf32>
    %376 = vector.broadcast %375 : vector<2x8x1xf32> to vector<2x8x8xf32>
    %377 = arith.subf %373, %376 : vector<2x8x8xf32>
    %378 = math.exp %377 : vector<2x8x8xf32>
    %cst_152 = arith.constant dense<0.000000e+00> : vector<2x8xf32>
    %379 = vector.multi_reduction <add>, %378, %cst_152 [2] : vector<2x8x8xf32> to vector<2x8xf32>
    %380 = vector.shape_cast %379 : vector<2x8xf32> to vector<2x8x1xf32>
    %381 = tpu.reciprocal %380 {approx = true} : vector<2x8x1xf32> -> vector<2x8x1xf32>
    %382 = vector.broadcast %381 : vector<2x8x1xf32> to vector<2x8x8xf32>
    %383 = arith.mulf %378, %382 : vector<2x8x8xf32>
    "tpu.trace_start"() <{level = 10 : i32, message = "bqk,bkd->bqd"}> : () -> ()
    %cst_153 = arith.constant dense<0.000000e+00> : vector<2x8x8xf32>
    %384 = tpu.matmul %383, %372, %cst_153 {dimension_numbers = #tpu.dot_dimension_numbers<[2], [1], [1], [2], [0, 0, 0, 1, 1, 2], [0], [0]>} : vector<2x8x8xf32>, vector<2x8x8xf32>, vector<2x8x8xf32> -> vector<2x8x8xf32>
    "tpu.trace_stop"() : () -> ()
    %385 = vector.shape_cast %384 : vector<2x8x8xf32> to vector<16x8xf32>
    %386 = vector.extract_strided_slice %321 {offsets = [16, 0], sizes = [8, 32], strides = [1, 1]} : vector<32x32xf32> to vector<8x32xf32>
    %cst_154 = arith.constant dense<0.000000e+00> : vector<16x32xf32>
    %387 = tpu.matmul %385, %386, %cst_154 {dimension_numbers = #tpu.dot_dimension_numbers<[1], [0], [0], [1], [0, 0, 1, 1], [], []>} : vector<16x8xf32>, vector<8x32xf32>, vector<16x32xf32> -> vector<16x32xf32>
    %388 = arith.addf %366, %387 : vector<16x32xf32>
    %389 = vector.extract_strided_slice %317 {offsets = [0, 24], sizes = [16, 8], strides = [1, 1]} : vector<16x32xf32> to vector<16x8xf32>
    %390 = vector.shape_cast %389 : vector<16x8xf32> to vector<2x8x8xf32>
    %391 = vector.extract_strided_slice %318 {offsets = [0, 24], sizes = [16, 8], strides = [1, 1]} : vector<16x32xf32> to vector<16x8xf32>
    %392 = vector.shape_cast %391 : vector<16x8xf32> to vector<2x8x8xf32>
    %393 = vector.extract_strided_slice %319 {offsets = [0, 24], sizes = [16, 8], strides = [1, 1]} : vector<16x32xf32> to vector<16x8xf32>
    %394 = vector.shape_cast %393 : vector<16x8xf32> to vector<2x8x8xf32>
    "tpu.trace_start"() <{level = 10 : i32, message = "bqd,bkd->bqk"}> : () -> ()
    %cst_155 = arith.constant dense<0.000000e+00> : vector<2x8x8xf32>
    %395 = tpu.matmul %390, %392, %cst_155 {dimension_numbers = #tpu.dot_dimension_numbers<[2], [2], [1], [1], [0, 0, 0, 1, 1, 1], [0], [0]>} : vector<2x8x8xf32>, vector<2x8x8xf32>, vector<2x8x8xf32> -> vector<2x8x8xf32>
    "tpu.trace_stop"() : () -> ()
    %cst_156 = arith.constant dense<0xFF800000> : vector<2x8xf32>
    %396 = vector.multi_reduction <maximumf>, %395, %cst_156 [2] : vector<2x8x8xf32> to vector<2x8xf32>
    %397 = vector.shape_cast %396 : vector<2x8xf32> to vector<2x8x1xf32>
    %398 = vector.broadcast %397 : vector<2x8x1xf32> to vector<2x8x8xf32>
    %399 = arith.subf %395, %398 : vector<2x8x8xf32>
    %400 = math.exp %399 : vector<2x8x8xf32>
    %cst_157 = arith.constant dense<0.000000e+00> : vector<2x8xf32>
    %401 = vector.multi_reduction <add>, %400, %cst_157 [2] : vector<2x8x8xf32> to vector<2x8xf32>
    %402 = vector.shape_cast %401 : vector<2x8xf32> to vector<2x8x1xf32>
    %403 = tpu.reciprocal %402 {approx = true} : vector<2x8x1xf32> -> vector<2x8x1xf32>
    %404 = vector.broadcast %403 : vector<2x8x1xf32> to vector<2x8x8xf32>
    %405 = arith.mulf %400, %404 : vector<2x8x8xf32>
    "tpu.trace_start"() <{level = 10 : i32, message = "bqk,bkd->bqd"}> : () -> ()
    %cst_158 = arith.constant dense<0.000000e+00> : vector<2x8x8xf32>
    %406 = tpu.matmul %405, %394, %cst_158 {dimension_numbers = #tpu.dot_dimension_numbers<[2], [1], [1], [2], [0, 0, 0, 1, 1, 2], [0], [0]>} : vector<2x8x8xf32>, vector<2x8x8xf32>, vector<2x8x8xf32> -> vector<2x8x8xf32>
    "tpu.trace_stop"() : () -> ()
    %407 = vector.shape_cast %406 : vector<2x8x8xf32> to vector<16x8xf32>
    %408 = vector.extract_strided_slice %321 {offsets = [24, 0], sizes = [8, 32], strides = [1, 1]} : vector<32x32xf32> to vector<8x32xf32>
    %cst_159 = arith.constant dense<0.000000e+00> : vector<16x32xf32>
    %409 = tpu.matmul %407, %408, %cst_159 {dimension_numbers = #tpu.dot_dimension_numbers<[1], [0], [0], [1], [0, 0, 1, 1], [], []>} : vector<16x8xf32>, vector<8x32xf32>, vector<16x32xf32> -> vector<16x32xf32>
    %410 = arith.addf %388, %409 : vector<16x32xf32>
    %411 = vector.broadcast %323 : vector<1x32xf32> to vector<16x32xf32>
    %412 = arith.addf %410, %411 : vector<16x32xf32>
    %413 = arith.addf %412, %309 : vector<16x32xf32>
    %c1_160 = arith.constant 1 : index
    %c0_161 = arith.constant 0 : index
    %c0_162 = arith.constant 0 : index
    %414 = vector.load %arg7[%c1_160, %c0_161, %c0_162] : memref<2x1x32xf32, #tpu.memory_space<vmem>>, vector<1x1x32xf32>
    %415 = vector.shape_cast %414 : vector<1x1x32xf32> to vector<1x32xf32>
    %c1_163 = arith.constant 1 : index
    %c0_164 = arith.constant 0 : index
    %c0_165 = arith.constant 0 : index
    %416 = vector.load %arg8[%c1_163, %c0_164, %c0_165] : memref<2x1x32xf32, #tpu.memory_space<vmem>>, vector<1x1x32xf32>
    %417 = vector.shape_cast %416 : vector<1x1x32xf32> to vector<1x32xf32>
    %cst_166 = arith.constant dense<0.000000e+00> : vector<16xf32>
    %418 = vector.multi_reduction <add>, %413, %cst_166 [1] : vector<16x32xf32> to vector<16xf32>
    %419 = vector.shape_cast %418 : vector<16xf32> to vector<16x1xf32>
    %cst_167 = arith.constant 3.200000e+01 : f32
    %420 = vector.broadcast %cst_167 : f32 to vector<16x1xf32>
    %421 = arith.divf %419, %420 : vector<16x1xf32>
    %422 = vector.broadcast %421 : vector<16x1xf32> to vector<16x32xf32>
    %423 = arith.subf %413, %422 : vector<16x32xf32>
    %424 = arith.mulf %423, %423 : vector<16x32xf32>
    %cst_168 = arith.constant dense<0.000000e+00> : vector<16xf32>
    %425 = vector.multi_reduction <add>, %424, %cst_168 [1] : vector<16x32xf32> to vector<16xf32>
    %426 = vector.shape_cast %425 : vector<16xf32> to vector<16x1xf32>
    %cst_169 = arith.constant 3.200000e+01 : f32
    %427 = vector.broadcast %cst_169 : f32 to vector<16x1xf32>
    %428 = arith.divf %426, %427 : vector<16x1xf32>
    %cst_170 = arith.constant 9.99999974E-6 : f32
    %429 = vector.broadcast %cst_170 : f32 to vector<16x1xf32>
    %430 = arith.addf %428, %429 : vector<16x1xf32>
    %431 = math.rsqrt %430 : vector<16x1xf32>
    %432 = vector.broadcast %431 : vector<16x1xf32> to vector<16x32xf32>
    %433 = arith.mulf %423, %432 : vector<16x32xf32>
    %434 = vector.broadcast %415 : vector<1x32xf32> to vector<16x32xf32>
    %435 = arith.mulf %433, %434 : vector<16x32xf32>
    %436 = vector.broadcast %417 : vector<1x32xf32> to vector<16x32xf32>
    %437 = arith.addf %435, %436 : vector<16x32xf32>
    %c1_171 = arith.constant 1 : index
    %c0_172 = arith.constant 0 : index
    %c0_173 = arith.constant 0 : index
    %438 = vector.load %arg9[%c1_171, %c0_172, %c0_173] : memref<2x32x32xf32, #tpu.memory_space<vmem>>, vector<1x32x32xf32>
    %439 = vector.shape_cast %438 : vector<1x32x32xf32> to vector<32x32xf32>
    %cst_174 = arith.constant dense<0.000000e+00> : vector<16x32xf32>
    %440 = tpu.matmul %437, %439, %cst_174 {dimension_numbers = #tpu.dot_dimension_numbers<[1], [0], [0], [1], [0, 0, 1, 1], [], []>} : vector<16x32xf32>, vector<32x32xf32>, vector<16x32xf32> -> vector<16x32xf32>
    %c1_175 = arith.constant 1 : index
    %c0_176 = arith.constant 0 : index
    %c0_177 = arith.constant 0 : index
    %441 = vector.load %arg10[%c1_175, %c0_176, %c0_177] : memref<2x1x32xf32, #tpu.memory_space<vmem>>, vector<1x1x32xf32>
    %442 = vector.shape_cast %441 : vector<1x1x32xf32> to vector<1x32xf32>
    %443 = vector.broadcast %442 : vector<1x32xf32> to vector<16x32xf32>
    %444 = arith.addf %440, %443 : vector<16x32xf32>
    %c1_178 = arith.constant 1 : index
    %c0_179 = arith.constant 0 : index
    %c0_180 = arith.constant 0 : index
    %445 = vector.load %arg11[%c1_178, %c0_179, %c0_180] : memref<2x32x64xf32, #tpu.memory_space<vmem>>, vector<1x32x64xf32>
    %446 = vector.shape_cast %445 : vector<1x32x64xf32> to vector<32x64xf32>
    %cst_181 = arith.constant dense<0.000000e+00> : vector<16x64xf32>
    %447 = tpu.matmul %6, %446, %cst_181 {dimension_numbers = #tpu.dot_dimension_numbers<[1], [0], [0], [1], [0, 0, 1, 1], [], []>} : vector<16x32xf32>, vector<32x64xf32>, vector<16x64xf32> -> vector<16x64xf32>
    %c1_182 = arith.constant 1 : index
    %c0_183 = arith.constant 0 : index
    %c0_184 = arith.constant 0 : index
    %448 = vector.load %arg12[%c1_182, %c0_183, %c0_184] : memref<2x1x64xf32, #tpu.memory_space<vmem>>, vector<1x1x64xf32>
    %449 = vector.shape_cast %448 : vector<1x1x64xf32> to vector<1x64xf32>
    %450 = vector.broadcast %449 : vector<1x64xf32> to vector<16x64xf32>
    %451 = arith.addf %447, %450 : vector<16x64xf32>
    %452 = vector.extract_strided_slice %451 {offsets = [0, 0], sizes = [16, 32], strides = [1, 1]} : vector<16x64xf32> to vector<16x32xf32>
    %453 = vector.extract_strided_slice %451 {offsets = [0, 32], sizes = [16, 32], strides = [1, 1]} : vector<16x64xf32> to vector<16x32xf32>
    %c1_185 = arith.constant 1 : index
    %c0_186 = arith.constant 0 : index
    %c0_187 = arith.constant 0 : index
    %454 = vector.load %arg13[%c1_185, %c0_186, %c0_187] : memref<2x32x32xf32, #tpu.memory_space<vmem>>, vector<1x32x32xf32>
    %455 = vector.shape_cast %454 : vector<1x32x32xf32> to vector<32x32xf32>
    %c1_188 = arith.constant 1 : index
    %c0_189 = arith.constant 0 : index
    %c0_190 = arith.constant 0 : index
    %456 = vector.load %arg14[%c1_188, %c0_189, %c0_190] : memref<2x1x32xf32, #tpu.memory_space<vmem>>, vector<1x1x32xf32>
    %457 = vector.shape_cast %456 : vector<1x1x32xf32> to vector<1x32xf32>
    %458 = vector.extract_strided_slice %444 {offsets = [0, 0], sizes = [16, 8], strides = [1, 1]} : vector<16x32xf32> to vector<16x8xf32>
    %459 = vector.shape_cast %458 : vector<16x8xf32> to vector<2x8x8xf32>
    %460 = vector.extract_strided_slice %452 {offsets = [0, 0], sizes = [16, 8], strides = [1, 1]} : vector<16x32xf32> to vector<16x8xf32>
    %461 = vector.shape_cast %460 : vector<16x8xf32> to vector<2x8x8xf32>
    %462 = vector.extract_strided_slice %453 {offsets = [0, 0], sizes = [16, 8], strides = [1, 1]} : vector<16x32xf32> to vector<16x8xf32>
    %463 = vector.shape_cast %462 : vector<16x8xf32> to vector<2x8x8xf32>
    "tpu.trace_start"() <{level = 10 : i32, message = "bqd,bkd->bqk"}> : () -> ()
    %cst_191 = arith.constant dense<0.000000e+00> : vector<2x8x8xf32>
    %464 = tpu.matmul %459, %461, %cst_191 {dimension_numbers = #tpu.dot_dimension_numbers<[2], [2], [1], [1], [0, 0, 0, 1, 1, 1], [0], [0]>} : vector<2x8x8xf32>, vector<2x8x8xf32>, vector<2x8x8xf32> -> vector<2x8x8xf32>
    "tpu.trace_stop"() : () -> ()
    %cst_192 = arith.constant dense<0xFF800000> : vector<2x8xf32>
    %465 = vector.multi_reduction <maximumf>, %464, %cst_192 [2] : vector<2x8x8xf32> to vector<2x8xf32>
    %466 = vector.shape_cast %465 : vector<2x8xf32> to vector<2x8x1xf32>
    %467 = vector.broadcast %466 : vector<2x8x1xf32> to vector<2x8x8xf32>
    %468 = arith.subf %464, %467 : vector<2x8x8xf32>
    %469 = math.exp %468 : vector<2x8x8xf32>
    %cst_193 = arith.constant dense<0.000000e+00> : vector<2x8xf32>
    %470 = vector.multi_reduction <add>, %469, %cst_193 [2] : vector<2x8x8xf32> to vector<2x8xf32>
    %471 = vector.shape_cast %470 : vector<2x8xf32> to vector<2x8x1xf32>
    %472 = tpu.reciprocal %471 {approx = true} : vector<2x8x1xf32> -> vector<2x8x1xf32>
    %473 = vector.broadcast %472 : vector<2x8x1xf32> to vector<2x8x8xf32>
    %474 = arith.mulf %469, %473 : vector<2x8x8xf32>
    "tpu.trace_start"() <{level = 10 : i32, message = "bqk,bkd->bqd"}> : () -> ()
    %cst_194 = arith.constant dense<0.000000e+00> : vector<2x8x8xf32>
    %475 = tpu.matmul %474, %463, %cst_194 {dimension_numbers = #tpu.dot_dimension_numbers<[2], [1], [1], [2], [0, 0, 0, 1, 1, 2], [0], [0]>} : vector<2x8x8xf32>, vector<2x8x8xf32>, vector<2x8x8xf32> -> vector<2x8x8xf32>
    "tpu.trace_stop"() : () -> ()
    %476 = vector.shape_cast %475 : vector<2x8x8xf32> to vector<16x8xf32>
    %477 = vector.extract_strided_slice %455 {offsets = [0, 0], sizes = [8, 32], strides = [1, 1]} : vector<32x32xf32> to vector<8x32xf32>
    %cst_195 = arith.constant dense<0.000000e+00> : vector<16x32xf32>
    %478 = tpu.matmul %476, %477, %cst_195 {dimension_numbers = #tpu.dot_dimension_numbers<[1], [0], [0], [1], [0, 0, 1, 1], [], []>} : vector<16x8xf32>, vector<8x32xf32>, vector<16x32xf32> -> vector<16x32xf32>
    %479 = vector.extract_strided_slice %444 {offsets = [0, 8], sizes = [16, 8], strides = [1, 1]} : vector<16x32xf32> to vector<16x8xf32>
    %480 = vector.shape_cast %479 : vector<16x8xf32> to vector<2x8x8xf32>
    %481 = vector.extract_strided_slice %452 {offsets = [0, 8], sizes = [16, 8], strides = [1, 1]} : vector<16x32xf32> to vector<16x8xf32>
    %482 = vector.shape_cast %481 : vector<16x8xf32> to vector<2x8x8xf32>
    %483 = vector.extract_strided_slice %453 {offsets = [0, 8], sizes = [16, 8], strides = [1, 1]} : vector<16x32xf32> to vector<16x8xf32>
    %484 = vector.shape_cast %483 : vector<16x8xf32> to vector<2x8x8xf32>
    "tpu.trace_start"() <{level = 10 : i32, message = "bqd,bkd->bqk"}> : () -> ()
    %cst_196 = arith.constant dense<0.000000e+00> : vector<2x8x8xf32>
    %485 = tpu.matmul %480, %482, %cst_196 {dimension_numbers = #tpu.dot_dimension_numbers<[2], [2], [1], [1], [0, 0, 0, 1, 1, 1], [0], [0]>} : vector<2x8x8xf32>, vector<2x8x8xf32>, vector<2x8x8xf32> -> vector<2x8x8xf32>
    "tpu.trace_stop"() : () -> ()
    %cst_197 = arith.constant dense<0xFF800000> : vector<2x8xf32>
    %486 = vector.multi_reduction <maximumf>, %485, %cst_197 [2] : vector<2x8x8xf32> to vector<2x8xf32>
    %487 = vector.shape_cast %486 : vector<2x8xf32> to vector<2x8x1xf32>
    %488 = vector.broadcast %487 : vector<2x8x1xf32> to vector<2x8x8xf32>
    %489 = arith.subf %485, %488 : vector<2x8x8xf32>
    %490 = math.exp %489 : vector<2x8x8xf32>
    %cst_198 = arith.constant dense<0.000000e+00> : vector<2x8xf32>
    %491 = vector.multi_reduction <add>, %490, %cst_198 [2] : vector<2x8x8xf32> to vector<2x8xf32>
    %492 = vector.shape_cast %491 : vector<2x8xf32> to vector<2x8x1xf32>
    %493 = tpu.reciprocal %492 {approx = true} : vector<2x8x1xf32> -> vector<2x8x1xf32>
    %494 = vector.broadcast %493 : vector<2x8x1xf32> to vector<2x8x8xf32>
    %495 = arith.mulf %490, %494 : vector<2x8x8xf32>
    "tpu.trace_start"() <{level = 10 : i32, message = "bqk,bkd->bqd"}> : () -> ()
    %cst_199 = arith.constant dense<0.000000e+00> : vector<2x8x8xf32>
    %496 = tpu.matmul %495, %484, %cst_199 {dimension_numbers = #tpu.dot_dimension_numbers<[2], [1], [1], [2], [0, 0, 0, 1, 1, 2], [0], [0]>} : vector<2x8x8xf32>, vector<2x8x8xf32>, vector<2x8x8xf32> -> vector<2x8x8xf32>
    "tpu.trace_stop"() : () -> ()
    %497 = vector.shape_cast %496 : vector<2x8x8xf32> to vector<16x8xf32>
    %498 = vector.extract_strided_slice %455 {offsets = [8, 0], sizes = [8, 32], strides = [1, 1]} : vector<32x32xf32> to vector<8x32xf32>
    %cst_200 = arith.constant dense<0.000000e+00> : vector<16x32xf32>
    %499 = tpu.matmul %497, %498, %cst_200 {dimension_numbers = #tpu.dot_dimension_numbers<[1], [0], [0], [1], [0, 0, 1, 1], [], []>} : vector<16x8xf32>, vector<8x32xf32>, vector<16x32xf32> -> vector<16x32xf32>
    %500 = arith.addf %478, %499 : vector<16x32xf32>
    %501 = vector.extract_strided_slice %444 {offsets = [0, 16], sizes = [16, 8], strides = [1, 1]} : vector<16x32xf32> to vector<16x8xf32>
    %502 = vector.shape_cast %501 : vector<16x8xf32> to vector<2x8x8xf32>
    %503 = vector.extract_strided_slice %452 {offsets = [0, 16], sizes = [16, 8], strides = [1, 1]} : vector<16x32xf32> to vector<16x8xf32>
    %504 = vector.shape_cast %503 : vector<16x8xf32> to vector<2x8x8xf32>
    %505 = vector.extract_strided_slice %453 {offsets = [0, 16], sizes = [16, 8], strides = [1, 1]} : vector<16x32xf32> to vector<16x8xf32>
    %506 = vector.shape_cast %505 : vector<16x8xf32> to vector<2x8x8xf32>
    "tpu.trace_start"() <{level = 10 : i32, message = "bqd,bkd->bqk"}> : () -> ()
    %cst_201 = arith.constant dense<0.000000e+00> : vector<2x8x8xf32>
    %507 = tpu.matmul %502, %504, %cst_201 {dimension_numbers = #tpu.dot_dimension_numbers<[2], [2], [1], [1], [0, 0, 0, 1, 1, 1], [0], [0]>} : vector<2x8x8xf32>, vector<2x8x8xf32>, vector<2x8x8xf32> -> vector<2x8x8xf32>
    "tpu.trace_stop"() : () -> ()
    %cst_202 = arith.constant dense<0xFF800000> : vector<2x8xf32>
    %508 = vector.multi_reduction <maximumf>, %507, %cst_202 [2] : vector<2x8x8xf32> to vector<2x8xf32>
    %509 = vector.shape_cast %508 : vector<2x8xf32> to vector<2x8x1xf32>
    %510 = vector.broadcast %509 : vector<2x8x1xf32> to vector<2x8x8xf32>
    %511 = arith.subf %507, %510 : vector<2x8x8xf32>
    %512 = math.exp %511 : vector<2x8x8xf32>
    %cst_203 = arith.constant dense<0.000000e+00> : vector<2x8xf32>
    %513 = vector.multi_reduction <add>, %512, %cst_203 [2] : vector<2x8x8xf32> to vector<2x8xf32>
    %514 = vector.shape_cast %513 : vector<2x8xf32> to vector<2x8x1xf32>
    %515 = tpu.reciprocal %514 {approx = true} : vector<2x8x1xf32> -> vector<2x8x1xf32>
    %516 = vector.broadcast %515 : vector<2x8x1xf32> to vector<2x8x8xf32>
    %517 = arith.mulf %512, %516 : vector<2x8x8xf32>
    "tpu.trace_start"() <{level = 10 : i32, message = "bqk,bkd->bqd"}> : () -> ()
    %cst_204 = arith.constant dense<0.000000e+00> : vector<2x8x8xf32>
    %518 = tpu.matmul %517, %506, %cst_204 {dimension_numbers = #tpu.dot_dimension_numbers<[2], [1], [1], [2], [0, 0, 0, 1, 1, 2], [0], [0]>} : vector<2x8x8xf32>, vector<2x8x8xf32>, vector<2x8x8xf32> -> vector<2x8x8xf32>
    "tpu.trace_stop"() : () -> ()
    %519 = vector.shape_cast %518 : vector<2x8x8xf32> to vector<16x8xf32>
    %520 = vector.extract_strided_slice %455 {offsets = [16, 0], sizes = [8, 32], strides = [1, 1]} : vector<32x32xf32> to vector<8x32xf32>
    %cst_205 = arith.constant dense<0.000000e+00> : vector<16x32xf32>
    %521 = tpu.matmul %519, %520, %cst_205 {dimension_numbers = #tpu.dot_dimension_numbers<[1], [0], [0], [1], [0, 0, 1, 1], [], []>} : vector<16x8xf32>, vector<8x32xf32>, vector<16x32xf32> -> vector<16x32xf32>
    %522 = arith.addf %500, %521 : vector<16x32xf32>
    %523 = vector.extract_strided_slice %444 {offsets = [0, 24], sizes = [16, 8], strides = [1, 1]} : vector<16x32xf32> to vector<16x8xf32>
    %524 = vector.shape_cast %523 : vector<16x8xf32> to vector<2x8x8xf32>
    %525 = vector.extract_strided_slice %452 {offsets = [0, 24], sizes = [16, 8], strides = [1, 1]} : vector<16x32xf32> to vector<16x8xf32>
    %526 = vector.shape_cast %525 : vector<16x8xf32> to vector<2x8x8xf32>
    %527 = vector.extract_strided_slice %453 {offsets = [0, 24], sizes = [16, 8], strides = [1, 1]} : vector<16x32xf32> to vector<16x8xf32>
    %528 = vector.shape_cast %527 : vector<16x8xf32> to vector<2x8x8xf32>
    "tpu.trace_start"() <{level = 10 : i32, message = "bqd,bkd->bqk"}> : () -> ()
    %cst_206 = arith.constant dense<0.000000e+00> : vector<2x8x8xf32>
    %529 = tpu.matmul %524, %526, %cst_206 {dimension_numbers = #tpu.dot_dimension_numbers<[2], [2], [1], [1], [0, 0, 0, 1, 1, 1], [0], [0]>} : vector<2x8x8xf32>, vector<2x8x8xf32>, vector<2x8x8xf32> -> vector<2x8x8xf32>
    "tpu.trace_stop"() : () -> ()
    %cst_207 = arith.constant dense<0xFF800000> : vector<2x8xf32>
    %530 = vector.multi_reduction <maximumf>, %529, %cst_207 [2] : vector<2x8x8xf32> to vector<2x8xf32>
    %531 = vector.shape_cast %530 : vector<2x8xf32> to vector<2x8x1xf32>
    %532 = vector.broadcast %531 : vector<2x8x1xf32> to vector<2x8x8xf32>
    %533 = arith.subf %529, %532 : vector<2x8x8xf32>
    %534 = math.exp %533 : vector<2x8x8xf32>
    %cst_208 = arith.constant dense<0.000000e+00> : vector<2x8xf32>
    %535 = vector.multi_reduction <add>, %534, %cst_208 [2] : vector<2x8x8xf32> to vector<2x8xf32>
    %536 = vector.shape_cast %535 : vector<2x8xf32> to vector<2x8x1xf32>
    %537 = tpu.reciprocal %536 {approx = true} : vector<2x8x1xf32> -> vector<2x8x1xf32>
    %538 = vector.broadcast %537 : vector<2x8x1xf32> to vector<2x8x8xf32>
    %539 = arith.mulf %534, %538 : vector<2x8x8xf32>
    "tpu.trace_start"() <{level = 10 : i32, message = "bqk,bkd->bqd"}> : () -> ()
    %cst_209 = arith.constant dense<0.000000e+00> : vector<2x8x8xf32>
    %540 = tpu.matmul %539, %528, %cst_209 {dimension_numbers = #tpu.dot_dimension_numbers<[2], [1], [1], [2], [0, 0, 0, 1, 1, 2], [0], [0]>} : vector<2x8x8xf32>, vector<2x8x8xf32>, vector<2x8x8xf32> -> vector<2x8x8xf32>
    "tpu.trace_stop"() : () -> ()
    %541 = vector.shape_cast %540 : vector<2x8x8xf32> to vector<16x8xf32>
    %542 = vector.extract_strided_slice %455 {offsets = [24, 0], sizes = [8, 32], strides = [1, 1]} : vector<32x32xf32> to vector<8x32xf32>
    %cst_210 = arith.constant dense<0.000000e+00> : vector<16x32xf32>
    %543 = tpu.matmul %541, %542, %cst_210 {dimension_numbers = #tpu.dot_dimension_numbers<[1], [0], [0], [1], [0, 0, 1, 1], [], []>} : vector<16x8xf32>, vector<8x32xf32>, vector<16x32xf32> -> vector<16x32xf32>
    %544 = arith.addf %522, %543 : vector<16x32xf32>
    %545 = vector.broadcast %457 : vector<1x32xf32> to vector<16x32xf32>
    %546 = arith.addf %544, %545 : vector<16x32xf32>
    %547 = arith.addf %546, %437 : vector<16x32xf32>
    %c1_211 = arith.constant 1 : index
    %c0_212 = arith.constant 0 : index
    %c0_213 = arith.constant 0 : index
    %548 = vector.load %arg15[%c1_211, %c0_212, %c0_213] : memref<2x1x32xf32, #tpu.memory_space<vmem>>, vector<1x1x32xf32>
    %549 = vector.shape_cast %548 : vector<1x1x32xf32> to vector<1x32xf32>
    %c1_214 = arith.constant 1 : index
    %c0_215 = arith.constant 0 : index
    %c0_216 = arith.constant 0 : index
    %550 = vector.load %arg16[%c1_214, %c0_215, %c0_216] : memref<2x1x32xf32, #tpu.memory_space<vmem>>, vector<1x1x32xf32>
    %551 = vector.shape_cast %550 : vector<1x1x32xf32> to vector<1x32xf32>
    %cst_217 = arith.constant dense<0.000000e+00> : vector<16xf32>
    %552 = vector.multi_reduction <add>, %547, %cst_217 [1] : vector<16x32xf32> to vector<16xf32>
    %553 = vector.shape_cast %552 : vector<16xf32> to vector<16x1xf32>
    %cst_218 = arith.constant 3.200000e+01 : f32
    %554 = vector.broadcast %cst_218 : f32 to vector<16x1xf32>
    %555 = arith.divf %553, %554 : vector<16x1xf32>
    %556 = vector.broadcast %555 : vector<16x1xf32> to vector<16x32xf32>
    %557 = arith.subf %547, %556 : vector<16x32xf32>
    %558 = arith.mulf %557, %557 : vector<16x32xf32>
    %cst_219 = arith.constant dense<0.000000e+00> : vector<16xf32>
    %559 = vector.multi_reduction <add>, %558, %cst_219 [1] : vector<16x32xf32> to vector<16xf32>
    %560 = vector.shape_cast %559 : vector<16xf32> to vector<16x1xf32>
    %cst_220 = arith.constant 3.200000e+01 : f32
    %561 = vector.broadcast %cst_220 : f32 to vector<16x1xf32>
    %562 = arith.divf %560, %561 : vector<16x1xf32>
    %cst_221 = arith.constant 9.99999974E-6 : f32
    %563 = vector.broadcast %cst_221 : f32 to vector<16x1xf32>
    %564 = arith.addf %562, %563 : vector<16x1xf32>
    %565 = math.rsqrt %564 : vector<16x1xf32>
    %566 = vector.broadcast %565 : vector<16x1xf32> to vector<16x32xf32>
    %567 = arith.mulf %557, %566 : vector<16x32xf32>
    %568 = vector.broadcast %549 : vector<1x32xf32> to vector<16x32xf32>
    %569 = arith.mulf %567, %568 : vector<16x32xf32>
    %570 = vector.broadcast %551 : vector<1x32xf32> to vector<16x32xf32>
    %571 = arith.addf %569, %570 : vector<16x32xf32>
    %c1_222 = arith.constant 1 : index
    %c0_223 = arith.constant 0 : index
    %c0_224 = arith.constant 0 : index
    %572 = vector.load %arg17[%c1_222, %c0_223, %c0_224] : memref<2x32x64xf32, #tpu.memory_space<vmem>>, vector<1x32x64xf32>
    %573 = vector.shape_cast %572 : vector<1x32x64xf32> to vector<32x64xf32>
    %cst_225 = arith.constant dense<0.000000e+00> : vector<16x64xf32>
    %574 = tpu.matmul %571, %573, %cst_225 {dimension_numbers = #tpu.dot_dimension_numbers<[1], [0], [0], [1], [0, 0, 1, 1], [], []>} : vector<16x32xf32>, vector<32x64xf32>, vector<16x64xf32> -> vector<16x64xf32>
    %c1_226 = arith.constant 1 : index
    %c0_227 = arith.constant 0 : index
    %c0_228 = arith.constant 0 : index
    %575 = vector.load %arg18[%c1_226, %c0_227, %c0_228] : memref<2x1x64xf32, #tpu.memory_space<vmem>>, vector<1x1x64xf32>
    %576 = vector.shape_cast %575 : vector<1x1x64xf32> to vector<1x64xf32>
    %577 = vector.broadcast %576 : vector<1x64xf32> to vector<16x64xf32>
    %578 = arith.addf %574, %577 : vector<16x64xf32>
    %cst_229 = arith.constant 0.000000e+00 : f32
    %579 = vector.broadcast %cst_229 : f32 to vector<16x64xf32>
    %580 = arith.maximumf %578, %579 : vector<16x64xf32>
    %c1_230 = arith.constant 1 : index
    %c0_231 = arith.constant 0 : index
    %c0_232 = arith.constant 0 : index
    %581 = vector.load %arg19[%c1_230, %c0_231, %c0_232] : memref<2x64x32xf32, #tpu.memory_space<vmem>>, vector<1x64x32xf32>
    %582 = vector.shape_cast %581 : vector<1x64x32xf32> to vector<64x32xf32>
    %cst_233 = arith.constant dense<0.000000e+00> : vector<16x32xf32>
    %583 = tpu.matmul %580, %582, %cst_233 {dimension_numbers = #tpu.dot_dimension_numbers<[1], [0], [0], [1], [0, 0, 1, 1], [], []>} : vector<16x64xf32>, vector<64x32xf32>, vector<16x32xf32> -> vector<16x32xf32>
    %c1_234 = arith.constant 1 : index
    %c0_235 = arith.constant 0 : index
    %c0_236 = arith.constant 0 : index
    %584 = vector.load %arg20[%c1_234, %c0_235, %c0_236] : memref<2x1x32xf32, #tpu.memory_space<vmem>>, vector<1x1x32xf32>
    %585 = vector.shape_cast %584 : vector<1x1x32xf32> to vector<1x32xf32>
    %586 = vector.broadcast %585 : vector<1x32xf32> to vector<16x32xf32>
    %587 = arith.addf %583, %586 : vector<16x32xf32>
    %588 = arith.addf %587, %571 : vector<16x32xf32>
    %c1_237 = arith.constant 1 : index
    %c0_238 = arith.constant 0 : index
    %c0_239 = arith.constant 0 : index
    %589 = vector.load %arg21[%c1_237, %c0_238, %c0_239] : memref<2x1x32xf32, #tpu.memory_space<vmem>>, vector<1x1x32xf32>
    %590 = vector.shape_cast %589 : vector<1x1x32xf32> to vector<1x32xf32>
    %c1_240 = arith.constant 1 : index
    %c0_241 = arith.constant 0 : index
    %c0_242 = arith.constant 0 : index
    %591 = vector.load %arg22[%c1_240, %c0_241, %c0_242] : memref<2x1x32xf32, #tpu.memory_space<vmem>>, vector<1x1x32xf32>
    %592 = vector.shape_cast %591 : vector<1x1x32xf32> to vector<1x32xf32>
    %cst_243 = arith.constant dense<0.000000e+00> : vector<16xf32>
    %593 = vector.multi_reduction <add>, %588, %cst_243 [1] : vector<16x32xf32> to vector<16xf32>
    %594 = vector.shape_cast %593 : vector<16xf32> to vector<16x1xf32>
    %cst_244 = arith.constant 3.200000e+01 : f32
    %595 = vector.broadcast %cst_244 : f32 to vector<16x1xf32>
    %596 = arith.divf %594, %595 : vector<16x1xf32>
    %597 = vector.broadcast %596 : vector<16x1xf32> to vector<16x32xf32>
    %598 = arith.subf %588, %597 : vector<16x32xf32>
    %599 = arith.mulf %598, %598 : vector<16x32xf32>
    %cst_245 = arith.constant dense<0.000000e+00> : vector<16xf32>
    %600 = vector.multi_reduction <add>, %599, %cst_245 [1] : vector<16x32xf32> to vector<16xf32>
    %601 = vector.shape_cast %600 : vector<16xf32> to vector<16x1xf32>
    %cst_246 = arith.constant 3.200000e+01 : f32
    %602 = vector.broadcast %cst_246 : f32 to vector<16x1xf32>
    %603 = arith.divf %601, %602 : vector<16x1xf32>
    %cst_247 = arith.constant 9.99999974E-6 : f32
    %604 = vector.broadcast %cst_247 : f32 to vector<16x1xf32>
    %605 = arith.addf %603, %604 : vector<16x1xf32>
    %606 = math.rsqrt %605 : vector<16x1xf32>
    %607 = vector.broadcast %606 : vector<16x1xf32> to vector<16x32xf32>
    %608 = arith.mulf %598, %607 : vector<16x32xf32>
    %609 = vector.broadcast %590 : vector<1x32xf32> to vector<16x32xf32>
    %610 = arith.mulf %608, %609 : vector<16x32xf32>
    %611 = vector.broadcast %592 : vector<1x32xf32> to vector<16x32xf32>
    %612 = arith.addf %610, %611 : vector<16x32xf32>
    %c0_248 = arith.constant 0 : index
    %c0_249 = arith.constant 0 : index
    %613 = vector.load %arg23[%c0_248, %c0_249] : memref<32x32xf32, #tpu.memory_space<vmem>>, vector<32x32xf32>
    %cst_250 = arith.constant dense<0.000000e+00> : vector<16x32xf32>
    %614 = tpu.matmul %612, %613, %cst_250 {dimension_numbers = #tpu.dot_dimension_numbers<[1], [0], [0], [1], [0, 0, 1, 1], [], []>} : vector<16x32xf32>, vector<32x32xf32>, vector<16x32xf32> -> vector<16x32xf32>
    %c0_251 = arith.constant 0 : index
    %c0_252 = arith.constant 0 : index
    %615 = vector.load %arg24[%c0_251, %c0_252] : memref<1x32xf32, #tpu.memory_space<vmem>>, vector<1x32xf32>
    %616 = vector.broadcast %615 : vector<1x32xf32> to vector<16x32xf32>
    %617 = arith.addf %614, %616 : vector<16x32xf32>
    %618 = vector.shape_cast %617 : vector<16x32xf32> to vector<2x8x32xf32>
    %c0_253 = arith.constant 0 : index
    %c0_254 = arith.constant 0 : index
    %c0_255 = arith.constant 0 : index
    %619 = vector.load %arg25[%c0_253, %c0_254, %c0_255] : memref<2x8x32xf32, #tpu.memory_space<vmem>>, vector<2x8x32xf32>
    tpu.vector_store %arg25[%c0_253, %c0_254, %c0_255], %618 {strides = array<i32>} : memref<2x8x32xf32, #tpu.memory_space<vmem>>, vector<2x8x32xf32>,
    return
  }
}

</mosaic_0001>

<llo_original>
// kernel: transformer_decoder_forward.1
$region0: #{transformer_decoder_forward.1}
  #allocation0 [shape = 'u32[]', space=smem, size = 0x4, offset = 0x4, fixed_abs, tag = 'smem constant byte address 0x4 - core index']
  #allocation1 [shape = 'u32[72,128]{1,0:T(1,128)}', space=vmem, size = 0x9000, scoped, tag = 'internal scratch']
  %s0 = inlined_call_operand.hbm [shape: f32[2,8,32], index: 0, kind: input, shape index: {}]
  %s1 = inlined_call_operand.hbm [shape: f32[2,8,32], index: 1, kind: input, shape index: {}]
  %s2 = inlined_call_operand.vmem [shape: f32[1,8,32], index: 2, kind: input, shape index: {}]
  %s3 = inlined_call_operand.vmem [shape: f32[2,32,96], index: 3, kind: input, shape index: {}]
  %s4 = inlined_call_operand.hbm [shape: f32[2,1,96], index: 4, kind: input, shape index: {}]
  %s5 = inlined_call_operand.vmem [shape: f32[2,32,32], index: 5, kind: input, shape index: {}]
  %s6 = inlined_call_operand.hbm [shape: f32[2,1,32], index: 6, kind: input, shape index: {}]
  %s7 = inlined_call_operand.hbm [shape: f32[2,1,32], index: 7, kind: input, shape index: {}]
  %s8 = inlined_call_operand.hbm [shape: f32[2,1,32], index: 8, kind: input, shape index: {}]
  %s9 = inlined_call_operand.vmem [shape: f32[2,32,32], index: 9, kind: input, shape index: {}]
  %s10 = inlined_call_operand.hbm [shape: f32[2,1,32], index: 10, kind: input, shape index: {}]
  %s11 = inlined_call_operand.hbm [shape: f32[2,32,64], index: 11, kind: input, shape index: {}]
  %s12 = inlined_call_operand.hbm [shape: f32[2,1,64], index: 12, kind: input, shape index: {}]
  %s13 = inlined_call_operand.hbm [shape: f32[2,32,32], index: 13, kind: input, shape index: {}]
  %s14 = inlined_call_operand.hbm [shape: f32[2,1,32], index: 14, kind: input, shape index: {}]
  %s15 = inlined_call_operand.vmem [shape: f32[2,1,32], index: 15, kind: input, shape index: {}]
  %s16 = inlined_call_operand.hbm [shape: f32[2,1,32], index: 16, kind: input, shape index: {}]
  %s17 = inlined_call_operand.hbm [shape: f32[2,32,64], index: 17, kind: input, shape index: {}]
  %s18 = inlined_call_operand.vmem [shape: f32[2,1,64], index: 18, kind: input, shape index: {}]
  %s19 = inlined_call_operand.vmem [shape: f32[2,64,32], index: 19, kind: input, shape index: {}]
  %s20 = inlined_call_operand.vmem [shape: f32[2,1,32], index: 20, kind: input, shape index: {}]
  %s21 = inlined_call_operand.vmem [shape: f32[2,1,32], index: 21, kind: input, shape index: {}]
  %s22 = inlined_call_operand.hbm [shape: f32[2,1,32], index: 22, kind: input, shape index: {}]
  %s23 = inlined_call_operand.hbm [shape: f32[32,32], index: 23, kind: input, shape index: {}]
  %s24 = inlined_call_operand.hbm [shape: f32[1,32], index: 24, kind: input, shape index: {}]
  %s25 = inlined_call_operand.hbm [shape: f32[2,8,32], index: 25, kind: output, shape index: {}]
  %s26 = sld [smem:[#allocation0]]
  $region174: #{transformer_decoder_forward.1} parent=0
    _
  %s28 = ssub.s32 1, %s26
  %s29 = scalar_select 0, %s28, %s26
  $region1: #{transformer_decoder_forward.1} parent=0
    #allocation2 [shape = 'u8[8192]{0}', space=vmem, size = 0x2000, scoped, tag = 'input window, operand 0, single buffered']
    #allocation3 [shape = 's32[1]{0}', space=sflag, size = 0x4, scoped, tag = 'scoped memory for transformer_decoder_forward.1']
    #allocation4 [shape = 's32[1]{0}', space=sflag, size = 0x4, scoped, tag = 'scoped memory for transformer_decoder_forward.1']
    #allocation5 [shape = 'u8[8192]{0}', space=vmem, size = 0x2000, scoped, tag = 'input window, operand 1, single buffered']
    #allocation6 [shape = 's32[1]{0}', space=sflag, size = 0x4, scoped, tag = 'scoped memory for transformer_decoder_forward.1']
    #allocation7 [shape = 'u8[1024]{0}', space=vmem, size = 0x400, scoped, tag = 'input window, operand 4, single buffered']
    #allocation8 [shape = 'u8[1024]{0}', space=vmem, size = 0x400, scoped, tag = 'input window, operand 6, single buffered']
    #allocation9 [shape = 's32[1]{0}', space=sflag, size = 0x4, scoped, tag = 'scoped memory for transformer_decoder_forward.1']
    #allocation10 [shape = 'u8[1024]{0}', space=vmem, size = 0x400, scoped, tag = 'input window, operand 7, single buffered']
    #allocation11 [shape = 'u8[1024]{0}', space=vmem, size = 0x400, scoped, tag = 'input window, operand 8, single buffered']
    #allocation12 [shape = 's32[1]{0}', space=sflag, size = 0x4, scoped, tag = 'scoped memory for transformer_decoder_forward.1']
    #allocation13 [shape = 'u8[1024]{0}', space=vmem, size = 0x400, scoped, tag = 'input window, operand 10, single buffered']
    #allocation14 [shape = 'u8[32768]{0}', space=vmem, size = 0x8000, scoped, tag = 'input window, operand 11, single buffered']
    #allocation15 [shape = 's32[1]{0}', space=sflag, size = 0x4, scoped, tag = 'scoped memory for transformer_decoder_forward.1']
    #allocation16 [shape = 'u8[1024]{0}', space=vmem, size = 0x400, scoped, tag = 'input window, operand 12, single buffered']
    #allocation17 [shape = 'u8[32768]{0}', space=vmem, size = 0x8000, scoped, tag = 'input window, operand 13, single buffered']
    #allocation18 [shape = 's32[1]{0}', space=sflag, size = 0x4, scoped, tag = 'scoped memory for transformer_decoder_forward.1']
    #allocation19 [shape = 'u8[1024]{0}', space=vmem, size = 0x400, scoped, tag = 'input window, operand 14, single buffered']
    #allocation20 [shape = 'u8[1024]{0}', space=vmem, size = 0x400, scoped, tag = 'input window, operand 16, single buffered']
    #allocation21 [shape = 's32[1]{0}', space=sflag, size = 0x4, scoped, tag = 'scoped memory for transformer_decoder_forward.1']
    #allocation22 [shape = 'u8[32768]{0}', space=vmem, size = 0x8000, scoped, tag = 'input window, operand 17, single buffered']
    #allocation23 [shape = 'u8[1024]{0}', space=vmem, size = 0x400, scoped, tag = 'input window, operand 22, single buffered']
    #allocation24 [shape = 's32[1]{0}', space=sflag, size = 0x4, scoped, tag = 'scoped memory for transformer_decoder_forward.1']
    #allocation25 [shape = 'u8[16384]{0}', space=vmem, size = 0x4000, scoped, tag = 'input window, operand 23, single buffered']
    #allocation26 [shape = 'u8[512]{0}', space=vmem, size = 0x400, scoped, tag = 'input window, operand 24, single buffered']
    #allocation27 [shape = 's32[1]{0}', space=sflag, size = 0x4, scoped, tag = 'scoped memory for transformer_decoder_forward.1']
    #allocation28 [shape = 'u8[8192]{0}', space=vmem, size = 0x2000, scoped, tag = 'output window, operand 0, single buffered']
    %30 = vsyncpa [#allocation3], 0
    %31 = vsyncpa [#allocation6], 0
    %32 = vsyncpa [#allocation9], 0
    %33 = vsyncpa [#allocation12], 0
    %34 = vsyncpa [#allocation15], 0
    %35 = vsyncpa [#allocation18], 0
    %36 = vsyncpa [#allocation21], 0
    %37 = vsyncpa [#allocation24], 0
    %38 = vsyncpa [#allocation27], 0
    %39 = vsyncpa [#allocation4], 0
    // Predicated region
    $region2: #{transformer_decoder_forward.1} parent=1 // pred_check
      _
    $region3: #{transformer_decoder_forward.1} parent=1 // pred_check_branch
      %41 = sbr.rel (0) target = $region5
    $region4: #{transformer_decoder_forward.1} parent=1 // pred_region
      %43 = vsyncadd [#allocation3], 0
      %s44 = sshll.u32 %s0, 4
      %s45 = int_to_ptr.hbm [resolvable:$true] %s44
      %s46 = sshll.u32 [#allocation2], 4
      %s47 = int_to_ptr.vmem [resolvable:$true] %s46
      %52 = dma.hbm_to_vmem [thread:$0]  %s45, 256, %s47, [#allocation3], 128, 128, 8
    $region5: #{transformer_decoder_forward.1} parent=1 // pred_fallthru
      _
    // Predicated region
    $region6: #{transformer_decoder_forward.1} parent=1 // pred_check
      _
    $region7: #{transformer_decoder_forward.1} parent=1 // pred_check_branch
      %54 = sbr.rel (0) target = $region9
    $region8: #{transformer_decoder_forward.1} parent=1 // pred_region
      %56 = vsyncadd [#allocation6], 0
      %s57 = sshll.u32 %s1, 4
      %s58 = int_to_ptr.hbm [resolvable:$true] %s57
      %s59 = sshll.u32 [#allocation5], 4
      %s60 = int_to_ptr.vmem [resolvable:$true] %s59
      %65 = dma.hbm_to_vmem [thread:$0]  %s58, 256, %s60, [#allocation6], 128, 128, 8
    $region9: #{transformer_decoder_forward.1} parent=1 // pred_fallthru
      _
    // Predicated region
    $region10: #{transformer_decoder_forward.1} parent=1 // pred_check
      _
    $region11: #{transformer_decoder_forward.1} parent=1 // pred_check_branch
      %67 = sbr.rel (0) target = $region13
    $region12: #{transformer_decoder_forward.1} parent=1 // pred_region
      _
    $region13: #{transformer_decoder_forward.1} parent=1 // pred_fallthru
      _
    // Predicated region
    $region14: #{transformer_decoder_forward.1} parent=1 // pred_check
      _
    $region15: #{transformer_decoder_forward.1} parent=1 // pred_check_branch
      %69 = sbr.rel (0) target = $region17
    $region16: #{transformer_decoder_forward.1} parent=1 // pred_region
      _
    $region17: #{transformer_decoder_forward.1} parent=1 // pred_fallthru
      _
    // Predicated region
    $region18: #{transformer_decoder_forward.1} parent=1 // pred_check
      _
    $region19: #{transformer_decoder_forward.1} parent=1 // pred_check_branch
      %71 = sbr.rel (0) target = $region21
    $region20: #{transformer_decoder_forward.1} parent=1 // pred_region
      %73 = vsyncadd [#allocation6], 0
      %s74 = sshll.u32 %s4, 4
      %s75 = int_to_ptr.hbm [resolvable:$true] %s74
      %s76 = sshll.u32 [#allocation7], 4
      %s77 = int_to_ptr.vmem [resolvable:$true] %s76
      %82 = dma.hbm_to_vmem [thread:$0]  %s75, 32, %s77, [#allocation6], 16, 16, 1
    $region21: #{transformer_decoder_forward.1} parent=1 // pred_fallthru
      _
    // Predicated region
    $region22: #{transformer_decoder_forward.1} parent=1 // pred_check
      _
    $region23: #{transformer_decoder_forward.1} parent=1 // pred_check_branch
      %84 = sbr.rel (0) target = $region25
    $region24: #{transformer_decoder_forward.1} parent=1 // pred_region
      _
    $region25: #{transformer_decoder_forward.1} parent=1 // pred_fallthru
      _
    // Predicated region
    $region26: #{transformer_decoder_forward.1} parent=1 // pred_check
      _
    $region27: #{transformer_decoder_forward.1} parent=1 // pred_check_branch
      %86 = sbr.rel (0) target = $region29
    $region28: #{transformer_decoder_forward.1} parent=1 // pred_region
      %88 = vsyncadd [#allocation9], 0
      %s89 = sshll.u32 %s6, 4
      %s90 = int_to_ptr.hbm [resolvable:$true] %s89
      %s91 = sshll.u32 [#allocation8], 4
      %s92 = int_to_ptr.vmem [resolvable:$true] %s91
      %97 = dma.hbm_to_vmem [thread:$0]  %s90, 32, %s92, [#allocation9], 16, 16, 1
    $region29: #{transformer_decoder_forward.1} parent=1 // pred_fallthru
      _
    // Predicated region
    $region30: #{transformer_decoder_forward.1} parent=1 // pred_check
      _
    $region31: #{transformer_decoder_forward.1} parent=1 // pred_check_branch
      %99 = sbr.rel (0) target = $region33
    $region32: #{transformer_decoder_forward.1} parent=1 // pred_region
      %101 = vsyncadd [#allocation9], 0
      %s102 = sshll.u32 %s7, 4
      %s103 = int_to_ptr.hbm [resolvable:$true] %s102
      %s104 = sshll.u32 [#allocation10], 4
      %s105 = int_to_ptr.vmem [resolvable:$true] %s104
      %110 = dma.hbm_to_vmem [thread:$0]  %s103, 32, %s105, [#allocation9], 16, 16, 1
    $region33: #{transformer_decoder_forward.1} parent=1 // pred_fallthru
      _
    // Predicated region
    $region34: #{transformer_decoder_forward.1} parent=1 // pred_check
      _
    $region35: #{transformer_decoder_forward.1} parent=1 // pred_check_branch
      %112 = sbr.rel (0) target = $region37
    $region36: #{transformer_decoder_forward.1} parent=1 // pred_region
      %114 = vsyncadd [#allocation12], 0
      %s115 = sshll.u32 %s8, 4
      %s116 = int_to_ptr.hbm [resolvable:$true] %s115
      %s117 = sshll.u32 [#allocation11], 4
      %s118 = int_to_ptr.vmem [resolvable:$true] %s117
      %123 = dma.hbm_to_vmem [thread:$0]  %s116, 32, %s118, [#allocation12], 16, 16, 1
    $region37: #{transformer_decoder_forward.1} parent=1 // pred_fallthru
      _
    // Predicated region
    $region38: #{transformer_decoder_forward.1} parent=1 // pred_check
      _
    $region39: #{transformer_decoder_forward.1} parent=1 // pred_check_branch
      %125 = sbr.rel (0) target = $region41
    $region40: #{transformer_decoder_forward.1} parent=1 // pred_region
      _
    $region41: #{transformer_decoder_forward.1} parent=1 // pred_fallthru
      _
    // Predicated region
    $region42: #{transformer_decoder_forward.1} parent=1 // pred_check
      _
    $region43: #{transformer_decoder_forward.1} parent=1 // pred_check_branch
      %127 = sbr.rel (0) target = $region45
    $region44: #{transformer_decoder_forward.1} parent=1 // pred_region
      %129 = vsyncadd [#allocation12], 0
      %s130 = sshll.u32 %s10, 4
      %s131 = int_to_ptr.hbm [resolvable:$true] %s130
      %s132 = sshll.u32 [#allocation13], 4
      %s133 = int_to_ptr.vmem [resolvable:$true] %s132
      %138 = dma.hbm_to_vmem [thread:$0]  %s131, 32, %s133, [#allocation12], 16, 16, 1
    $region45: #{transformer_decoder_forward.1} parent=1 // pred_fallthru
      _
    // Predicated region
    $region46: #{transformer_decoder_forward.1} parent=1 // pred_check
      _
    $region47: #{transformer_decoder_forward.1} parent=1 // pred_check_branch
      %140 = sbr.rel (0) target = $region49
    $region48: #{transformer_decoder_forward.1} parent=1 // pred_region
      %142 = vsyncadd [#allocation15], 0
      %s143 = sshll.u32 %s11, 4
      %s144 = int_to_ptr.hbm [resolvable:$true] %s143
      %s145 = sshll.u32 [#allocation14], 4
      %s146 = int_to_ptr.vmem [resolvable:$true] %s145
      %151 = dma.hbm_to_vmem [thread:$0]  %s144, 1024, %s146, [#allocation15], 128, 128, 8
    $region49: #{transformer_decoder_forward.1} parent=1 // pred_fallthru
      _
    // Predicated region
    $region50: #{transformer_decoder_forward.1} parent=1 // pred_check
      _
    $region51: #{transformer_decoder_forward.1} parent=1 // pred_check_branch
      %153 = sbr.rel (0) target = $region53
    $region52: #{transformer_decoder_forward.1} parent=1 // pred_region
      %155 = vsyncadd [#allocation15], 0
      %s156 = sshll.u32 %s12, 4
      %s157 = int_to_ptr.hbm [resolvable:$true] %s156
      %s158 = sshll.u32 [#allocation16], 4
      %s159 = int_to_ptr.vmem [resolvable:$true] %s158
      %164 = dma.hbm_to_vmem [thread:$0]  %s157, 32, %s159, [#allocation15], 16, 16, 1
    $region53: #{transformer_decoder_forward.1} parent=1 // pred_fallthru
      _
    // Predicated region
    $region54: #{transformer_decoder_forward.1} parent=1 // pred_check
      _
    $region55: #{transformer_decoder_forward.1} parent=1 // pred_check_branch
      %166 = sbr.rel (0) target = $region57
    $region56: #{transformer_decoder_forward.1} parent=1 // pred_region
      %168 = vsyncadd [#allocation18], 0
      %s169 = sshll.u32 %s13, 4
      %s170 = int_to_ptr.hbm [resolvable:$true] %s169
      %s171 = sshll.u32 [#allocation17], 4
      %s172 = int_to_ptr.vmem [resolvable:$true] %s171
      %177 = dma.hbm_to_vmem [thread:$0]  %s170, 1024, %s172, [#allocation18], 128, 128, 8
    $region57: #{transformer_decoder_forward.1} parent=1 // pred_fallthru
      _
    // Predicated region
    $region58: #{transformer_decoder_forward.1} parent=1 // pred_check
      _
    $region59: #{transformer_decoder_forward.1} parent=1 // pred_check_branch
      %179 = sbr.rel (0) target = $region61
    $region60: #{transformer_decoder_forward.1} parent=1 // pred_region
      %181 = vsyncadd [#allocation18], 0
      %s182 = sshll.u32 %s14, 4
      %s183 = int_to_ptr.hbm [resolvable:$true] %s182
      %s184 = sshll.u32 [#allocation19], 4
      %s185 = int_to_ptr.vmem [resolvable:$true] %s184
      %190 = dma.hbm_to_vmem [thread:$0]  %s183, 32, %s185, [#allocation18], 16, 16, 1
    $region61: #{transformer_decoder_forward.1} parent=1 // pred_fallthru
      _
    // Predicated region
    $region62: #{transformer_decoder_forward.1} parent=1 // pred_check
      _
    $region63: #{transformer_decoder_forward.1} parent=1 // pred_check_branch
      %192 = sbr.rel (0) target = $region65
    $region64: #{transformer_decoder_forward.1} parent=1 // pred_region
      _
    $region65: #{transformer_decoder_forward.1} parent=1 // pred_fallthru
      _
    // Predicated region
    $region66: #{transformer_decoder_forward.1} parent=1 // pred_check
      _
    $region67: #{transformer_decoder_forward.1} parent=1 // pred_check_branch
      %194 = sbr.rel (0) target = $region69
    $region68: #{transformer_decoder_forward.1} parent=1 // pred_region
      %196 = vsyncadd [#allocation21], 0
      %s197 = sshll.u32 %s16, 4
      %s198 = int_to_ptr.hbm [resolvable:$true] %s197
      %s199 = sshll.u32 [#allocation20], 4
      %s200 = int_to_ptr.vmem [resolvable:$true] %s199
      %205 = dma.hbm_to_vmem [thread:$0]  %s198, 32, %s200, [#allocation21], 16, 16, 1
    $region69: #{transformer_decoder_forward.1} parent=1 // pred_fallthru
      _
    // Predicated region
    $region70: #{transformer_decoder_forward.1} parent=1 // pred_check
      _
    $region71: #{transformer_decoder_forward.1} parent=1 // pred_check_branch
      %207 = sbr.rel (0) target = $region73
    $region72: #{transformer_decoder_forward.1} parent=1 // pred_region
      %209 = vsyncadd [#allocation21], 0
      %s210 = sshll.u32 %s17, 4
      %s211 = int_to_ptr.hbm [resolvable:$true] %s210
      %s212 = sshll.u32 [#allocation22], 4
      %s213 = int_to_ptr.vmem [resolvable:$true] %s212
      %218 = dma.hbm_to_vmem [thread:$0]  %s211, 1024, %s213, [#allocation21], 128, 128, 8
    $region73: #{transformer_decoder_forward.1} parent=1 // pred_fallthru
      _
    // Predicated region
    $region74: #{transformer_decoder_forward.1} parent=1 // pred_check
      _
    $region75: #{transformer_decoder_forward.1} parent=1 // pred_check_branch
      %220 = sbr.rel (0) target = $region77
    $region76: #{transformer_decoder_forward.1} parent=1 // pred_region
      _
    $region77: #{transformer_decoder_forward.1} parent=1 // pred_fallthru
      _
    // Predicated region
    $region78: #{transformer_decoder_forward.1} parent=1 // pred_check
      _
    $region79: #{transformer_decoder_forward.1} parent=1 // pred_check_branch
      %222 = sbr.rel (0) target = $region81
    $region80: #{transformer_decoder_forward.1} parent=1 // pred_region
      _
    $region81: #{transformer_decoder_forward.1} parent=1 // pred_fallthru
      _
    // Predicated region
    $region82: #{transformer_decoder_forward.1} parent=1 // pred_check
      _
    $region83: #{transformer_decoder_forward.1} parent=1 // pred_check_branch
      %224 = sbr.rel (0) target = $region85
    $region84: #{transformer_decoder_forward.1} parent=1 // pred_region
      _
    $region85: #{transformer_decoder_forward.1} parent=1 // pred_fallthru
      _
    // Predicated region
    $region86: #{transformer_decoder_forward.1} parent=1 // pred_check
      _
    $region87: #{transformer_decoder_forward.1} parent=1 // pred_check_branch
      %226 = sbr.rel (0) target = $region89
    $region88: #{transformer_decoder_forward.1} parent=1 // pred_region
      _
    $region89: #{transformer_decoder_forward.1} parent=1 // pred_fallthru
      _
    // Predicated region
    $region90: #{transformer_decoder_forward.1} parent=1 // pred_check
      _
    $region91: #{transformer_decoder_forward.1} parent=1 // pred_check_branch
      %228 = sbr.rel (0) target = $region93
    $region92: #{transformer_decoder_forward.1} parent=1 // pred_region
      %230 = vsyncadd [#allocation24], 0
      %s231 = sshll.u32 %s22, 4
      %s232 = int_to_ptr.hbm [resolvable:$true] %s231
      %s233 = sshll.u32 [#allocation23], 4
      %s234 = int_to_ptr.vmem [resolvable:$true] %s233
      %239 = dma.hbm_to_vmem [thread:$0]  %s232, 32, %s234, [#allocation24], 16, 16, 1
    $region93: #{transformer_decoder_forward.1} parent=1 // pred_fallthru
      _
    // Predicated region
    $region94: #{transformer_decoder_forward.1} parent=1 // pred_check
      _
    $region95: #{transformer_decoder_forward.1} parent=1 // pred_check_branch
      %241 = sbr.rel (0) target = $region97
    $region96: #{transformer_decoder_forward.1} parent=1 // pred_region
      %243 = vsyncadd [#allocation24], 0
      %s244 = sshll.u32 %s23, 4
      %s245 = int_to_ptr.hbm [resolvable:$true] %s244
      %s246 = sshll.u32 [#allocation25], 4
      %s247 = int_to_ptr.vmem [resolvable:$true] %s246
      %252 = dma.hbm_to_vmem [thread:$0]  %s245, 512, %s247, [#allocation24], 128, 128, 8
    $region97: #{transformer_decoder_forward.1} parent=1 // pred_fallthru
      _
    // Predicated region
    $region98: #{transformer_decoder_forward.1} parent=1 // pred_check
      _
    $region99: #{transformer_decoder_forward.1} parent=1 // pred_check_branch
      %254 = sbr.rel (0) target = $region101
    $region100: #{transformer_decoder_forward.1} parent=1 // pred_region
      %256 = vsyncadd [#allocation27], 0
      %s258 = sshll.u32 %s24, 4
      %s259 = int_to_ptr.hbm [resolvable:$true] %s258
      %s260 = sshll.u32 [#allocation26], 4
      %s261 = int_to_ptr.vmem [resolvable:$true] %s260
      %263 = dma.hbm_to_vmem [thread:$0]  %s259, 16, %s261, [#allocation27]
    $region101: #{transformer_decoder_forward.1} parent=1 // pred_fallthru
      _
    // Predicated region
    $region102: #{transformer_decoder_forward.1} parent=1 // pred_check
      _
    $region103: #{transformer_decoder_forward.1} parent=1 // pred_check_branch
      %265 = sbr.rel (0) target = $region105
    $region104: #{transformer_decoder_forward.1} parent=1 // pred_region
      %267 = dma.done [#allocation3], 256
    $region105: #{transformer_decoder_forward.1} parent=1 // pred_fallthru
      _
    // Predicated region
    $region106: #{transformer_decoder_forward.1} parent=1 // pred_check
      _
    $region107: #{transformer_decoder_forward.1} parent=1 // pred_check_branch
      %269 = sbr.rel (0) target = $region109
    $region108: #{transformer_decoder_forward.1} parent=1 // pred_region
      %271 = dma.done [#allocation6], 256
    $region109: #{transformer_decoder_forward.1} parent=1 // pred_fallthru
      _
    // Predicated region
    $region110: #{transformer_decoder_forward.1} parent=1 // pred_check
      _
    $region111: #{transformer_decoder_forward.1} parent=1 // pred_check_branch
      %273 = sbr.rel (0) target = $region113
    $region112: #{transformer_decoder_forward.1} parent=1 // pred_region
      %275 = dma.done [#allocation6], 32
    $region113: #{transformer_decoder_forward.1} parent=1 // pred_fallthru
      _
    // Predicated region
    $region114: #{transformer_decoder_forward.1} parent=1 // pred_check
      _
    $region115: #{transformer_decoder_forward.1} parent=1 // pred_check_branch
      %277 = sbr.rel (0) target = $region117
    $region116: #{transformer_decoder_forward.1} parent=1 // pred_region
      %279 = dma.done [#allocation9], 32
    $region117: #{transformer_decoder_forward.1} parent=1 // pred_fallthru
      _
    // Predicated region
    $region118: #{transformer_decoder_forward.1} parent=1 // pred_check
      _
    $region119: #{transformer_decoder_forward.1} parent=1 // pred_check_branch
      %281 = sbr.rel (0) target = $region121
    $region120: #{transformer_decoder_forward.1} parent=1 // pred_region
      %283 = dma.done [#allocation9], 32
    $region121: #{transformer_decoder_forward.1} parent=1 // pred_fallthru
      _
    // Predicated region
    $region122: #{transformer_decoder_forward.1} parent=1 // pred_check
      _
    $region123: #{transformer_decoder_forward.1} parent=1 // pred_check_branch
      %285 = sbr.rel (0) target = $region125
    $region124: #{transformer_decoder_forward.1} parent=1 // pred_region
      %287 = dma.done [#allocation12], 32
    $region125: #{transformer_decoder_forward.1} parent=1 // pred_fallthru
      _
    // Predicated region
    $region126: #{transformer_decoder_forward.1} parent=1 // pred_check
      _
    $region127: #{transformer_decoder_forward.1} parent=1 // pred_check_branch
      %289 = sbr.rel (0) target = $region129
    $region128: #{transformer_decoder_forward.1} parent=1 // pred_region
      %291 = dma.done [#allocation12], 32
    $region129: #{transformer_decoder_forward.1} parent=1 // pred_fallthru
      _
    // Predicated region
    $region130: #{transformer_decoder_forward.1} parent=1 // pred_check
      _
    $region131: #{transformer_decoder_forward.1} parent=1 // pred_check_branch
      %293 = sbr.rel (0) target = $region133
    $region132: #{transformer_decoder_forward.1} parent=1 // pred_region
      %295 = dma.done [#allocation15], 1024
    $region133: #{transformer_decoder_forward.1} parent=1 // pred_fallthru
      _
    // Predicated region
    $region134: #{transformer_decoder_forward.1} parent=1 // pred_check
      _
    $region135: #{transformer_decoder_forward.1} parent=1 // pred_check_branch
      %297 = sbr.rel (0) target = $region137
    $region136: #{transformer_decoder_forward.1} parent=1 // pred_region
      %299 = dma.done [#allocation15], 32
    $region137: #{transformer_decoder_forward.1} parent=1 // pred_fallthru
      _
    // Predicated region
    $region138: #{transformer_decoder_forward.1} parent=1 // pred_check
      _
    $region139: #{transformer_decoder_forward.1} parent=1 // pred_check_branch
      %301 = sbr.rel (0) target = $region141
    $region140: #{transformer_decoder_forward.1} parent=1 // pred_region
      %303 = dma.done [#allocation18], 1024
    $region141: #{transformer_decoder_forward.1} parent=1 // pred_fallthru
      _
    // Predicated region
    $region142: #{transformer_decoder_forward.1} parent=1 // pred_check
      _
    $region143: #{transformer_decoder_forward.1} parent=1 // pred_check_branch
      %305 = sbr.rel (0) target = $region145
    $region144: #{transformer_decoder_forward.1} parent=1 // pred_region
      %307 = dma.done [#allocation18], 32
    $region145: #{transformer_decoder_forward.1} parent=1 // pred_fallthru
      _
    // Predicated region
    $region146: #{transformer_decoder_forward.1} parent=1 // pred_check
      _
    $region147: #{transformer_decoder_forward.1} parent=1 // pred_check_branch
      %309 = sbr.rel (0) target = $region149
    $region148: #{transformer_decoder_forward.1} parent=1 // pred_region
      %311 = dma.done [#allocation21], 32
    $region149: #{transformer_decoder_forward.1} parent=1 // pred_fallthru
      _
    // Predicated region
    $region150: #{transformer_decoder_forward.1} parent=1 // pred_check
      _
    $region151: #{transformer_decoder_forward.1} parent=1 // pred_check_branch
      %313 = sbr.rel (0) target = $region153
    $region152: #{transformer_decoder_forward.1} parent=1 // pred_region
      %315 = dma.done [#allocation21], 1024
    $region153: #{transformer_decoder_forward.1} parent=1 // pred_fallthru
      _
    // Predicated region
    $region154: #{transformer_decoder_forward.1} parent=1 // pred_check
      _
    $region155: #{transformer_decoder_forward.1} parent=1 // pred_check_branch
      %317 = sbr.rel (0) target = $region157
    $region156: #{transformer_decoder_forward.1} parent=1 // pred_region
      %319 = dma.done [#allocation24], 32
    $region157: #{transformer_decoder_forward.1} parent=1 // pred_fallthru
      _
    // Predicated region
    $region158: #{transformer_decoder_forward.1} parent=1 // pred_check
      _
    $region159: #{transformer_decoder_forward.1} parent=1 // pred_check_branch
      %321 = sbr.rel (0) target = $region161
    $region160: #{transformer_decoder_forward.1} parent=1 // pred_region
      %323 = dma.done [#allocation24], 512
    $region161: #{transformer_decoder_forward.1} parent=1 // pred_fallthru
      _
    // Predicated region
    $region162: #{transformer_decoder_forward.1} parent=1 // pred_check
      _
    $region163: #{transformer_decoder_forward.1} parent=1 // pred_check_branch
      %325 = sbr.rel (0) target = $region165
    $region164: #{transformer_decoder_forward.1} parent=1 // pred_region
      %327 = dma.done [#allocation27], 16
    $region165: #{transformer_decoder_forward.1} parent=1 // pred_fallthru
      _
    %v328 = vld [vmem:[#allocation2] sm:$0xff]
    %v329 = vld [vmem:[#allocation2 + $0x8] sm:$0xff]
    %v330 = vld [vmem:[%s2] sm:$0xff]
    %v331 = vadd.f32 %v328, %v330
    %v332 = vadd.f32 %v329, %v330
    %v333 = vld [vmem:[#allocation5] sm:$0xff]
    %v334 = vld [vmem:[#allocation5 + $0x8] sm:$0xff]
    %v335 = vld [vmem:[%s3] sm:$0xff]
    %v336 = vld [vmem:[%s3 + $0x8] sm:$0xff]
    %v337 = vld [vmem:[%s3 + $0x10] sm:$0xff]
    %v338 = vld [vmem:[%s3 + $0x18] sm:$0xff]
    %v339 = vld [vmem:[#allocation7] sm:$0x1]
    %v341 = vperm.slane %v339, 0
    %vm343 = vcmask 261120
    %v345 = vsel %vm343, %v331, 0
    %v348 = vsel %vm343, %v332, 0
    %350 = vmatpush.msra.mxu0 0.0
    %351 = vmatpush.msra.mxu0 0.0
    %352 = vmatpush.msra.mxu0 0.0
    %353 = vmatpush.msra.mxu0 0.0
    %354 = vmatpush.msra.mxu0 0.0
    %355 = vmatpush.msra.mxu0 0.0
    %356 = vmatpush.msra.mxu0 0.0
    %357 = vmatpush.msra.mxu0 0.0
    %358 = vmatpush.msra.mxu0 0.0
    %359 = vmatpush.msra.mxu0 0.0
    %360 = vmatpush.msra.mxu0 0.0
    %361 = vmatpush.msra.mxu0 0.0
    %362 = vmatpush.msra.mxu0 %v338
    %363 = vmatpush.msra.mxu0 %v337
    %364 = vmatpush.msra.mxu0 %v336
    %365 = vmatpush.msra.mxu0 %v335
    %366 = vmatmul.f32.gmra.mxu0 %v345
    %v367 = vpop.f32.mrf.mxu0
    %v368 = vadd.f32 %v341, %v367
    %369 = vmatmul.f32.gmra.mxu0 %v348
    %v370 = vpop.f32.mrf.mxu0
    %v371 = vadd.f32 %v341, %v370
    %372 = vdwg.mxu0
    %v373 = vld [vmem:[%s5] sm:$0xff]
    %v374 = vld [vmem:[%s5 + $0x8] sm:$0xff]
    %v375 = vld [vmem:[%s5 + $0x10] sm:$0xff]
    %v376 = vld [vmem:[%s5 + $0x18] sm:$0xff]
    %v377 = vld [vmem:[#allocation8] sm:$0x1]
    %379 = vrot.lane.b32.xlu0 %v368, 96
    %v380 = vpop.permute.xlu0 %379
    %vm381 = vcmask 64512
    %v382 = vsel %vm381, %v368, 0
    %v384 = vsel %vm381, %v380, 0
    %386 = vmatpush.xpose.msra.mxu0 0.0
    %387 = vmatpush.xpose.msra.mxu0 0.0
    %388 = vmatpush.xpose.msra.mxu0 0.0
    %389 = vmatpush.xpose.msra.mxu0 0.0
    %390 = vmatpush.xpose.msra.mxu0 0.0
    %391 = vmatpush.xpose.msra.mxu0 0.0
    %392 = vmatpush.xpose.msra.mxu0 0.0
    %393 = vmatpush.xpose.msra.mxu0 0.0
    %394 = vmatpush.xpose.msra.mxu0 0.0
    %395 = vmatpush.xpose.msra.mxu0 0.0
    %396 = vmatpush.xpose.msra.mxu0 0.0
    %397 = vmatpush.xpose.msra.mxu0 0.0
    %398 = vmatpush.xpose.msra.mxu0 0.0
    %399 = vmatpush.xpose.msra.mxu0 0.0
    %400 = vmatpush.xpose.msra.mxu0 0.0
    %401 = vmatpush.xpose.msra.mxu0 %v384
    %402 = vmatmul.f32.gmra.mxu0 %v382
    %v403 = vpop.f32.mrf.mxu0
    %v404 = vadd.f32 0.0, %v403
    %405 = vdwg.mxu0
    %407 = vrot.lane.b32.xlu0 %v371, 96
    %v408 = vpop.permute.xlu0 %407
    %v409 = vsel %vm381, %v371, 0
    %v411 = vsel %vm381, %v408, 0
    %413 = vmatpush.xpose.msra.mxu0 0.0
    %414 = vmatpush.xpose.msra.mxu0 0.0
    %415 = vmatpush.xpose.msra.mxu0 0.0
    %416 = vmatpush.xpose.msra.mxu0 0.0
    %417 = vmatpush.xpose.msra.mxu0 0.0
    %418 = vmatpush.xpose.msra.mxu0 0.0
    %419 = vmatpush.xpose.msra.mxu0 0.0
    %420 = vmatpush.xpose.msra.mxu0 0.0
    %421 = vmatpush.xpose.msra.mxu0 0.0
    %422 = vmatpush.xpose.msra.mxu0 0.0
    %423 = vmatpush.xpose.msra.mxu0 0.0
    %424 = vmatpush.xpose.msra.mxu0 0.0
    %425 = vmatpush.xpose.msra.mxu0 0.0
    %426 = vmatpush.xpose.msra.mxu0 0.0
    %427 = vmatpush.xpose.msra.mxu0 0.0
    %428 = vmatpush.xpose.msra.mxu0 %v411
    %429 = vmatmul.f32.gmra.mxu0 %v409
    %v430 = vpop.f32.mrf.mxu0
    %v431 = vadd.f32 0.0, %v430
    %432 = vdwg.mxu0
    %v433 = vsel %vm381, %v404, -inf
    %434 = vmax.xlane.f32.xlu0 %v433
    %v435 = vpop.xlane.xlu0 %434
    %v436 = vsel %vm381, %v431, -inf
    %437 = vmax.xlane.f32.xlu0 %v436
    %v438 = vpop.xlane.xlu0 %437
    %v439 = vsub.f32 %v404, %v435
    %v440 = vsub.f32 %v431, %v438
    %v441 = vmul.f32 %v439, 1.442695
    %v442 = vpow.pop %v441
    %v443 = vmul.f32 %v440, 1.442695
    %v444 = vpow.pop %v443
    %v445 = vsel %vm381, %v442, 0.0
    %446 = vadd.xlane.f32.xlu0 %v445
    %v447 = vpop.xlane.xlu0 %446
    %v448 = vsel %vm381, %v444, 0.0
    %449 = vadd.xlane.f32.xlu0 %v448
    %v450 = vpop.xlane.xlu0 %449
    %v451 = vrcp.pop %v447
    %v452 = vrcp.pop %v450
    %v453 = vmul.f32 %v442, %v451
    %v454 = vmul.f32 %v444, %v452
    %455 = vrot.lane.b32.xlu0 %v368, 64
    %v456 = vpop.permute.xlu0 %455
    %v459 = vsel %vm381, %v453, 0
    %461 = vmatpush.msra.mxu0 0.0
    %462 = vmatpush.msra.mxu0 0.0
    %463 = vmatpush.msra.mxu0 0.0
    %464 = vmatpush.msra.mxu0 0.0
    %465 = vmatpush.msra.mxu0 0.0
    %466 = vmatpush.msra.mxu0 0.0
    %467 = vmatpush.msra.mxu0 0.0
    %468 = vmatpush.msra.mxu0 0.0
    %469 = vmatpush.msra.mxu0 0.0
    %470 = vmatpush.msra.mxu0 0.0
    %471 = vmatpush.msra.mxu0 0.0
    %472 = vmatpush.msra.mxu0 0.0
    %473 = vmatpush.msra.mxu0 0.0
    %474 = vmatpush.msra.mxu0 0.0
    %475 = vmatpush.msra.mxu0 0.0
    %476 = vmatpush.msra.mxu0 %v456
    %477 = vmatmul.f32.gmra.mxu0 %v459
    %v478 = vpop.f32.mrf.mxu0
    %v479 = vadd.f32 0.0, %v478
    %480 = vdwg.mxu0
    %481 = vrot.lane.b32.xlu0 %v371, 64
    %v482 = vpop.permute.xlu0 %481
    %v485 = vsel %vm381, %v454, 0
    %487 = vmatpush.msra.mxu0 0.0
    %488 = vmatpush.msra.mxu0 0.0
    %489 = vmatpush.msra.mxu0 0.0
    %490 = vmatpush.msra.mxu0 0.0
    %491 = vmatpush.msra.mxu0 0.0
    %492 = vmatpush.msra.mxu0 0.0
    %493 = vmatpush.msra.mxu0 0.0
    %494 = vmatpush.msra.mxu0 0.0
    %495 = vmatpush.msra.mxu0 0.0
    %496 = vmatpush.msra.mxu0 0.0
    %497 = vmatpush.msra.mxu0 0.0
    %498 = vmatpush.msra.mxu0 0.0
    %499 = vmatpush.msra.mxu0 0.0
    %500 = vmatpush.msra.mxu0 0.0
    %501 = vmatpush.msra.mxu0 0.0
    %502 = vmatpush.msra.mxu0 %v482
    %503 = vmatmul.f32.gmra.mxu0 %v485
    %v504 = vpop.f32.mrf.mxu0
    %v505 = vadd.f32 0.0, %v504
    %506 = vdwg.mxu0
    %507 = vrot.lane.b32.xlu0 %v368, 120
    %v508 = vpop.permute.xlu0 %507
    %509 = vrot.lane.b32.xlu0 %v368, 88
    %v510 = vpop.permute.xlu0 %509
    %v511 = vsel %vm381, %v508, 0
    %v513 = vsel %vm381, %v510, 0
    %515 = vmatpush.xpose.msra.mxu0 0.0
    %516 = vmatpush.xpose.msra.mxu0 0.0
    %517 = vmatpush.xpose.msra.mxu0 0.0
    %518 = vmatpush.xpose.msra.mxu0 0.0
    %519 = vmatpush.xpose.msra.mxu0 0.0
    %520 = vmatpush.xpose.msra.mxu0 0.0
    %521 = vmatpush.xpose.msra.mxu0 0.0
    %522 = vmatpush.xpose.msra.mxu0 0.0
    %523 = vmatpush.xpose.msra.mxu0 0.0
    %524 = vmatpush.xpose.msra.mxu0 0.0
    %525 = vmatpush.xpose.msra.mxu0 0.0
    %526 = vmatpush.xpose.msra.mxu0 0.0
    %527 = vmatpush.xpose.msra.mxu0 0.0
    %528 = vmatpush.xpose.msra.mxu0 0.0
    %529 = vmatpush.xpose.msra.mxu0 0.0
    %530 = vmatpush.xpose.msra.mxu0 %v513
    %531 = vmatmul.f32.gmra.mxu0 %v511
    %v532 = vpop.f32.mrf.mxu0
    %v533 = vadd.f32 0.0, %v532
    %534 = vdwg.mxu0
    %535 = vrot.lane.b32.xlu0 %v371, 120
    %v536 = vpop.permute.xlu0 %535
    %537 = vrot.lane.b32.xlu0 %v371, 88
    %v538 = vpop.permute.xlu0 %537
    %v539 = vsel %vm381, %v536, 0
    %v541 = vsel %vm381, %v538, 0
    %543 = vmatpush.xpose.msra.mxu0 0.0
    %544 = vmatpush.xpose.msra.mxu0 0.0
    %545 = vmatpush.xpose.msra.mxu0 0.0
    %546 = vmatpush.xpose.msra.mxu0 0.0
    %547 = vmatpush.xpose.msra.mxu0 0.0
    %548 = vmatpush.xpose.msra.mxu0 0.0
    %549 = vmatpush.xpose.msra.mxu0 0.0
    %550 = vmatpush.xpose.msra.mxu0 0.0
    %551 = vmatpush.xpose.msra.mxu0 0.0
    %552 = vmatpush.xpose.msra.mxu0 0.0
    %553 = vmatpush.xpose.msra.mxu0 0.0
    %554 = vmatpush.xpose.msra.mxu0 0.0
    %555 = vmatpush.xpose.msra.mxu0 0.0
    %556 = vmatpush.xpose.msra.mxu0 0.0
    %557 = vmatpush.xpose.msra.mxu0 0.0
    %558 = vmatpush.xpose.msra.mxu0 %v541
    %559 = vmatmul.f32.gmra.mxu0 %v539
    %v560 = vpop.f32.mrf.mxu0
    %v561 = vadd.f32 0.0, %v560
    %562 = vdwg.mxu0
    %v563 = vsel %vm381, %v533, -inf
    %564 = vmax.xlane.f32.xlu0 %v563
    %v565 = vpop.xlane.xlu0 %564
    %v566 = vsel %vm381, %v561, -inf
    %567 = vmax.xlane.f32.xlu0 %v566
    %v568 = vpop.xlane.xlu0 %567
    %v569 = vsub.f32 %v533, %v565
    %v570 = vsub.f32 %v561, %v568
    %v571 = vmul.f32 %v569, 1.442695
    %v572 = vpow.pop %v571
    %v573 = vmul.f32 %v570, 1.442695
    %v574 = vpow.pop %v573
    %v575 = vsel %vm381, %v572, 0.0
    %576 = vadd.xlane.f32.xlu0 %v575
    %v577 = vpop.xlane.xlu0 %576
    %v578 = vsel %vm381, %v574, 0.0
    %579 = vadd.xlane.f32.xlu0 %v578
    %v580 = vpop.xlane.xlu0 %579
    %v581 = vrcp.pop %v577
    %v582 = vrcp.pop %v580
    %v583 = vmul.f32 %v572, %v581
    %v584 = vmul.f32 %v574, %v582
    %585 = vrot.lane.b32.xlu0 %v368, 56
    %v586 = vpop.permute.xlu0 %585
    %v589 = vsel %vm381, %v583, 0
    %591 = vmatpush.msra.mxu0 0.0
    %592 = vmatpush.msra.mxu0 0.0
    %593 = vmatpush.msra.mxu0 0.0
    %594 = vmatpush.msra.mxu0 0.0
    %595 = vmatpush.msra.mxu0 0.0
    %596 = vmatpush.msra.mxu0 0.0
    %597 = vmatpush.msra.mxu0 0.0
    %598 = vmatpush.msra.mxu0 0.0
    %599 = vmatpush.msra.mxu0 0.0
    %600 = vmatpush.msra.mxu0 0.0
    %601 = vmatpush.msra.mxu0 0.0
    %602 = vmatpush.msra.mxu0 0.0
    %603 = vmatpush.msra.mxu0 0.0
    %604 = vmatpush.msra.mxu0 0.0
    %605 = vmatpush.msra.mxu0 0.0
    %606 = vmatpush.msra.mxu0 %v586
    %607 = vmatmul.f32.gmra.mxu0 %v589
    %v608 = vpop.f32.mrf.mxu0
    %v609 = vadd.f32 0.0, %v608
    %610 = vdwg.mxu0
    %611 = vrot.lane.b32.xlu0 %v371, 56
    %v612 = vpop.permute.xlu0 %611
    %v615 = vsel %vm381, %v584, 0
    %617 = vmatpush.msra.mxu0 0.0
    %618 = vmatpush.msra.mxu0 0.0
    %619 = vmatpush.msra.mxu0 0.0
    %620 = vmatpush.msra.mxu0 0.0
    %621 = vmatpush.msra.mxu0 0.0
    %622 = vmatpush.msra.mxu0 0.0
    %623 = vmatpush.msra.mxu0 0.0
    %624 = vmatpush.msra.mxu0 0.0
    %625 = vmatpush.msra.mxu0 0.0
    %626 = vmatpush.msra.mxu0 0.0
    %627 = vmatpush.msra.mxu0 0.0
    %628 = vmatpush.msra.mxu0 0.0
    %629 = vmatpush.msra.mxu0 0.0
    %630 = vmatpush.msra.mxu0 0.0
    %631 = vmatpush.msra.mxu0 0.0
    %632 = vmatpush.msra.mxu0 %v612
    %633 = vmatmul.f32.gmra.mxu0 %v615
    %v634 = vpop.f32.mrf.mxu0
    %v635 = vadd.f32 0.0, %v634
    %636 = vdwg.mxu0
    %v638 = vsel %vm381, %v609, 0
    %v641 = vsel %vm381, %v635, 0
    %643 = vmatpush.msra.mxu0 0.0
    %644 = vmatpush.msra.mxu0 0.0
    %645 = vmatpush.msra.mxu0 0.0
    %646 = vmatpush.msra.mxu0 0.0
    %647 = vmatpush.msra.mxu0 0.0
    %648 = vmatpush.msra.mxu0 0.0
    %649 = vmatpush.msra.mxu0 0.0
    %650 = vmatpush.msra.mxu0 0.0
    %651 = vmatpush.msra.mxu0 0.0
    %652 = vmatpush.msra.mxu0 0.0
    %653 = vmatpush.msra.mxu0 0.0
    %654 = vmatpush.msra.mxu0 0.0
    %655 = vmatpush.msra.mxu0 0.0
    %656 = vmatpush.msra.mxu0 0.0
    %657 = vmatpush.msra.mxu0 0.0
    %658 = vmatpush.msra.mxu0 %v374
    %659 = vmatmul.f32.gmra.mxu0 %v638
    %v660 = vpop.f32.mrf.mxu0
    %v661 = vadd.f32 0.0, %v660
    %662 = vmatmul.f32.gmra.mxu0 %v641
    %v663 = vpop.f32.mrf.mxu0
    %v664 = vadd.f32 0.0, %v663
    %665 = vdwg.mxu0
    %v667 = vsel %vm381, %v479, 0
    %v670 = vsel %vm381, %v505, 0
    %672 = vmatpush.msra.mxu0 0.0
    %673 = vmatpush.msra.mxu0 0.0
    %674 = vmatpush.msra.mxu0 0.0
    %675 = vmatpush.msra.mxu0 0.0
    %676 = vmatpush.msra.mxu0 0.0
    %677 = vmatpush.msra.mxu0 0.0
    %678 = vmatpush.msra.mxu0 0.0
    %679 = vmatpush.msra.mxu0 0.0
    %680 = vmatpush.msra.mxu0 0.0
    %681 = vmatpush.msra.mxu0 0.0
    %682 = vmatpush.msra.mxu0 0.0
    %683 = vmatpush.msra.mxu0 0.0
    %684 = vmatpush.msra.mxu0 0.0
    %685 = vmatpush.msra.mxu0 0.0
    %686 = vmatpush.msra.mxu0 0.0
    %687 = vmatpush.msra.mxu0 %v373
    %688 = vmatmul.f32.gmra.mxu0 %v667
    %v689 = vpop.f32.mrf.mxu0
    %v690 = vadd.f32 %v661, %v689
    %691 = vmatmul.f32.gmra.mxu0 %v670
    %v692 = vpop.f32.mrf.mxu0
    %v693 = vadd.f32 %v664, %v692
    %694 = vdwg.mxu0
    %695 = vrot.lane.b32.xlu0 %v368, 112
    %v696 = vpop.permute.xlu0 %695
    %697 = vrot.lane.b32.xlu0 %v368, 80
    %v698 = vpop.permute.xlu0 %697
    %v699 = vsel %vm381, %v696, 0
    %v701 = vsel %vm381, %v698, 0
    %703 = vmatpush.xpose.msra.mxu0 0.0
    %704 = vmatpush.xpose.msra.mxu0 0.0
    %705 = vmatpush.xpose.msra.mxu0 0.0
    %706 = vmatpush.xpose.msra.mxu0 0.0
    %707 = vmatpush.xpose.msra.mxu0 0.0
    %708 = vmatpush.xpose.msra.mxu0 0.0
    %709 = vmatpush.xpose.msra.mxu0 0.0
    %710 = vmatpush.xpose.msra.mxu0 0.0
    %711 = vmatpush.xpose.msra.mxu0 0.0
    %712 = vmatpush.xpose.msra.mxu0 0.0
    %713 = vmatpush.xpose.msra.mxu0 0.0
    %714 = vmatpush.xpose.msra.mxu0 0.0
    %715 = vmatpush.xpose.msra.mxu0 0.0
    %716 = vmatpush.xpose.msra.mxu0 0.0
    %717 = vmatpush.xpose.msra.mxu0 0.0
    %718 = vmatpush.xpose.msra.mxu0 %v701
    %719 = vmatmul.f32.gmra.mxu0 %v699
    %v720 = vpop.f32.mrf.mxu0
    %v721 = vadd.f32 0.0, %v720
    %722 = vdwg.mxu0
    %723 = vrot.lane.b32.xlu0 %v371, 112
    %v724 = vpop.permute.xlu0 %723
    %725 = vrot.lane.b32.xlu0 %v371, 80
    %v726 = vpop.permute.xlu0 %725
    %v727 = vsel %vm381, %v724, 0
    %v729 = vsel %vm381, %v726, 0
    %731 = vmatpush.xpose.msra.mxu0 0.0
    %732 = vmatpush.xpose.msra.mxu0 0.0
    %733 = vmatpush.xpose.msra.mxu0 0.0
    %734 = vmatpush.xpose.msra.mxu0 0.0
    %735 = vmatpush.xpose.msra.mxu0 0.0
    %736 = vmatpush.xpose.msra.mxu0 0.0
    %737 = vmatpush.xpose.msra.mxu0 0.0
    %738 = vmatpush.xpose.msra.mxu0 0.0
    %739 = vmatpush.xpose.msra.mxu0 0.0
    %740 = vmatpush.xpose.msra.mxu0 0.0
    %741 = vmatpush.xpose.msra.mxu0 0.0
    %742 = vmatpush.xpose.msra.mxu0 0.0
    %743 = vmatpush.xpose.msra.mxu0 0.0
    %744 = vmatpush.xpose.msra.mxu0 0.0
    %745 = vmatpush.xpose.msra.mxu0 0.0
    %746 = vmatpush.xpose.msra.mxu0 %v729
    %747 = vmatmul.f32.gmra.mxu0 %v727
    %v748 = vpop.f32.mrf.mxu0
    %v749 = vadd.f32 0.0, %v748
    %750 = vdwg.mxu0
    %v751 = vsel %vm381, %v721, -inf
    %752 = vmax.xlane.f32.xlu0 %v751
    %v753 = vpop.xlane.xlu0 %752
    %v754 = vsel %vm381, %v749, -inf
    %755 = vmax.xlane.f32.xlu0 %v754
    %v756 = vpop.xlane.xlu0 %755
    %v757 = vsub.f32 %v721, %v753
    %v758 = vsub.f32 %v749, %v756
    %v759 = vmul.f32 %v757, 1.442695
    %v760 = vpow.pop %v759
    %v761 = vmul.f32 %v758, 1.442695
    %v762 = vpow.pop %v761
    %v763 = vsel %vm381, %v760, 0.0
    %764 = vadd.xlane.f32.xlu0 %v763
    %v765 = vpop.xlane.xlu0 %764
    %v766 = vsel %vm381, %v762, 0.0
    %767 = vadd.xlane.f32.xlu0 %v766
    %v768 = vpop.xlane.xlu0 %767
    %v769 = vrcp.pop %v765
    %v770 = vrcp.pop %v768
    %v771 = vmul.f32 %v760, %v769
    %v772 = vmul.f32 %v762, %v770
    %773 = vrot.lane.b32.xlu0 %v368, 48
    %v774 = vpop.permute.xlu0 %773
    %v777 = vsel %vm381, %v771, 0
    %779 = vmatpush.msra.mxu0 0.0
    %780 = vmatpush.msra.mxu0 0.0
    %781 = vmatpush.msra.mxu0 0.0
    %782 = vmatpush.msra.mxu0 0.0
    %783 = vmatpush.msra.mxu0 0.0
    %784 = vmatpush.msra.mxu0 0.0
    %785 = vmatpush.msra.mxu0 0.0
    %786 = vmatpush.msra.mxu0 0.0
    %787 = vmatpush.msra.mxu0 0.0
    %788 = vmatpush.msra.mxu0 0.0
    %789 = vmatpush.msra.mxu0 0.0
    %790 = vmatpush.msra.mxu0 0.0
    %791 = vmatpush.msra.mxu0 0.0
    %792 = vmatpush.msra.mxu0 0.0
    %793 = vmatpush.msra.mxu0 0.0
    %794 = vmatpush.msra.mxu0 %v774
    %795 = vmatmul.f32.gmra.mxu0 %v777
    %v796 = vpop.f32.mrf.mxu0
    %v797 = vadd.f32 0.0, %v796
    %798 = vdwg.mxu0
    %799 = vrot.lane.b32.xlu0 %v371, 48
    %v800 = vpop.permute.xlu0 %799
    %v803 = vsel %vm381, %v772, 0
    %805 = vmatpush.msra.mxu0 0.0
    %806 = vmatpush.msra.mxu0 0.0
    %807 = vmatpush.msra.mxu0 0.0
    %808 = vmatpush.msra.mxu0 0.0
    %809 = vmatpush.msra.mxu0 0.0
    %810 = vmatpush.msra.mxu0 0.0
    %811 = vmatpush.msra.mxu0 0.0
    %812 = vmatpush.msra.mxu0 0.0
    %813 = vmatpush.msra.mxu0 0.0
    %814 = vmatpush.msra.mxu0 0.0
    %815 = vmatpush.msra.mxu0 0.0
    %816 = vmatpush.msra.mxu0 0.0
    %817 = vmatpush.msra.mxu0 0.0
    %818 = vmatpush.msra.mxu0 0.0
    %819 = vmatpush.msra.mxu0 0.0
    %820 = vmatpush.msra.mxu0 %v800
    %821 = vmatmul.f32.gmra.mxu0 %v803
    %v822 = vpop.f32.mrf.mxu0
    %v823 = vadd.f32 0.0, %v822
    %824 = vdwg.mxu0
    %v826 = vsel %vm381, %v797, 0
    %v829 = vsel %vm381, %v823, 0
    %831 = vmatpush.msra.mxu0 0.0
    %832 = vmatpush.msra.mxu0 0.0
    %833 = vmatpush.msra.mxu0 0.0
    %834 = vmatpush.msra.mxu0 0.0
    %835 = vmatpush.msra.mxu0 0.0
    %836 = vmatpush.msra.mxu0 0.0
    %837 = vmatpush.msra.mxu0 0.0
    %838 = vmatpush.msra.mxu0 0.0
    %839 = vmatpush.msra.mxu0 0.0
    %840 = vmatpush.msra.mxu0 0.0
    %841 = vmatpush.msra.mxu0 0.0
    %842 = vmatpush.msra.mxu0 0.0
    %843 = vmatpush.msra.mxu0 0.0
    %844 = vmatpush.msra.mxu0 0.0
    %845 = vmatpush.msra.mxu0 0.0
    %846 = vmatpush.msra.mxu0 %v375
    %847 = vmatmul.f32.gmra.mxu0 %v826
    %v848 = vpop.f32.mrf.mxu0
    %v849 = vadd.f32 0.0, %v848
    %850 = vmatmul.f32.gmra.mxu0 %v829
    %v851 = vpop.f32.mrf.mxu0
    %v852 = vadd.f32 0.0, %v851
    %853 = vdwg.mxu0
    %v854 = vadd.f32 %v690, %v849
    %v855 = vadd.f32 %v693, %v852
    %856 = vrot.lane.b32.xlu0 %v368, 104
    %v857 = vpop.permute.xlu0 %856
    %858 = vrot.lane.b32.xlu0 %v368, 72
    %v859 = vpop.permute.xlu0 %858
    %v860 = vsel %vm381, %v857, 0
    %v862 = vsel %vm381, %v859, 0
    %864 = vmatpush.xpose.msra.mxu0 0.0
    %865 = vmatpush.xpose.msra.mxu0 0.0
    %866 = vmatpush.xpose.msra.mxu0 0.0
    %867 = vmatpush.xpose.msra.mxu0 0.0
    %868 = vmatpush.xpose.msra.mxu0 0.0
    %869 = vmatpush.xpose.msra.mxu0 0.0
    %870 = vmatpush.xpose.msra.mxu0 0.0
    %871 = vmatpush.xpose.msra.mxu0 0.0
    %872 = vmatpush.xpose.msra.mxu0 0.0
    %873 = vmatpush.xpose.msra.mxu0 0.0
    %874 = vmatpush.xpose.msra.mxu0 0.0
    %875 = vmatpush.xpose.msra.mxu0 0.0
    %876 = vmatpush.xpose.msra.mxu0 0.0
    %877 = vmatpush.xpose.msra.mxu0 0.0
    %878 = vmatpush.xpose.msra.mxu0 0.0
    %879 = vmatpush.xpose.msra.mxu0 %v862
    %880 = vmatmul.f32.gmra.mxu0 %v860
    %v881 = vpop.f32.mrf.mxu0
    %v882 = vadd.f32 0.0, %v881
    %883 = vdwg.mxu0
    %884 = vrot.lane.b32.xlu0 %v371, 104
    %v885 = vpop.permute.xlu0 %884
    %886 = vrot.lane.b32.xlu0 %v371, 72
    %v887 = vpop.permute.xlu0 %886
    %v888 = vsel %vm381, %v885, 0
    %v890 = vsel %vm381, %v887, 0
    %892 = vmatpush.xpose.msra.mxu0 0.0
    %893 = vmatpush.xpose.msra.mxu0 0.0
    %894 = vmatpush.xpose.msra.mxu0 0.0
    %895 = vmatpush.xpose.msra.mxu0 0.0
    %896 = vmatpush.xpose.msra.mxu0 0.0
    %897 = vmatpush.xpose.msra.mxu0 0.0
    %898 = vmatpush.xpose.msra.mxu0 0.0
    %899 = vmatpush.xpose.msra.mxu0 0.0
    %900 = vmatpush.xpose.msra.mxu0 0.0
    %901 = vmatpush.xpose.msra.mxu0 0.0
    %902 = vmatpush.xpose.msra.mxu0 0.0
    %903 = vmatpush.xpose.msra.mxu0 0.0
    %904 = vmatpush.xpose.msra.mxu0 0.0
    %905 = vmatpush.xpose.msra.mxu0 0.0
    %906 = vmatpush.xpose.msra.mxu0 0.0
    %907 = vmatpush.xpose.msra.mxu0 %v890
    %908 = vmatmul.f32.gmra.mxu0 %v888
    %v909 = vpop.f32.mrf.mxu0
    %v910 = vadd.f32 0.0, %v909
    %911 = vdwg.mxu0
    %v912 = vsel %vm381, %v882, -inf
    %913 = vmax.xlane.f32.xlu0 %v912
    %v914 = vpop.xlane.xlu0 %913
    %v915 = vsel %vm381, %v910, -inf
    %916 = vmax.xlane.f32.xlu0 %v915
    %v917 = vpop.xlane.xlu0 %916
    %v918 = vsub.f32 %v882, %v914
    %v919 = vsub.f32 %v910, %v917
    %v920 = vmul.f32 %v918, 1.442695
    %v921 = vpow.pop %v920
    %v922 = vmul.f32 %v919, 1.442695
    %v923 = vpow.pop %v922
    %v924 = vsel %vm381, %v921, 0.0
    %925 = vadd.xlane.f32.xlu0 %v924
    %v926 = vpop.xlane.xlu0 %925
    %v927 = vsel %vm381, %v923, 0.0
    %928 = vadd.xlane.f32.xlu0 %v927
    %v929 = vpop.xlane.xlu0 %928
    %v930 = vrcp.pop %v926
    %v931 = vrcp.pop %v929
    %v932 = vmul.f32 %v921, %v930
    %v933 = vmul.f32 %v923, %v931
    %934 = vrot.lane.b32.xlu0 %v368, 40
    %v935 = vpop.permute.xlu0 %934
    %v938 = vsel %vm381, %v932, 0
    %940 = vmatpush.msra.mxu0 0.0
    %941 = vmatpush.msra.mxu0 0.0
    %942 = vmatpush.msra.mxu0 0.0
    %943 = vmatpush.msra.mxu0 0.0
    %944 = vmatpush.msra.mxu0 0.0
    %945 = vmatpush.msra.mxu0 0.0
    %946 = vmatpush.msra.mxu0 0.0
    %947 = vmatpush.msra.mxu0 0.0
    %948 = vmatpush.msra.mxu0 0.0
    %949 = vmatpush.msra.mxu0 0.0
    %950 = vmatpush.msra.mxu0 0.0
    %951 = vmatpush.msra.mxu0 0.0
    %952 = vmatpush.msra.mxu0 0.0
    %953 = vmatpush.msra.mxu0 0.0
    %954 = vmatpush.msra.mxu0 0.0
    %955 = vmatpush.msra.mxu0 %v935
    %956 = vmatmul.f32.gmra.mxu0 %v938
    %v957 = vpop.f32.mrf.mxu0
    %v958 = vadd.f32 0.0, %v957
    %959 = vdwg.mxu0
    %960 = vrot.lane.b32.xlu0 %v371, 40
    %v961 = vpop.permute.xlu0 %960
    %v964 = vsel %vm381, %v933, 0
    %966 = vmatpush.msra.mxu0 0.0
    %967 = vmatpush.msra.mxu0 0.0
    %968 = vmatpush.msra.mxu0 0.0
    %969 = vmatpush.msra.mxu0 0.0
    %970 = vmatpush.msra.mxu0 0.0
    %971 = vmatpush.msra.mxu0 0.0
    %972 = vmatpush.msra.mxu0 0.0
    %973 = vmatpush.msra.mxu0 0.0
    %974 = vmatpush.msra.mxu0 0.0
    %975 = vmatpush.msra.mxu0 0.0
    %976 = vmatpush.msra.mxu0 0.0
    %977 = vmatpush.msra.mxu0 0.0
    %978 = vmatpush.msra.mxu0 0.0
    %979 = vmatpush.msra.mxu0 0.0
    %980 = vmatpush.msra.mxu0 0.0
    %981 = vmatpush.msra.mxu0 %v961
    %982 = vmatmul.f32.gmra.mxu0 %v964
    %v983 = vpop.f32.mrf.mxu0
    %v984 = vadd.f32 0.0, %v983
    %985 = vdwg.mxu0
    %v987 = vsel %vm381, %v958, 0
    %v990 = vsel %vm381, %v984, 0
    %992 = vmatpush.msra.mxu0 0.0
    %993 = vmatpush.msra.mxu0 0.0
    %994 = vmatpush.msra.mxu0 0.0
    %995 = vmatpush.msra.mxu0 0.0
    %996 = vmatpush.msra.mxu0 0.0
    %997 = vmatpush.msra.mxu0 0.0
    %998 = vmatpush.msra.mxu0 0.0
    %999 = vmatpush.msra.mxu0 0.0
    %1000 = vmatpush.msra.mxu0 0.0
    %1001 = vmatpush.msra.mxu0 0.0
    %1002 = vmatpush.msra.mxu0 0.0
    %1003 = vmatpush.msra.mxu0 0.0
    %1004 = vmatpush.msra.mxu0 0.0
    %1005 = vmatpush.msra.mxu0 0.0
    %1006 = vmatpush.msra.mxu0 0.0
    %1007 = vmatpush.msra.mxu0 %v376
    %1008 = vmatmul.f32.gmra.mxu0 %v987
    %v1009 = vpop.f32.mrf.mxu0
    %v1010 = vadd.f32 0.0, %v1009
    %1011 = vmatmul.f32.gmra.mxu0 %v990
    %v1012 = vpop.f32.mrf.mxu0
    %v1013 = vadd.f32 0.0, %v1012
    %1014 = vdwg.mxu0
    %v1015 = vadd.f32 %v854, %v1010
    %v1016 = vadd.f32 %v855, %v1013
    %v1018 = vperm.slane %v377, 0
    %v1020 = vadd.f32 %v1015, %v1018
    %v1021 = vadd.f32 %v1016, %v1018
    %v1022 = vadd.f32 %v1020, %v331
    %v1023 = vadd.f32 %v1021, %v332
    %v1024 = vld [vmem:[#allocation10] sm:$0x1]
    %v1025 = vld [vmem:[#allocation11] sm:$0x1]
    %v1026 = vsel %vm343, %v1022, 0.0
    %1027 = vadd.xlane.f32.xlu0 %v1026
    %v1028 = vpop.xlane.xlu0 %1027
    %v1029 = vsel %vm343, %v1023, 0.0
    %1030 = vadd.xlane.f32.xlu0 %v1029
    %v1031 = vpop.xlane.xlu0 %1030
    %v1032 = vrcp.pop 32.0
    %v1033 = vmul.f32 32.0, %v1032
    %v1034 = vsub.f32 1.0, %v1033
    %v1035 = vmul.f32 %v1032, %v1034
    %v1036 = vadd.f32 %v1032, %v1035
    %vm1037 = vweird.f32 %v1032
    %v1038 = vsel %vm1037, %v1032, %v1036
    %v1039 = vmul.f32 %v1028, %v1038
    %v1040 = vmul.f32 %v1031, %v1038
    %v1041 = vsub.f32 %v1022, %v1039
    %v1042 = vsub.f32 %v1023, %v1040
    %v1043 = vmul.f32 %v1041, %v1041
    %v1044 = vmul.f32 %v1042, %v1042
    %v1045 = vsel %vm343, %v1043, 0.0
    %1046 = vadd.xlane.f32.xlu0 %v1045
    %v1047 = vpop.xlane.xlu0 %1046
    %v1048 = vsel %vm343, %v1044, 0.0
    %1049 = vadd.xlane.f32.xlu0 %v1048
    %v1050 = vpop.xlane.xlu0 %1049
    %v1051 = vmul.f32 %v1047, %v1038
    %v1052 = vmul.f32 %v1050, %v1038
    %v1053 = vadd.f32 %v1051, 1e-05
    %v1054 = vadd.f32 %v1052, 1e-05
    %v1055 = vrsqrt.pop %v1053
    %v1056 = vmul.f32 %v1055, %v1053
    %v1057 = vmul.f32 %v1056, %v1055
    %v1058 = vmul.f32 0.5, %v1057
    %v1059 = vsub.f32 1.5, %v1058
    %v1060 = vmul.f32 %v1055, %v1059
    %vm1061 = vweird.f32 %v1053
    %vm1062 = vweird.f32 %v1055
    %vm1063 = vmor %vm1061, %vm1062
    %v1064 = vsel %vm1063, %v1055, %v1060
    %v1065 = vrsqrt.pop %v1054
    %v1066 = vmul.f32 %v1065, %v1054
    %v1067 = vmul.f32 %v1066, %v1065
    %v1068 = vmul.f32 0.5, %v1067
    %v1069 = vsub.f32 1.5, %v1068
    %v1070 = vmul.f32 %v1065, %v1069
    %vm1071 = vweird.f32 %v1054
    %vm1072 = vweird.f32 %v1065
    %vm1073 = vmor %vm1071, %vm1072
    %v1074 = vsel %vm1073, %v1065, %v1070
    %v1075 = vmul.f32 %v1041, %v1064
    %v1076 = vmul.f32 %v1042, %v1074
    %v1078 = vperm.slane %v1024, 0
    %v1080 = vmul.f32 %v1075, %v1078
    %v1081 = vmul.f32 %v1076, %v1078
    %v1083 = vperm.slane %v1025, 0
    %v1085 = vadd.f32 %v1080, %v1083
    %v1086 = vadd.f32 %v1081, %v1083
    %v1087 = vld [vmem:[%s9] sm:$0xff]
    %v1088 = vld [vmem:[%s9 + $0x8] sm:$0xff]
    %v1089 = vld [vmem:[%s9 + $0x10] sm:$0xff]
    %v1090 = vld [vmem:[%s9 + $0x18] sm:$0xff]
    %v1091 = vld [vmem:[#allocation13] sm:$0x1]
    %v1093 = vperm.slane %v1091, 0
    %v1096 = vsel %vm343, %v1085, 0
    %v1099 = vsel %vm343, %v1086, 0
    %1101 = vmatpush.msra.mxu0 0.0
    %1102 = vmatpush.msra.mxu0 0.0
    %1103 = vmatpush.msra.mxu0 0.0
    %1104 = vmatpush.msra.mxu0 0.0
    %1105 = vmatpush.msra.mxu0 0.0
    %1106 = vmatpush.msra.mxu0 0.0
    %1107 = vmatpush.msra.mxu0 0.0
    %1108 = vmatpush.msra.mxu0 0.0
    %1109 = vmatpush.msra.mxu0 0.0
    %1110 = vmatpush.msra.mxu0 0.0
    %1111 = vmatpush.msra.mxu0 0.0
    %1112 = vmatpush.msra.mxu0 0.0
    %1113 = vmatpush.msra.mxu0 %v1090
    %1114 = vmatpush.msra.mxu0 %v1089
    %1115 = vmatpush.msra.mxu0 %v1088
    %1116 = vmatpush.msra.mxu0 %v1087
    %1117 = vmatmul.f32.gmra.mxu0 %v1096
    %v1118 = vpop.f32.mrf.mxu0
    %v1119 = vadd.f32 %v1093, %v1118
    %1120 = vmatmul.f32.gmra.mxu0 %v1099
    %v1121 = vpop.f32.mrf.mxu0
    %v1122 = vadd.f32 %v1093, %v1121
    %1123 = vdwg.mxu0
    %v1124 = vld [vmem:[#allocation14] sm:$0xff]
    %v1125 = vld [vmem:[#allocation14 + $0x8] sm:$0xff]
    %v1126 = vld [vmem:[#allocation14 + $0x10] sm:$0xff]
    %v1127 = vld [vmem:[#allocation14 + $0x18] sm:$0xff]
    %v1128 = vld [vmem:[#allocation16] sm:$0x1]
    %v1130 = vperm.slane %v1128, 0
    %v1133 = vsel %vm343, %v333, 0
    %v1136 = vsel %vm343, %v334, 0
    %1138 = vmatpush.msra.mxu0 0.0
    %1139 = vmatpush.msra.mxu0 0.0
    %1140 = vmatpush.msra.mxu0 0.0
    %1141 = vmatpush.msra.mxu0 0.0
    %1142 = vmatpush.msra.mxu0 0.0
    %1143 = vmatpush.msra.mxu0 0.0
    %1144 = vmatpush.msra.mxu0 0.0
    %1145 = vmatpush.msra.mxu0 0.0
    %1146 = vmatpush.msra.mxu0 0.0
    %1147 = vmatpush.msra.mxu0 0.0
    %1148 = vmatpush.msra.mxu0 0.0
    %1149 = vmatpush.msra.mxu0 0.0
    %1150 = vmatpush.msra.mxu0 %v1127
    %1151 = vmatpush.msra.mxu0 %v1126
    %1152 = vmatpush.msra.mxu0 %v1125
    %1153 = vmatpush.msra.mxu0 %v1124
    %1154 = vmatmul.f32.gmra.mxu0 %v1133
    %v1155 = vpop.f32.mrf.mxu0
    %v1156 = vadd.f32 %v1130, %v1155
    %1157 = vmatmul.f32.gmra.mxu0 %v1136
    %v1158 = vpop.f32.mrf.mxu0
    %v1159 = vadd.f32 %v1130, %v1158
    %1160 = vdwg.mxu0
    %v1161 = vld [vmem:[#allocation17] sm:$0xff]
    %v1162 = vld [vmem:[#allocation17 + $0x8] sm:$0xff]
    %v1163 = vld [vmem:[#allocation17 + $0x10] sm:$0xff]
    %v1164 = vld [vmem:[#allocation17 + $0x18] sm:$0xff]
    %v1165 = vld [vmem:[#allocation19] sm:$0x1]
    %v1167 = vsel %vm381, %v1119, 0
    %v1170 = vsel %vm381, %v1156, 0
    %1172 = vmatpush.xpose.msra.mxu0 0.0
    %1173 = vmatpush.xpose.msra.mxu0 0.0
    %1174 = vmatpush.xpose.msra.mxu0 0.0
    %1175 = vmatpush.xpose.msra.mxu0 0.0
    %1176 = vmatpush.xpose.msra.mxu0 0.0
    %1177 = vmatpush.xpose.msra.mxu0 0.0
    %1178 = vmatpush.xpose.msra.mxu0 0.0
    %1179 = vmatpush.xpose.msra.mxu0 0.0
    %1180 = vmatpush.xpose.msra.mxu0 0.0
    %1181 = vmatpush.xpose.msra.mxu0 0.0
    %1182 = vmatpush.xpose.msra.mxu0 0.0
    %1183 = vmatpush.xpose.msra.mxu0 0.0
    %1184 = vmatpush.xpose.msra.mxu0 0.0
    %1185 = vmatpush.xpose.msra.mxu0 0.0
    %1186 = vmatpush.xpose.msra.mxu0 0.0
    %1187 = vmatpush.xpose.msra.mxu0 %v1170
    %1188 = vmatmul.f32.gmra.mxu0 %v1167
    %v1189 = vpop.f32.mrf.mxu0
    %v1190 = vadd.f32 0.0, %v1189
    %1191 = vdwg.mxu0
    %v1193 = vsel %vm381, %v1122, 0
    %v1196 = vsel %vm381, %v1159, 0
    %1198 = vmatpush.xpose.msra.mxu0 0.0
    %1199 = vmatpush.xpose.msra.mxu0 0.0
    %1200 = vmatpush.xpose.msra.mxu0 0.0
    %1201 = vmatpush.xpose.msra.mxu0 0.0
    %1202 = vmatpush.xpose.msra.mxu0 0.0
    %1203 = vmatpush.xpose.msra.mxu0 0.0
    %1204 = vmatpush.xpose.msra.mxu0 0.0
    %1205 = vmatpush.xpose.msra.mxu0 0.0
    %1206 = vmatpush.xpose.msra.mxu0 0.0
    %1207 = vmatpush.xpose.msra.mxu0 0.0
    %1208 = vmatpush.xpose.msra.mxu0 0.0
    %1209 = vmatpush.xpose.msra.mxu0 0.0
    %1210 = vmatpush.xpose.msra.mxu0 0.0
    %1211 = vmatpush.xpose.msra.mxu0 0.0
    %1212 = vmatpush.xpose.msra.mxu0 0.0
    %1213 = vmatpush.xpose.msra.mxu0 %v1196
    %1214 = vmatmul.f32.gmra.mxu0 %v1193
    %v1215 = vpop.f32.mrf.mxu0
    %v1216 = vadd.f32 0.0, %v1215
    %1217 = vdwg.mxu0
    %v1218 = vsel %vm381, %v1190, -inf
    %1219 = vmax.xlane.f32.xlu0 %v1218
    %v1220 = vpop.xlane.xlu0 %1219
    %v1221 = vsel %vm381, %v1216, -inf
    %1222 = vmax.xlane.f32.xlu0 %v1221
    %v1223 = vpop.xlane.xlu0 %1222
    %v1224 = vsub.f32 %v1190, %v1220
    %v1225 = vsub.f32 %v1216, %v1223
    %v1226 = vmul.f32 %v1224, 1.442695
    %v1227 = vpow.pop %v1226
    %v1228 = vmul.f32 %v1225, 1.442695
    %v1229 = vpow.pop %v1228
    %v1230 = vsel %vm381, %v1227, 0.0
    %1231 = vadd.xlane.f32.xlu0 %v1230
    %v1232 = vpop.xlane.xlu0 %1231
    %v1233 = vsel %vm381, %v1229, 0.0
    %1234 = vadd.xlane.f32.xlu0 %v1233
    %v1235 = vpop.xlane.xlu0 %1234
    %v1236 = vrcp.pop %v1232
    %v1237 = vrcp.pop %v1235
    %v1238 = vmul.f32 %v1227, %v1236
    %v1239 = vmul.f32 %v1229, %v1237
    %1240 = vrot.lane.b32.xlu0 %v1156, 96
    %v1241 = vpop.permute.xlu0 %1240
    %v1244 = vsel %vm381, %v1238, 0
    %1246 = vmatpush.msra.mxu0 0.0
    %1247 = vmatpush.msra.mxu0 0.0
    %1248 = vmatpush.msra.mxu0 0.0
    %1249 = vmatpush.msra.mxu0 0.0
    %1250 = vmatpush.msra.mxu0 0.0
    %1251 = vmatpush.msra.mxu0 0.0
    %1252 = vmatpush.msra.mxu0 0.0
    %1253 = vmatpush.msra.mxu0 0.0
    %1254 = vmatpush.msra.mxu0 0.0
    %1255 = vmatpush.msra.mxu0 0.0
    %1256 = vmatpush.msra.mxu0 0.0
    %1257 = vmatpush.msra.mxu0 0.0
    %1258 = vmatpush.msra.mxu0 0.0
    %1259 = vmatpush.msra.mxu0 0.0
    %1260 = vmatpush.msra.mxu0 0.0
    %1261 = vmatpush.msra.mxu0 %v1241
    %1262 = vmatmul.f32.gmra.mxu0 %v1244
    %v1263 = vpop.f32.mrf.mxu0
    %v1264 = vadd.f32 0.0, %v1263
    %1265 = vdwg.mxu0
    %1266 = vrot.lane.b32.xlu0 %v1159, 96
    %v1267 = vpop.permute.xlu0 %1266
    %v1270 = vsel %vm381, %v1239, 0
    %1272 = vmatpush.msra.mxu0 0.0
    %1273 = vmatpush.msra.mxu0 0.0
    %1274 = vmatpush.msra.mxu0 0.0
    %1275 = vmatpush.msra.mxu0 0.0
    %1276 = vmatpush.msra.mxu0 0.0
    %1277 = vmatpush.msra.mxu0 0.0
    %1278 = vmatpush.msra.mxu0 0.0
    %1279 = vmatpush.msra.mxu0 0.0
    %1280 = vmatpush.msra.mxu0 0.0
    %1281 = vmatpush.msra.mxu0 0.0
    %1282 = vmatpush.msra.mxu0 0.0
    %1283 = vmatpush.msra.mxu0 0.0
    %1284 = vmatpush.msra.mxu0 0.0
    %1285 = vmatpush.msra.mxu0 0.0
    %1286 = vmatpush.msra.mxu0 0.0
    %1287 = vmatpush.msra.mxu0 %v1267
    %1288 = vmatmul.f32.gmra.mxu0 %v1270
    %v1289 = vpop.f32.mrf.mxu0
    %v1290 = vadd.f32 0.0, %v1289
    %1291 = vdwg.mxu0
    %1292 = vrot.lane.b32.xlu0 %v1119, 120
    %v1293 = vpop.permute.xlu0 %1292
    %1294 = vrot.lane.b32.xlu0 %v1156, 120
    %v1295 = vpop.permute.xlu0 %1294
    %v1296 = vsel %vm381, %v1293, 0
    %v1298 = vsel %vm381, %v1295, 0
    %1300 = vmatpush.xpose.msra.mxu0 0.0
    %1301 = vmatpush.xpose.msra.mxu0 0.0
    %1302 = vmatpush.xpose.msra.mxu0 0.0
    %1303 = vmatpush.xpose.msra.mxu0 0.0
    %1304 = vmatpush.xpose.msra.mxu0 0.0
    %1305 = vmatpush.xpose.msra.mxu0 0.0
    %1306 = vmatpush.xpose.msra.mxu0 0.0
    %1307 = vmatpush.xpose.msra.mxu0 0.0
    %1308 = vmatpush.xpose.msra.mxu0 0.0
    %1309 = vmatpush.xpose.msra.mxu0 0.0
    %1310 = vmatpush.xpose.msra.mxu0 0.0
    %1311 = vmatpush.xpose.msra.mxu0 0.0
    %1312 = vmatpush.xpose.msra.mxu0 0.0
    %1313 = vmatpush.xpose.msra.mxu0 0.0
    %1314 = vmatpush.xpose.msra.mxu0 0.0
    %1315 = vmatpush.xpose.msra.mxu0 %v1298
    %1316 = vmatmul.f32.gmra.mxu0 %v1296
    %v1317 = vpop.f32.mrf.mxu0
    %v1318 = vadd.f32 0.0, %v1317
    %1319 = vdwg.mxu0
    %1320 = vrot.lane.b32.xlu0 %v1122, 120
    %v1321 = vpop.permute.xlu0 %1320
    %1322 = vrot.lane.b32.xlu0 %v1159, 120
    %v1323 = vpop.permute.xlu0 %1322
    %v1324 = vsel %vm381, %v1321, 0
    %v1326 = vsel %vm381, %v1323, 0
    %1328 = vmatpush.xpose.msra.mxu0 0.0
    %1329 = vmatpush.xpose.msra.mxu0 0.0
    %1330 = vmatpush.xpose.msra.mxu0 0.0
    %1331 = vmatpush.xpose.msra.mxu0 0.0
    %1332 = vmatpush.xpose.msra.mxu0 0.0
    %1333 = vmatpush.xpose.msra.mxu0 0.0
    %1334 = vmatpush.xpose.msra.mxu0 0.0
    %1335 = vmatpush.xpose.msra.mxu0 0.0
    %1336 = vmatpush.xpose.msra.mxu0 0.0
    %1337 = vmatpush.xpose.msra.mxu0 0.0
    %1338 = vmatpush.xpose.msra.mxu0 0.0
    %1339 = vmatpush.xpose.msra.mxu0 0.0
    %1340 = vmatpush.xpose.msra.mxu0 0.0
    %1341 = vmatpush.xpose.msra.mxu0 0.0
    %1342 = vmatpush.xpose.msra.mxu0 0.0
    %1343 = vmatpush.xpose.msra.mxu0 %v1326
    %1344 = vmatmul.f32.gmra.mxu0 %v1324
    %v1345 = vpop.f32.mrf.mxu0
    %v1346 = vadd.f32 0.0, %v1345
    %1347 = vdwg.mxu0
    %v1348 = vsel %vm381, %v1318, -inf
    %1349 = vmax.xlane.f32.xlu0 %v1348
    %v1350 = vpop.xlane.xlu0 %1349
    %v1351 = vsel %vm381, %v1346, -inf
    %1352 = vmax.xlane.f32.xlu0 %v1351
    %v1353 = vpop.xlane.xlu0 %1352
    %v1354 = vsub.f32 %v1318, %v1350
    %v1355 = vsub.f32 %v1346, %v1353
    %v1356 = vmul.f32 %v1354, 1.442695
    %v1357 = vpow.pop %v1356
    %v1358 = vmul.f32 %v1355, 1.442695
    %v1359 = vpow.pop %v1358
    %v1360 = vsel %vm381, %v1357, 0.0
    %1361 = vadd.xlane.f32.xlu0 %v1360
    %v1362 = vpop.xlane.xlu0 %1361
    %v1363 = vsel %vm381, %v1359, 0.0
    %1364 = vadd.xlane.f32.xlu0 %v1363
    %v1365 = vpop.xlane.xlu0 %1364
    %v1366 = vrcp.pop %v1362
    %v1367 = vrcp.pop %v1365
    %v1368 = vmul.f32 %v1357, %v1366
    %v1369 = vmul.f32 %v1359, %v1367
    %1370 = vrot.lane.b32.xlu0 %v1156, 88
    %v1371 = vpop.permute.xlu0 %1370
    %v1374 = vsel %vm381, %v1368, 0
    %1376 = vmatpush.msra.mxu0 0.0
    %1377 = vmatpush.msra.mxu0 0.0
    %1378 = vmatpush.msra.mxu0 0.0
    %1379 = vmatpush.msra.mxu0 0.0
    %1380 = vmatpush.msra.mxu0 0.0
    %1381 = vmatpush.msra.mxu0 0.0
    %1382 = vmatpush.msra.mxu0 0.0
    %1383 = vmatpush.msra.mxu0 0.0
    %1384 = vmatpush.msra.mxu0 0.0
    %1385 = vmatpush.msra.mxu0 0.0
    %1386 = vmatpush.msra.mxu0 0.0
    %1387 = vmatpush.msra.mxu0 0.0
    %1388 = vmatpush.msra.mxu0 0.0
    %1389 = vmatpush.msra.mxu0 0.0
    %1390 = vmatpush.msra.mxu0 0.0
    %1391 = vmatpush.msra.mxu0 %v1371
    %1392 = vmatmul.f32.gmra.mxu0 %v1374
    %v1393 = vpop.f32.mrf.mxu0
    %v1394 = vadd.f32 0.0, %v1393
    %1395 = vdwg.mxu0
    %1396 = vrot.lane.b32.xlu0 %v1159, 88
    %v1397 = vpop.permute.xlu0 %1396
    %v1400 = vsel %vm381, %v1369, 0
    %1402 = vmatpush.msra.mxu0 0.0
    %1403 = vmatpush.msra.mxu0 0.0
    %1404 = vmatpush.msra.mxu0 0.0
    %1405 = vmatpush.msra.mxu0 0.0
    %1406 = vmatpush.msra.mxu0 0.0
    %1407 = vmatpush.msra.mxu0 0.0
    %1408 = vmatpush.msra.mxu0 0.0
    %1409 = vmatpush.msra.mxu0 0.0
    %1410 = vmatpush.msra.mxu0 0.0
    %1411 = vmatpush.msra.mxu0 0.0
    %1412 = vmatpush.msra.mxu0 0.0
    %1413 = vmatpush.msra.mxu0 0.0
    %1414 = vmatpush.msra.mxu0 0.0
    %1415 = vmatpush.msra.mxu0 0.0
    %1416 = vmatpush.msra.mxu0 0.0
    %1417 = vmatpush.msra.mxu0 %v1397
    %1418 = vmatmul.f32.gmra.mxu0 %v1400
    %v1419 = vpop.f32.mrf.mxu0
    %v1420 = vadd.f32 0.0, %v1419
    %1421 = vdwg.mxu0
    %v1423 = vsel %vm381, %v1394, 0
    %v1426 = vsel %vm381, %v1420, 0
    %1428 = vmatpush.msra.mxu0 0.0
    %1429 = vmatpush.msra.mxu0 0.0
    %1430 = vmatpush.msra.mxu0 0.0
    %1431 = vmatpush.msra.mxu0 0.0
    %1432 = vmatpush.msra.mxu0 0.0
    %1433 = vmatpush.msra.mxu0 0.0
    %1434 = vmatpush.msra.mxu0 0.0
    %1435 = vmatpush.msra.mxu0 0.0
    %1436 = vmatpush.msra.mxu0 0.0
    %1437 = vmatpush.msra.mxu0 0.0
    %1438 = vmatpush.msra.mxu0 0.0
    %1439 = vmatpush.msra.mxu0 0.0
    %1440 = vmatpush.msra.mxu0 0.0
    %1441 = vmatpush.msra.mxu0 0.0
    %1442 = vmatpush.msra.mxu0 0.0
    %1443 = vmatpush.msra.mxu0 %v1162
    %1444 = vmatmul.f32.gmra.mxu0 %v1423
    %v1445 = vpop.f32.mrf.mxu0
    %v1446 = vadd.f32 0.0, %v1445
    %1447 = vmatmul.f32.gmra.mxu0 %v1426
    %v1448 = vpop.f32.mrf.mxu0
    %v1449 = vadd.f32 0.0, %v1448
    %1450 = vdwg.mxu0
    %v1452 = vsel %vm381, %v1264, 0
    %v1455 = vsel %vm381, %v1290, 0
    %1457 = vmatpush.msra.mxu0 0.0
    %1458 = vmatpush.msra.mxu0 0.0
    %1459 = vmatpush.msra.mxu0 0.0
    %1460 = vmatpush.msra.mxu0 0.0
    %1461 = vmatpush.msra.mxu0 0.0
    %1462 = vmatpush.msra.mxu0 0.0
    %1463 = vmatpush.msra.mxu0 0.0
    %1464 = vmatpush.msra.mxu0 0.0
    %1465 = vmatpush.msra.mxu0 0.0
    %1466 = vmatpush.msra.mxu0 0.0
    %1467 = vmatpush.msra.mxu0 0.0
    %1468 = vmatpush.msra.mxu0 0.0
    %1469 = vmatpush.msra.mxu0 0.0
    %1470 = vmatpush.msra.mxu0 0.0
    %1471 = vmatpush.msra.mxu0 0.0
    %1472 = vmatpush.msra.mxu0 %v1161
    %1473 = vmatmul.f32.gmra.mxu0 %v1452
    %v1474 = vpop.f32.mrf.mxu0
    %v1475 = vadd.f32 %v1446, %v1474
    %1476 = vmatmul.f32.gmra.mxu0 %v1455
    %v1477 = vpop.f32.mrf.mxu0
    %v1478 = vadd.f32 %v1449, %v1477
    %1479 = vdwg.mxu0
    %1480 = vrot.lane.b32.xlu0 %v1119, 112
    %v1481 = vpop.permute.xlu0 %1480
    %1482 = vrot.lane.b32.xlu0 %v1156, 112
    %v1483 = vpop.permute.xlu0 %1482
    %v1484 = vsel %vm381, %v1481, 0
    %v1486 = vsel %vm381, %v1483, 0
    %1488 = vmatpush.xpose.msra.mxu0 0.0
    %1489 = vmatpush.xpose.msra.mxu0 0.0
    %1490 = vmatpush.xpose.msra.mxu0 0.0
    %1491 = vmatpush.xpose.msra.mxu0 0.0
    %1492 = vmatpush.xpose.msra.mxu0 0.0
    %1493 = vmatpush.xpose.msra.mxu0 0.0
    %1494 = vmatpush.xpose.msra.mxu0 0.0
    %1495 = vmatpush.xpose.msra.mxu0 0.0
    %1496 = vmatpush.xpose.msra.mxu0 0.0
    %1497 = vmatpush.xpose.msra.mxu0 0.0
    %1498 = vmatpush.xpose.msra.mxu0 0.0
    %1499 = vmatpush.xpose.msra.mxu0 0.0
    %1500 = vmatpush.xpose.msra.mxu0 0.0
    %1501 = vmatpush.xpose.msra.mxu0 0.0
    %1502 = vmatpush.xpose.msra.mxu0 0.0
    %1503 = vmatpush.xpose.msra.mxu0 %v1486
    %1504 = vmatmul.f32.gmra.mxu0 %v1484
    %v1505 = vpop.f32.mrf.mxu0
    %v1506 = vadd.f32 0.0, %v1505
    %1507 = vdwg.mxu0
    %1508 = vrot.lane.b32.xlu0 %v1122, 112
    %v1509 = vpop.permute.xlu0 %1508
    %1510 = vrot.lane.b32.xlu0 %v1159, 112
    %v1511 = vpop.permute.xlu0 %1510
    %v1512 = vsel %vm381, %v1509, 0
    %v1514 = vsel %vm381, %v1511, 0
    %1516 = vmatpush.xpose.msra.mxu0 0.0
    %1517 = vmatpush.xpose.msra.mxu0 0.0
    %1518 = vmatpush.xpose.msra.mxu0 0.0
    %1519 = vmatpush.xpose.msra.mxu0 0.0
    %1520 = vmatpush.xpose.msra.mxu0 0.0
    %1521 = vmatpush.xpose.msra.mxu0 0.0
    %1522 = vmatpush.xpose.msra.mxu0 0.0
    %1523 = vmatpush.xpose.msra.mxu0 0.0
    %1524 = vmatpush.xpose.msra.mxu0 0.0
    %1525 = vmatpush.xpose.msra.mxu0 0.0
    %1526 = vmatpush.xpose.msra.mxu0 0.0
    %1527 = vmatpush.xpose.msra.mxu0 0.0
    %1528 = vmatpush.xpose.msra.mxu0 0.0
    %1529 = vmatpush.xpose.msra.mxu0 0.0
    %1530 = vmatpush.xpose.msra.mxu0 0.0
    %1531 = vmatpush.xpose.msra.mxu0 %v1514
    %1532 = vmatmul.f32.gmra.mxu0 %v1512
    %v1533 = vpop.f32.mrf.mxu0
    %v1534 = vadd.f32 0.0, %v1533
    %1535 = vdwg.mxu0
    %v1536 = vsel %vm381, %v1506, -inf
    %1537 = vmax.xlane.f32.xlu0 %v1536
    %v1538 = vpop.xlane.xlu0 %1537
    %v1539 = vsel %vm381, %v1534, -inf
    %1540 = vmax.xlane.f32.xlu0 %v1539
    %v1541 = vpop.xlane.xlu0 %1540
    %v1542 = vsub.f32 %v1506, %v1538
    %v1543 = vsub.f32 %v1534, %v1541
    %v1544 = vmul.f32 %v1542, 1.442695
    %v1545 = vpow.pop %v1544
    %v1546 = vmul.f32 %v1543, 1.442695
    %v1547 = vpow.pop %v1546
    %v1548 = vsel %vm381, %v1545, 0.0
    %1549 = vadd.xlane.f32.xlu0 %v1548
    %v1550 = vpop.xlane.xlu0 %1549
    %v1551 = vsel %vm381, %v1547, 0.0
    %1552 = vadd.xlane.f32.xlu0 %v1551
    %v1553 = vpop.xlane.xlu0 %1552
    %v1554 = vrcp.pop %v1550
    %v1555 = vrcp.pop %v1553
    %v1556 = vmul.f32 %v1545, %v1554
    %v1557 = vmul.f32 %v1547, %v1555
    %1558 = vrot.lane.b32.xlu0 %v1156, 80
    %v1559 = vpop.permute.xlu0 %1558
    %v1562 = vsel %vm381, %v1556, 0
    %1564 = vmatpush.msra.mxu0 0.0
    %1565 = vmatpush.msra.mxu0 0.0
    %1566 = vmatpush.msra.mxu0 0.0
    %1567 = vmatpush.msra.mxu0 0.0
    %1568 = vmatpush.msra.mxu0 0.0
    %1569 = vmatpush.msra.mxu0 0.0
    %1570 = vmatpush.msra.mxu0 0.0
    %1571 = vmatpush.msra.mxu0 0.0
    %1572 = vmatpush.msra.mxu0 0.0
    %1573 = vmatpush.msra.mxu0 0.0
    %1574 = vmatpush.msra.mxu0 0.0
    %1575 = vmatpush.msra.mxu0 0.0
    %1576 = vmatpush.msra.mxu0 0.0
    %1577 = vmatpush.msra.mxu0 0.0
    %1578 = vmatpush.msra.mxu0 0.0
    %1579 = vmatpush.msra.mxu0 %v1559
    %1580 = vmatmul.f32.gmra.mxu0 %v1562
    %v1581 = vpop.f32.mrf.mxu0
    %v1582 = vadd.f32 0.0, %v1581
    %1583 = vdwg.mxu0
    %1584 = vrot.lane.b32.xlu0 %v1159, 80
    %v1585 = vpop.permute.xlu0 %1584
    %v1588 = vsel %vm381, %v1557, 0
    %1590 = vmatpush.msra.mxu0 0.0
    %1591 = vmatpush.msra.mxu0 0.0
    %1592 = vmatpush.msra.mxu0 0.0
    %1593 = vmatpush.msra.mxu0 0.0
    %1594 = vmatpush.msra.mxu0 0.0
    %1595 = vmatpush.msra.mxu0 0.0
    %1596 = vmatpush.msra.mxu0 0.0
    %1597 = vmatpush.msra.mxu0 0.0
    %1598 = vmatpush.msra.mxu0 0.0
    %1599 = vmatpush.msra.mxu0 0.0
    %1600 = vmatpush.msra.mxu0 0.0
    %1601 = vmatpush.msra.mxu0 0.0
    %1602 = vmatpush.msra.mxu0 0.0
    %1603 = vmatpush.msra.mxu0 0.0
    %1604 = vmatpush.msra.mxu0 0.0
    %1605 = vmatpush.msra.mxu0 %v1585
    %1606 = vmatmul.f32.gmra.mxu0 %v1588
    %v1607 = vpop.f32.mrf.mxu0
    %v1608 = vadd.f32 0.0, %v1607
    %1609 = vdwg.mxu0
    %v1611 = vsel %vm381, %v1582, 0
    %v1614 = vsel %vm381, %v1608, 0
    %1616 = vmatpush.msra.mxu0 0.0
    %1617 = vmatpush.msra.mxu0 0.0
    %1618 = vmatpush.msra.mxu0 0.0
    %1619 = vmatpush.msra.mxu0 0.0
    %1620 = vmatpush.msra.mxu0 0.0
    %1621 = vmatpush.msra.mxu0 0.0
    %1622 = vmatpush.msra.mxu0 0.0
    %1623 = vmatpush.msra.mxu0 0.0
    %1624 = vmatpush.msra.mxu0 0.0
    %1625 = vmatpush.msra.mxu0 0.0
    %1626 = vmatpush.msra.mxu0 0.0
    %1627 = vmatpush.msra.mxu0 0.0
    %1628 = vmatpush.msra.mxu0 0.0
    %1629 = vmatpush.msra.mxu0 0.0
    %1630 = vmatpush.msra.mxu0 0.0
    %1631 = vmatpush.msra.mxu0 %v1163
    %1632 = vmatmul.f32.gmra.mxu0 %v1611
    %v1633 = vpop.f32.mrf.mxu0
    %v1634 = vadd.f32 0.0, %v1633
    %1635 = vmatmul.f32.gmra.mxu0 %v1614
    %v1636 = vpop.f32.mrf.mxu0
    %v1637 = vadd.f32 0.0, %v1636
    %1638 = vdwg.mxu0
    %v1639 = vadd.f32 %v1475, %v1634
    %v1640 = vadd.f32 %v1478, %v1637
    %1641 = vrot.lane.b32.xlu0 %v1119, 104
    %v1642 = vpop.permute.xlu0 %1641
    %1643 = vrot.lane.b32.xlu0 %v1156, 104
    %v1644 = vpop.permute.xlu0 %1643
    %v1645 = vsel %vm381, %v1642, 0
    %v1647 = vsel %vm381, %v1644, 0
    %1649 = vmatpush.xpose.msra.mxu0 0.0
    %1650 = vmatpush.xpose.msra.mxu0 0.0
    %1651 = vmatpush.xpose.msra.mxu0 0.0
    %1652 = vmatpush.xpose.msra.mxu0 0.0
    %1653 = vmatpush.xpose.msra.mxu0 0.0
    %1654 = vmatpush.xpose.msra.mxu0 0.0
    %1655 = vmatpush.xpose.msra.mxu0 0.0
    %1656 = vmatpush.xpose.msra.mxu0 0.0
    %1657 = vmatpush.xpose.msra.mxu0 0.0
    %1658 = vmatpush.xpose.msra.mxu0 0.0
    %1659 = vmatpush.xpose.msra.mxu0 0.0
    %1660 = vmatpush.xpose.msra.mxu0 0.0
    %1661 = vmatpush.xpose.msra.mxu0 0.0
    %1662 = vmatpush.xpose.msra.mxu0 0.0
    %1663 = vmatpush.xpose.msra.mxu0 0.0
    %1664 = vmatpush.xpose.msra.mxu0 %v1647
    %1665 = vmatmul.f32.gmra.mxu0 %v1645
    %v1666 = vpop.f32.mrf.mxu0
    %v1667 = vadd.f32 0.0, %v1666
    %1668 = vdwg.mxu0
    %1669 = vrot.lane.b32.xlu0 %v1122, 104
    %v1670 = vpop.permute.xlu0 %1669
    %1671 = vrot.lane.b32.xlu0 %v1159, 104
    %v1672 = vpop.permute.xlu0 %1671
    %v1673 = vsel %vm381, %v1670, 0
    %v1675 = vsel %vm381, %v1672, 0
    %1677 = vmatpush.xpose.msra.mxu0 0.0
    %1678 = vmatpush.xpose.msra.mxu0 0.0
    %1679 = vmatpush.xpose.msra.mxu0 0.0
    %1680 = vmatpush.xpose.msra.mxu0 0.0
    %1681 = vmatpush.xpose.msra.mxu0 0.0
    %1682 = vmatpush.xpose.msra.mxu0 0.0
    %1683 = vmatpush.xpose.msra.mxu0 0.0
    %1684 = vmatpush.xpose.msra.mxu0 0.0
    %1685 = vmatpush.xpose.msra.mxu0 0.0
    %1686 = vmatpush.xpose.msra.mxu0 0.0
    %1687 = vmatpush.xpose.msra.mxu0 0.0
    %1688 = vmatpush.xpose.msra.mxu0 0.0
    %1689 = vmatpush.xpose.msra.mxu0 0.0
    %1690 = vmatpush.xpose.msra.mxu0 0.0
    %1691 = vmatpush.xpose.msra.mxu0 0.0
    %1692 = vmatpush.xpose.msra.mxu0 %v1675
    %1693 = vmatmul.f32.gmra.mxu0 %v1673
    %v1694 = vpop.f32.mrf.mxu0
    %v1695 = vadd.f32 0.0, %v1694
    %1696 = vdwg.mxu0
    %v1697 = vsel %vm381, %v1667, -inf
    %1698 = vmax.xlane.f32.xlu0 %v1697
    %v1699 = vpop.xlane.xlu0 %1698
    %v1700 = vsel %vm381, %v1695, -inf
    %1701 = vmax.xlane.f32.xlu0 %v1700
    %v1702 = vpop.xlane.xlu0 %1701
    %v1703 = vsub.f32 %v1667, %v1699
    %v1704 = vsub.f32 %v1695, %v1702
    %v1705 = vmul.f32 %v1703, 1.442695
    %v1706 = vpow.pop %v1705
    %v1707 = vmul.f32 %v1704, 1.442695
    %v1708 = vpow.pop %v1707
    %v1709 = vsel %vm381, %v1706, 0.0
    %1710 = vadd.xlane.f32.xlu0 %v1709
    %v1711 = vpop.xlane.xlu0 %1710
    %v1712 = vsel %vm381, %v1708, 0.0
    %1713 = vadd.xlane.f32.xlu0 %v1712
    %v1714 = vpop.xlane.xlu0 %1713
    %v1715 = vrcp.pop %v1711
    %v1716 = vrcp.pop %v1714
    %v1717 = vmul.f32 %v1706, %v1715
    %v1718 = vmul.f32 %v1708, %v1716
    %1719 = vrot.lane.b32.xlu0 %v1156, 72
    %v1720 = vpop.permute.xlu0 %1719
    %v1723 = vsel %vm381, %v1717, 0
    %1725 = vmatpush.msra.mxu0 0.0
    %1726 = vmatpush.msra.mxu0 0.0
    %1727 = vmatpush.msra.mxu0 0.0
    %1728 = vmatpush.msra.mxu0 0.0
    %1729 = vmatpush.msra.mxu0 0.0
    %1730 = vmatpush.msra.mxu0 0.0
    %1731 = vmatpush.msra.mxu0 0.0
    %1732 = vmatpush.msra.mxu0 0.0
    %1733 = vmatpush.msra.mxu0 0.0
    %1734 = vmatpush.msra.mxu0 0.0
    %1735 = vmatpush.msra.mxu0 0.0
    %1736 = vmatpush.msra.mxu0 0.0
    %1737 = vmatpush.msra.mxu0 0.0
    %1738 = vmatpush.msra.mxu0 0.0
    %1739 = vmatpush.msra.mxu0 0.0
    %1740 = vmatpush.msra.mxu0 %v1720
    %1741 = vmatmul.f32.gmra.mxu0 %v1723
    %v1742 = vpop.f32.mrf.mxu0
    %v1743 = vadd.f32 0.0, %v1742
    %1744 = vdwg.mxu0
    %1745 = vrot.lane.b32.xlu0 %v1159, 72
    %v1746 = vpop.permute.xlu0 %1745
    %v1749 = vsel %vm381, %v1718, 0
    %1751 = vmatpush.msra.mxu0 0.0
    %1752 = vmatpush.msra.mxu0 0.0
    %1753 = vmatpush.msra.mxu0 0.0
    %1754 = vmatpush.msra.mxu0 0.0
    %1755 = vmatpush.msra.mxu0 0.0
    %1756 = vmatpush.msra.mxu0 0.0
    %1757 = vmatpush.msra.mxu0 0.0
    %1758 = vmatpush.msra.mxu0 0.0
    %1759 = vmatpush.msra.mxu0 0.0
    %1760 = vmatpush.msra.mxu0 0.0
    %1761 = vmatpush.msra.mxu0 0.0
    %1762 = vmatpush.msra.mxu0 0.0
    %1763 = vmatpush.msra.mxu0 0.0
    %1764 = vmatpush.msra.mxu0 0.0
    %1765 = vmatpush.msra.mxu0 0.0
    %1766 = vmatpush.msra.mxu0 %v1746
    %1767 = vmatmul.f32.gmra.mxu0 %v1749
    %v1768 = vpop.f32.mrf.mxu0
    %v1769 = vadd.f32 0.0, %v1768
    %1770 = vdwg.mxu0
    %v1772 = vsel %vm381, %v1743, 0
    %v1775 = vsel %vm381, %v1769, 0
    %1777 = vmatpush.msra.mxu0 0.0
    %1778 = vmatpush.msra.mxu0 0.0
    %1779 = vmatpush.msra.mxu0 0.0
    %1780 = vmatpush.msra.mxu0 0.0
    %1781 = vmatpush.msra.mxu0 0.0
    %1782 = vmatpush.msra.mxu0 0.0
    %1783 = vmatpush.msra.mxu0 0.0
    %1784 = vmatpush.msra.mxu0 0.0
    %1785 = vmatpush.msra.mxu0 0.0
    %1786 = vmatpush.msra.mxu0 0.0
    %1787 = vmatpush.msra.mxu0 0.0
    %1788 = vmatpush.msra.mxu0 0.0
    %1789 = vmatpush.msra.mxu0 0.0
    %1790 = vmatpush.msra.mxu0 0.0
    %1791 = vmatpush.msra.mxu0 0.0
    %1792 = vmatpush.msra.mxu0 %v1164
    %1793 = vmatmul.f32.gmra.mxu0 %v1772
    %v1794 = vpop.f32.mrf.mxu0
    %v1795 = vadd.f32 0.0, %v1794
    %1796 = vmatmul.f32.gmra.mxu0 %v1775
    %v1797 = vpop.f32.mrf.mxu0
    %v1798 = vadd.f32 0.0, %v1797
    %1799 = vdwg.mxu0
    %v1800 = vadd.f32 %v1639, %v1795
    %v1801 = vadd.f32 %v1640, %v1798
    %v1803 = vperm.slane %v1165, 0
    %v1805 = vadd.f32 %v1800, %v1803
    %v1806 = vadd.f32 %v1801, %v1803
    %v1807 = vadd.f32 %v1805, %v1085
    %v1808 = vadd.f32 %v1806, %v1086
    %v1809 = vld [vmem:[%s15] sm:$0x1]
    %v1810 = vld [vmem:[#allocation20] sm:$0x1]
    %v1811 = vsel %vm343, %v1807, 0.0
    %1812 = vadd.xlane.f32.xlu0 %v1811
    %v1813 = vpop.xlane.xlu0 %1812
    %v1814 = vsel %vm343, %v1808, 0.0
    %1815 = vadd.xlane.f32.xlu0 %v1814
    %v1816 = vpop.xlane.xlu0 %1815
    %v1817 = vmul.f32 %v1813, %v1038
    %v1818 = vmul.f32 %v1816, %v1038
    %v1819 = vsub.f32 %v1807, %v1817
    %v1820 = vsub.f32 %v1808, %v1818
    %v1821 = vmul.f32 %v1819, %v1819
    %v1822 = vmul.f32 %v1820, %v1820
    %v1823 = vsel %vm343, %v1821, 0.0
    %1824 = vadd.xlane.f32.xlu0 %v1823
    %v1825 = vpop.xlane.xlu0 %1824
    %v1826 = vsel %vm343, %v1822, 0.0
    %1827 = vadd.xlane.f32.xlu0 %v1826
    %v1828 = vpop.xlane.xlu0 %1827
    %v1829 = vmul.f32 %v1825, %v1038
    %v1830 = vmul.f32 %v1828, %v1038
    %v1831 = vadd.f32 %v1829, 1e-05
    %v1832 = vadd.f32 %v1830, 1e-05
    %v1833 = vrsqrt.pop %v1831
    %v1834 = vmul.f32 %v1833, %v1831
    %v1835 = vmul.f32 %v1834, %v1833
    %v1836 = vmul.f32 0.5, %v1835
    %v1837 = vsub.f32 1.5, %v1836
    %v1838 = vmul.f32 %v1833, %v1837
    %vm1839 = vweird.f32 %v1831
    %vm1840 = vweird.f32 %v1833
    %vm1841 = vmor %vm1839, %vm1840
    %v1842 = vsel %vm1841, %v1833, %v1838
    %v1843 = vrsqrt.pop %v1832
    %v1844 = vmul.f32 %v1843, %v1832
    %v1845 = vmul.f32 %v1844, %v1843
    %v1846 = vmul.f32 0.5, %v1845
    %v1847 = vsub.f32 1.5, %v1846
    %v1848 = vmul.f32 %v1843, %v1847
    %vm1849 = vweird.f32 %v1832
    %vm1850 = vweird.f32 %v1843
    %vm1851 = vmor %vm1849, %vm1850
    %v1852 = vsel %vm1851, %v1843, %v1848
    %v1853 = vmul.f32 %v1819, %v1842
    %v1854 = vmul.f32 %v1820, %v1852
    %v1856 = vperm.slane %v1809, 0
    %v1858 = vmul.f32 %v1853, %v1856
    %v1859 = vmul.f32 %v1854, %v1856
    %v1861 = vperm.slane %v1810, 0
    %v1863 = vadd.f32 %v1858, %v1861
    %v1864 = vadd.f32 %v1859, %v1861
    %v1865 = vld [vmem:[#allocation22] sm:$0xff]
    %v1866 = vld [vmem:[#allocation22 + $0x8] sm:$0xff]
    %v1867 = vld [vmem:[#allocation22 + $0x10] sm:$0xff]
    %v1868 = vld [vmem:[#allocation22 + $0x18] sm:$0xff]
    %v1869 = vld [vmem:[%s18] sm:$0x1]
    %v1871 = vperm.slane %v1869, 0
    %v1874 = vsel %vm343, %v1863, 0
    %v1877 = vsel %vm343, %v1864, 0
    %1879 = vmatpush.msra.mxu0 0.0
    %1880 = vmatpush.msra.mxu0 0.0
    %1881 = vmatpush.msra.mxu0 0.0
    %1882 = vmatpush.msra.mxu0 0.0
    %1883 = vmatpush.msra.mxu0 0.0
    %1884 = vmatpush.msra.mxu0 0.0
    %1885 = vmatpush.msra.mxu0 0.0
    %1886 = vmatpush.msra.mxu0 0.0
    %1887 = vmatpush.msra.mxu0 0.0
    %1888 = vmatpush.msra.mxu0 0.0
    %1889 = vmatpush.msra.mxu0 0.0
    %1890 = vmatpush.msra.mxu0 0.0
    %1891 = vmatpush.msra.mxu0 %v1868
    %1892 = vmatpush.msra.mxu0 %v1867
    %1893 = vmatpush.msra.mxu0 %v1866
    %1894 = vmatpush.msra.mxu0 %v1865
    %1895 = vmatmul.f32.gmra.mxu0 %v1874
    %v1896 = vpop.f32.mrf.mxu0
    %v1897 = vadd.f32 %v1871, %v1896
    %1898 = vmatmul.f32.gmra.mxu0 %v1877
    %v1899 = vpop.f32.mrf.mxu0
    %v1900 = vadd.f32 %v1871, %v1899
    %1901 = vdwg.mxu0
    %v1902 = vmax.f32 %v1897, 0.0
    %v1903 = vmax.f32 %v1900, 0.0
    %v1904 = vld [vmem:[%s19] sm:$0xff]
    %v1905 = vld [vmem:[%s19 + $0x8] sm:$0xff]
    %v1906 = vld [vmem:[%s19 + $0x10] sm:$0xff]
    %v1907 = vld [vmem:[%s19 + $0x18] sm:$0xff]
    %v1908 = vld [vmem:[%s19 + $0x20] sm:$0xff]
    %v1909 = vld [vmem:[%s19 + $0x28] sm:$0xff]
    %v1910 = vld [vmem:[%s19 + $0x30] sm:$0xff]
    %v1911 = vld [vmem:[%s19 + $0x38] sm:$0xff]
    %v1912 = vld [vmem:[%s20] sm:$0x1]
    %v1914 = vperm.slane %v1912, 0
    %vm1916 = vcmask 523264
    %v1918 = vsel %vm1916, %v1902, 0
    %v1921 = vsel %vm1916, %v1903, 0
    %1923 = vmatpush.msra.mxu0 0.0
    %1924 = vmatpush.msra.mxu0 0.0
    %1925 = vmatpush.msra.mxu0 0.0
    %1926 = vmatpush.msra.mxu0 0.0
    %1927 = vmatpush.msra.mxu0 0.0
    %1928 = vmatpush.msra.mxu0 0.0
    %1929 = vmatpush.msra.mxu0 0.0
    %1930 = vmatpush.msra.mxu0 0.0
    %1931 = vmatpush.msra.mxu0 %v1911
    %1932 = vmatpush.msra.mxu0 %v1910
    %1933 = vmatpush.msra.mxu0 %v1909
    %1934 = vmatpush.msra.mxu0 %v1908
    %1935 = vmatpush.msra.mxu0 %v1907
    %1936 = vmatpush.msra.mxu0 %v1906
    %1937 = vmatpush.msra.mxu0 %v1905
    %1938 = vmatpush.msra.mxu0 %v1904
    %1939 = vmatmul.f32.gmra.mxu0 %v1918
    %v1940 = vpop.f32.mrf.mxu0
    %v1941 = vadd.f32 %v1914, %v1940
    %1942 = vmatmul.f32.gmra.mxu0 %v1921
    %v1943 = vpop.f32.mrf.mxu0
    %v1944 = vadd.f32 %v1914, %v1943
    %1945 = vdwg.mxu0
    %v1946 = vadd.f32 %v1941, %v1863
    %v1947 = vadd.f32 %v1944, %v1864
    %v1948 = vld [vmem:[%s21] sm:$0x1]
    %v1949 = vld [vmem:[#allocation23] sm:$0x1]
    %v1950 = vsel %vm343, %v1946, 0.0
    %1951 = vadd.xlane.f32.xlu0 %v1950
    %v1952 = vpop.xlane.xlu0 %1951
    %v1953 = vsel %vm343, %v1947, 0.0
    %1954 = vadd.xlane.f32.xlu0 %v1953
    %v1955 = vpop.xlane.xlu0 %1954
    %v1956 = vmul.f32 %v1952, %v1038
    %v1957 = vmul.f32 %v1955, %v1038
    %v1958 = vsub.f32 %v1946, %v1956
    %v1959 = vsub.f32 %v1947, %v1957
    %v1960 = vmul.f32 %v1958, %v1958
    %v1961 = vmul.f32 %v1959, %v1959
    %v1962 = vsel %vm343, %v1960, 0.0
    %1963 = vadd.xlane.f32.xlu0 %v1962
    %v1964 = vpop.xlane.xlu0 %1963
    %v1965 = vsel %vm343, %v1961, 0.0
    %1966 = vadd.xlane.f32.xlu0 %v1965
    %v1967 = vpop.xlane.xlu0 %1966
    %v1968 = vmul.f32 %v1964, %v1038
    %v1969 = vmul.f32 %v1967, %v1038
    %v1970 = vadd.f32 %v1968, 1e-05
    %v1971 = vadd.f32 %v1969, 1e-05
    %v1972 = vrsqrt.pop %v1970
    %v1973 = vmul.f32 %v1972, %v1970
    %v1974 = vmul.f32 %v1973, %v1972
    %v1975 = vmul.f32 0.5, %v1974
    %v1976 = vsub.f32 1.5, %v1975
    %v1977 = vmul.f32 %v1972, %v1976
    %vm1978 = vweird.f32 %v1970
    %vm1979 = vweird.f32 %v1972
    %vm1980 = vmor %vm1978, %vm1979
    %v1981 = vsel %vm1980, %v1972, %v1977
    %v1982 = vrsqrt.pop %v1971
    %v1983 = vmul.f32 %v1982, %v1971
    %v1984 = vmul.f32 %v1983, %v1982
    %v1985 = vmul.f32 0.5, %v1984
    %v1986 = vsub.f32 1.5, %v1985
    %v1987 = vmul.f32 %v1982, %v1986
    %vm1988 = vweird.f32 %v1971
    %vm1989 = vweird.f32 %v1982
    %vm1990 = vmor %vm1988, %vm1989
    %v1991 = vsel %vm1990, %v1982, %v1987
    %v1992 = vmul.f32 %v1958, %v1981
    %v1993 = vmul.f32 %v1959, %v1991
    %v1995 = vperm.slane %v1948, 0
    %v1997 = vmul.f32 %v1992, %v1995
    %v1998 = vmul.f32 %v1993, %v1995
    %v2000 = vperm.slane %v1949, 0
    %v2002 = vadd.f32 %v1997, %v2000
    %v2003 = vadd.f32 %v1998, %v2000
    %s2004 = scalar_lea.vmem %s3, 32
    %v2005 = vld [vmem:[%s2004] sm:$0xff]
    %v2006 = vld [vmem:[%s2004 + $0x8] sm:$0xff]
    %v2007 = vld [vmem:[%s2004 + $0x10] sm:$0xff]
    %v2008 = vld [vmem:[%s2004 + $0x18] sm:$0xff]
    %s2009 = scalar_lea.vmem [#allocation7], 1
    %v2010 = vld [vmem:[%s2009] sm:$0x1]
    %v2012 = vperm.slane %v2010, 0
    %v2015 = vsel %vm343, %v2002, 0
    %v2018 = vsel %vm343, %v2003, 0
    %2020 = vmatpush.msra.mxu0 0.0
    %2021 = vmatpush.msra.mxu0 0.0
    %2022 = vmatpush.msra.mxu0 0.0
    %2023 = vmatpush.msra.mxu0 0.0
    %2024 = vmatpush.msra.mxu0 0.0
    %2025 = vmatpush.msra.mxu0 0.0
    %2026 = vmatpush.msra.mxu0 0.0
    %2027 = vmatpush.msra.mxu0 0.0
    %2028 = vmatpush.msra.mxu0 0.0
    %2029 = vmatpush.msra.mxu0 0.0
    %2030 = vmatpush.msra.mxu0 0.0
    %2031 = vmatpush.msra.mxu0 0.0
    %2032 = vmatpush.msra.mxu0 %v2008
    %2033 = vmatpush.msra.mxu0 %v2007
    %2034 = vmatpush.msra.mxu0 %v2006
    %2035 = vmatpush.msra.mxu0 %v2005
    %2036 = vmatmul.f32.gmra.mxu0 %v2015
    %v2037 = vpop.f32.mrf.mxu0
    %v2038 = vadd.f32 %v2012, %v2037
    %2039 = vmatmul.f32.gmra.mxu0 %v2018
    %v2040 = vpop.f32.mrf.mxu0
    %v2041 = vadd.f32 %v2012, %v2040
    %2042 = vdwg.mxu0
    %s2043 = scalar_lea.vmem %s5, 32
    %v2044 = vld [vmem:[%s2043] sm:$0xff]
    %v2045 = vld [vmem:[%s2043 + $0x8] sm:$0xff]
    %v2046 = vld [vmem:[%s2043 + $0x10] sm:$0xff]
    %v2047 = vld [vmem:[%s2043 + $0x18] sm:$0xff]
    %s2048 = scalar_lea.vmem [#allocation8], 1
    %v2049 = vld [vmem:[%s2048] sm:$0x1]
    %2051 = vrot.lane.b32.xlu0 %v2038, 96
    %v2052 = vpop.permute.xlu0 %2051
    %v2053 = vsel %vm381, %v2038, 0
    %v2055 = vsel %vm381, %v2052, 0
    %2057 = vmatpush.xpose.msra.mxu0 0.0
    %2058 = vmatpush.xpose.msra.mxu0 0.0
    %2059 = vmatpush.xpose.msra.mxu0 0.0
    %2060 = vmatpush.xpose.msra.mxu0 0.0
    %2061 = vmatpush.xpose.msra.mxu0 0.0
    %2062 = vmatpush.xpose.msra.mxu0 0.0
    %2063 = vmatpush.xpose.msra.mxu0 0.0
    %2064 = vmatpush.xpose.msra.mxu0 0.0
    %2065 = vmatpush.xpose.msra.mxu0 0.0
    %2066 = vmatpush.xpose.msra.mxu0 0.0
    %2067 = vmatpush.xpose.msra.mxu0 0.0
    %2068 = vmatpush.xpose.msra.mxu0 0.0
    %2069 = vmatpush.xpose.msra.mxu0 0.0
    %2070 = vmatpush.xpose.msra.mxu0 0.0
    %2071 = vmatpush.xpose.msra.mxu0 0.0
    %2072 = vmatpush.xpose.msra.mxu0 %v2055
    %2073 = vmatmul.f32.gmra.mxu0 %v2053
    %v2074 = vpop.f32.mrf.mxu0
    %v2075 = vadd.f32 0.0, %v2074
    %2076 = vdwg.mxu0
    %2078 = vrot.lane.b32.xlu0 %v2041, 96
    %v2079 = vpop.permute.xlu0 %2078
    %v2080 = vsel %vm381, %v2041, 0
    %v2082 = vsel %vm381, %v2079, 0
    %2084 = vmatpush.xpose.msra.mxu0 0.0
    %2085 = vmatpush.xpose.msra.mxu0 0.0
    %2086 = vmatpush.xpose.msra.mxu0 0.0
    %2087 = vmatpush.xpose.msra.mxu0 0.0
    %2088 = vmatpush.xpose.msra.mxu0 0.0
    %2089 = vmatpush.xpose.msra.mxu0 0.0
    %2090 = vmatpush.xpose.msra.mxu0 0.0
    %2091 = vmatpush.xpose.msra.mxu0 0.0
    %2092 = vmatpush.xpose.msra.mxu0 0.0
    %2093 = vmatpush.xpose.msra.mxu0 0.0
    %2094 = vmatpush.xpose.msra.mxu0 0.0
    %2095 = vmatpush.xpose.msra.mxu0 0.0
    %2096 = vmatpush.xpose.msra.mxu0 0.0
    %2097 = vmatpush.xpose.msra.mxu0 0.0
    %2098 = vmatpush.xpose.msra.mxu0 0.0
    %2099 = vmatpush.xpose.msra.mxu0 %v2082
    %2100 = vmatmul.f32.gmra.mxu0 %v2080
    %v2101 = vpop.f32.mrf.mxu0
    %v2102 = vadd.f32 0.0, %v2101
    %2103 = vdwg.mxu0
    %v2104 = vsel %vm381, %v2075, -inf
    %2105 = vmax.xlane.f32.xlu0 %v2104
    %v2106 = vpop.xlane.xlu0 %2105
    %v2107 = vsel %vm381, %v2102, -inf
    %2108 = vmax.xlane.f32.xlu0 %v2107
    %v2109 = vpop.xlane.xlu0 %2108
    %v2110 = vsub.f32 %v2075, %v2106
    %v2111 = vsub.f32 %v2102, %v2109
    %v2112 = vmul.f32 %v2110, 1.442695
    %v2113 = vpow.pop %v2112
    %v2114 = vmul.f32 %v2111, 1.442695
    %v2115 = vpow.pop %v2114
    %v2116 = vsel %vm381, %v2113, 0.0
    %2117 = vadd.xlane.f32.xlu0 %v2116
    %v2118 = vpop.xlane.xlu0 %2117
    %v2119 = vsel %vm381, %v2115, 0.0
    %2120 = vadd.xlane.f32.xlu0 %v2119
    %v2121 = vpop.xlane.xlu0 %2120
    %v2122 = vrcp.pop %v2118
    %v2123 = vrcp.pop %v2121
    %v2124 = vmul.f32 %v2113, %v2122
    %v2125 = vmul.f32 %v2115, %v2123
    %2126 = vrot.lane.b32.xlu0 %v2038, 64
    %v2127 = vpop.permute.xlu0 %2126
    %v2130 = vsel %vm381, %v2124, 0
    %2132 = vmatpush.msra.mxu0 0.0
    %2133 = vmatpush.msra.mxu0 0.0
    %2134 = vmatpush.msra.mxu0 0.0
    %2135 = vmatpush.msra.mxu0 0.0
    %2136 = vmatpush.msra.mxu0 0.0
    %2137 = vmatpush.msra.mxu0 0.0
    %2138 = vmatpush.msra.mxu0 0.0
    %2139 = vmatpush.msra.mxu0 0.0
    %2140 = vmatpush.msra.mxu0 0.0
    %2141 = vmatpush.msra.mxu0 0.0
    %2142 = vmatpush.msra.mxu0 0.0
    %2143 = vmatpush.msra.mxu0 0.0
    %2144 = vmatpush.msra.mxu0 0.0
    %2145 = vmatpush.msra.mxu0 0.0
    %2146 = vmatpush.msra.mxu0 0.0
    %2147 = vmatpush.msra.mxu0 %v2127
    %2148 = vmatmul.f32.gmra.mxu0 %v2130
    %v2149 = vpop.f32.mrf.mxu0
    %v2150 = vadd.f32 0.0, %v2149
    %2151 = vdwg.mxu0
    %2152 = vrot.lane.b32.xlu0 %v2041, 64
    %v2153 = vpop.permute.xlu0 %2152
    %v2156 = vsel %vm381, %v2125, 0
    %2158 = vmatpush.msra.mxu0 0.0
    %2159 = vmatpush.msra.mxu0 0.0
    %2160 = vmatpush.msra.mxu0 0.0
    %2161 = vmatpush.msra.mxu0 0.0
    %2162 = vmatpush.msra.mxu0 0.0
    %2163 = vmatpush.msra.mxu0 0.0
    %2164 = vmatpush.msra.mxu0 0.0
    %2165 = vmatpush.msra.mxu0 0.0
    %2166 = vmatpush.msra.mxu0 0.0
    %2167 = vmatpush.msra.mxu0 0.0
    %2168 = vmatpush.msra.mxu0 0.0
    %2169 = vmatpush.msra.mxu0 0.0
    %2170 = vmatpush.msra.mxu0 0.0
    %2171 = vmatpush.msra.mxu0 0.0
    %2172 = vmatpush.msra.mxu0 0.0
    %2173 = vmatpush.msra.mxu0 %v2153
    %2174 = vmatmul.f32.gmra.mxu0 %v2156
    %v2175 = vpop.f32.mrf.mxu0
    %v2176 = vadd.f32 0.0, %v2175
    %2177 = vdwg.mxu0
    %2178 = vrot.lane.b32.xlu0 %v2038, 120
    %v2179 = vpop.permute.xlu0 %2178
    %2180 = vrot.lane.b32.xlu0 %v2038, 88
    %v2181 = vpop.permute.xlu0 %2180
    %v2182 = vsel %vm381, %v2179, 0
    %v2184 = vsel %vm381, %v2181, 0
    %2186 = vmatpush.xpose.msra.mxu0 0.0
    %2187 = vmatpush.xpose.msra.mxu0 0.0
    %2188 = vmatpush.xpose.msra.mxu0 0.0
    %2189 = vmatpush.xpose.msra.mxu0 0.0
    %2190 = vmatpush.xpose.msra.mxu0 0.0
    %2191 = vmatpush.xpose.msra.mxu0 0.0
    %2192 = vmatpush.xpose.msra.mxu0 0.0
    %2193 = vmatpush.xpose.msra.mxu0 0.0
    %2194 = vmatpush.xpose.msra.mxu0 0.0
    %2195 = vmatpush.xpose.msra.mxu0 0.0
    %2196 = vmatpush.xpose.msra.mxu0 0.0
    %2197 = vmatpush.xpose.msra.mxu0 0.0
    %2198 = vmatpush.xpose.msra.mxu0 0.0
    %2199 = vmatpush.xpose.msra.mxu0 0.0
    %2200 = vmatpush.xpose.msra.mxu0 0.0
    %2201 = vmatpush.xpose.msra.mxu0 %v2184
    %2202 = vmatmul.f32.gmra.mxu0 %v2182
    %v2203 = vpop.f32.mrf.mxu0
    %v2204 = vadd.f32 0.0, %v2203
    %2205 = vdwg.mxu0
    %2206 = vrot.lane.b32.xlu0 %v2041, 120
    %v2207 = vpop.permute.xlu0 %2206
    %2208 = vrot.lane.b32.xlu0 %v2041, 88
    %v2209 = vpop.permute.xlu0 %2208
    %v2210 = vsel %vm381, %v2207, 0
    %v2212 = vsel %vm381, %v2209, 0
    %2214 = vmatpush.xpose.msra.mxu0 0.0
    %2215 = vmatpush.xpose.msra.mxu0 0.0
    %2216 = vmatpush.xpose.msra.mxu0 0.0
    %2217 = vmatpush.xpose.msra.mxu0 0.0
    %2218 = vmatpush.xpose.msra.mxu0 0.0
    %2219 = vmatpush.xpose.msra.mxu0 0.0
    %2220 = vmatpush.xpose.msra.mxu0 0.0
    %2221 = vmatpush.xpose.msra.mxu0 0.0
    %2222 = vmatpush.xpose.msra.mxu0 0.0
    %2223 = vmatpush.xpose.msra.mxu0 0.0
    %2224 = vmatpush.xpose.msra.mxu0 0.0
    %2225 = vmatpush.xpose.msra.mxu0 0.0
    %2226 = vmatpush.xpose.msra.mxu0 0.0
    %2227 = vmatpush.xpose.msra.mxu0 0.0
    %2228 = vmatpush.xpose.msra.mxu0 0.0
    %2229 = vmatpush.xpose.msra.mxu0 %v2212
    %2230 = vmatmul.f32.gmra.mxu0 %v2210
    %v2231 = vpop.f32.mrf.mxu0
    %v2232 = vadd.f32 0.0, %v2231
    %2233 = vdwg.mxu0
    %v2234 = vsel %vm381, %v2204, -inf
    %2235 = vmax.xlane.f32.xlu0 %v2234
    %v2236 = vpop.xlane.xlu0 %2235
    %v2237 = vsel %vm381, %v2232, -inf
    %2238 = vmax.xlane.f32.xlu0 %v2237
    %v2239 = vpop.xlane.xlu0 %2238
    %v2240 = vsub.f32 %v2204, %v2236
    %v2241 = vsub.f32 %v2232, %v2239
    %v2242 = vmul.f32 %v2240, 1.442695
    %v2243 = vpow.pop %v2242
    %v2244 = vmul.f32 %v2241, 1.442695
    %v2245 = vpow.pop %v2244
    %v2246 = vsel %vm381, %v2243, 0.0
    %2247 = vadd.xlane.f32.xlu0 %v2246
    %v2248 = vpop.xlane.xlu0 %2247
    %v2249 = vsel %vm381, %v2245, 0.0
    %2250 = vadd.xlane.f32.xlu0 %v2249
    %v2251 = vpop.xlane.xlu0 %2250
    %v2252 = vrcp.pop %v2248
    %v2253 = vrcp.pop %v2251
    %v2254 = vmul.f32 %v2243, %v2252
    %v2255 = vmul.f32 %v2245, %v2253
    %2256 = vrot.lane.b32.xlu0 %v2038, 56
    %v2257 = vpop.permute.xlu0 %2256
    %v2260 = vsel %vm381, %v2254, 0
    %2262 = vmatpush.msra.mxu0 0.0
    %2263 = vmatpush.msra.mxu0 0.0
    %2264 = vmatpush.msra.mxu0 0.0
    %2265 = vmatpush.msra.mxu0 0.0
    %2266 = vmatpush.msra.mxu0 0.0
    %2267 = vmatpush.msra.mxu0 0.0
    %2268 = vmatpush.msra.mxu0 0.0
    %2269 = vmatpush.msra.mxu0 0.0
    %2270 = vmatpush.msra.mxu0 0.0
    %2271 = vmatpush.msra.mxu0 0.0
    %2272 = vmatpush.msra.mxu0 0.0
    %2273 = vmatpush.msra.mxu0 0.0
    %2274 = vmatpush.msra.mxu0 0.0
    %2275 = vmatpush.msra.mxu0 0.0
    %2276 = vmatpush.msra.mxu0 0.0
    %2277 = vmatpush.msra.mxu0 %v2257
    %2278 = vmatmul.f32.gmra.mxu0 %v2260
    %v2279 = vpop.f32.mrf.mxu0
    %v2280 = vadd.f32 0.0, %v2279
    %2281 = vdwg.mxu0
    %2282 = vrot.lane.b32.xlu0 %v2041, 56
    %v2283 = vpop.permute.xlu0 %2282
    %v2286 = vsel %vm381, %v2255, 0
    %2288 = vmatpush.msra.mxu0 0.0
    %2289 = vmatpush.msra.mxu0 0.0
    %2290 = vmatpush.msra.mxu0 0.0
    %2291 = vmatpush.msra.mxu0 0.0
    %2292 = vmatpush.msra.mxu0 0.0
    %2293 = vmatpush.msra.mxu0 0.0
    %2294 = vmatpush.msra.mxu0 0.0
    %2295 = vmatpush.msra.mxu0 0.0
    %2296 = vmatpush.msra.mxu0 0.0
    %2297 = vmatpush.msra.mxu0 0.0
    %2298 = vmatpush.msra.mxu0 0.0
    %2299 = vmatpush.msra.mxu0 0.0
    %2300 = vmatpush.msra.mxu0 0.0
    %2301 = vmatpush.msra.mxu0 0.0
    %2302 = vmatpush.msra.mxu0 0.0
    %2303 = vmatpush.msra.mxu0 %v2283
    %2304 = vmatmul.f32.gmra.mxu0 %v2286
    %v2305 = vpop.f32.mrf.mxu0
    %v2306 = vadd.f32 0.0, %v2305
    %2307 = vdwg.mxu0
    %v2309 = vsel %vm381, %v2280, 0
    %v2312 = vsel %vm381, %v2306, 0
    %2314 = vmatpush.msra.mxu0 0.0
    %2315 = vmatpush.msra.mxu0 0.0
    %2316 = vmatpush.msra.mxu0 0.0
    %2317 = vmatpush.msra.mxu0 0.0
    %2318 = vmatpush.msra.mxu0 0.0
    %2319 = vmatpush.msra.mxu0 0.0
    %2320 = vmatpush.msra.mxu0 0.0
    %2321 = vmatpush.msra.mxu0 0.0
    %2322 = vmatpush.msra.mxu0 0.0
    %2323 = vmatpush.msra.mxu0 0.0
    %2324 = vmatpush.msra.mxu0 0.0
    %2325 = vmatpush.msra.mxu0 0.0
    %2326 = vmatpush.msra.mxu0 0.0
    %2327 = vmatpush.msra.mxu0 0.0
    %2328 = vmatpush.msra.mxu0 0.0
    %2329 = vmatpush.msra.mxu0 %v2045
    %2330 = vmatmul.f32.gmra.mxu0 %v2309
    %v2331 = vpop.f32.mrf.mxu0
    %v2332 = vadd.f32 0.0, %v2331
    %2333 = vmatmul.f32.gmra.mxu0 %v2312
    %v2334 = vpop.f32.mrf.mxu0
    %v2335 = vadd.f32 0.0, %v2334
    %2336 = vdwg.mxu0
    %v2338 = vsel %vm381, %v2150, 0
    %v2341 = vsel %vm381, %v2176, 0
    %2343 = vmatpush.msra.mxu0 0.0
    %2344 = vmatpush.msra.mxu0 0.0
    %2345 = vmatpush.msra.mxu0 0.0
    %2346 = vmatpush.msra.mxu0 0.0
    %2347 = vmatpush.msra.mxu0 0.0
    %2348 = vmatpush.msra.mxu0 0.0
    %2349 = vmatpush.msra.mxu0 0.0
    %2350 = vmatpush.msra.mxu0 0.0
    %2351 = vmatpush.msra.mxu0 0.0
    %2352 = vmatpush.msra.mxu0 0.0
    %2353 = vmatpush.msra.mxu0 0.0
    %2354 = vmatpush.msra.mxu0 0.0
    %2355 = vmatpush.msra.mxu0 0.0
    %2356 = vmatpush.msra.mxu0 0.0
    %2357 = vmatpush.msra.mxu0 0.0
    %2358 = vmatpush.msra.mxu0 %v2044
    %2359 = vmatmul.f32.gmra.mxu0 %v2338
    %v2360 = vpop.f32.mrf.mxu0
    %v2361 = vadd.f32 %v2332, %v2360
    %2362 = vmatmul.f32.gmra.mxu0 %v2341
    %v2363 = vpop.f32.mrf.mxu0
    %v2364 = vadd.f32 %v2335, %v2363
    %2365 = vdwg.mxu0
    %2366 = vrot.lane.b32.xlu0 %v2038, 112
    %v2367 = vpop.permute.xlu0 %2366
    %2368 = vrot.lane.b32.xlu0 %v2038, 80
    %v2369 = vpop.permute.xlu0 %2368
    %v2370 = vsel %vm381, %v2367, 0
    %v2372 = vsel %vm381, %v2369, 0
    %2374 = vmatpush.xpose.msra.mxu0 0.0
    %2375 = vmatpush.xpose.msra.mxu0 0.0
    %2376 = vmatpush.xpose.msra.mxu0 0.0
    %2377 = vmatpush.xpose.msra.mxu0 0.0
    %2378 = vmatpush.xpose.msra.mxu0 0.0
    %2379 = vmatpush.xpose.msra.mxu0 0.0
    %2380 = vmatpush.xpose.msra.mxu0 0.0
    %2381 = vmatpush.xpose.msra.mxu0 0.0
    %2382 = vmatpush.xpose.msra.mxu0 0.0
    %2383 = vmatpush.xpose.msra.mxu0 0.0
    %2384 = vmatpush.xpose.msra.mxu0 0.0
    %2385 = vmatpush.xpose.msra.mxu0 0.0
    %2386 = vmatpush.xpose.msra.mxu0 0.0
    %2387 = vmatpush.xpose.msra.mxu0 0.0
    %2388 = vmatpush.xpose.msra.mxu0 0.0
    %2389 = vmatpush.xpose.msra.mxu0 %v2372
    %2390 = vmatmul.f32.gmra.mxu0 %v2370
    %v2391 = vpop.f32.mrf.mxu0
    %v2392 = vadd.f32 0.0, %v2391
    %2393 = vdwg.mxu0
    %2394 = vrot.lane.b32.xlu0 %v2041, 112
    %v2395 = vpop.permute.xlu0 %2394
    %2396 = vrot.lane.b32.xlu0 %v2041, 80
    %v2397 = vpop.permute.xlu0 %2396
    %v2398 = vsel %vm381, %v2395, 0
    %v2400 = vsel %vm381, %v2397, 0
    %2402 = vmatpush.xpose.msra.mxu0 0.0
    %2403 = vmatpush.xpose.msra.mxu0 0.0
    %2404 = vmatpush.xpose.msra.mxu0 0.0
    %2405 = vmatpush.xpose.msra.mxu0 0.0
    %2406 = vmatpush.xpose.msra.mxu0 0.0
    %2407 = vmatpush.xpose.msra.mxu0 0.0
    %2408 = vmatpush.xpose.msra.mxu0 0.0
    %2409 = vmatpush.xpose.msra.mxu0 0.0
    %2410 = vmatpush.xpose.msra.mxu0 0.0
    %2411 = vmatpush.xpose.msra.mxu0 0.0
    %2412 = vmatpush.xpose.msra.mxu0 0.0
    %2413 = vmatpush.xpose.msra.mxu0 0.0
    %2414 = vmatpush.xpose.msra.mxu0 0.0
    %2415 = vmatpush.xpose.msra.mxu0 0.0
    %2416 = vmatpush.xpose.msra.mxu0 0.0
    %2417 = vmatpush.xpose.msra.mxu0 %v2400
    %2418 = vmatmul.f32.gmra.mxu0 %v2398
    %v2419 = vpop.f32.mrf.mxu0
    %v2420 = vadd.f32 0.0, %v2419
    %2421 = vdwg.mxu0
    %v2422 = vsel %vm381, %v2392, -inf
    %2423 = vmax.xlane.f32.xlu0 %v2422
    %v2424 = vpop.xlane.xlu0 %2423
    %v2425 = vsel %vm381, %v2420, -inf
    %2426 = vmax.xlane.f32.xlu0 %v2425
    %v2427 = vpop.xlane.xlu0 %2426
    %v2428 = vsub.f32 %v2392, %v2424
    %v2429 = vsub.f32 %v2420, %v2427
    %v2430 = vmul.f32 %v2428, 1.442695
    %v2431 = vpow.pop %v2430
    %v2432 = vmul.f32 %v2429, 1.442695
    %v2433 = vpow.pop %v2432
    %v2434 = vsel %vm381, %v2431, 0.0
    %2435 = vadd.xlane.f32.xlu0 %v2434
    %v2436 = vpop.xlane.xlu0 %2435
    %v2437 = vsel %vm381, %v2433, 0.0
    %2438 = vadd.xlane.f32.xlu0 %v2437
    %v2439 = vpop.xlane.xlu0 %2438
    %v2440 = vrcp.pop %v2436
    %v2441 = vrcp.pop %v2439
    %v2442 = vmul.f32 %v2431, %v2440
    %v2443 = vmul.f32 %v2433, %v2441
    %2444 = vrot.lane.b32.xlu0 %v2038, 48
    %v2445 = vpop.permute.xlu0 %2444
    %v2448 = vsel %vm381, %v2442, 0
    %2450 = vmatpush.msra.mxu0 0.0
    %2451 = vmatpush.msra.mxu0 0.0
    %2452 = vmatpush.msra.mxu0 0.0
    %2453 = vmatpush.msra.mxu0 0.0
    %2454 = vmatpush.msra.mxu0 0.0
    %2455 = vmatpush.msra.mxu0 0.0
    %2456 = vmatpush.msra.mxu0 0.0
    %2457 = vmatpush.msra.mxu0 0.0
    %2458 = vmatpush.msra.mxu0 0.0
    %2459 = vmatpush.msra.mxu0 0.0
    %2460 = vmatpush.msra.mxu0 0.0
    %2461 = vmatpush.msra.mxu0 0.0
    %2462 = vmatpush.msra.mxu0 0.0
    %2463 = vmatpush.msra.mxu0 0.0
    %2464 = vmatpush.msra.mxu0 0.0
    %2465 = vmatpush.msra.mxu0 %v2445
    %2466 = vmatmul.f32.gmra.mxu0 %v2448
    %v2467 = vpop.f32.mrf.mxu0
    %v2468 = vadd.f32 0.0, %v2467
    %2469 = vdwg.mxu0
    %2470 = vrot.lane.b32.xlu0 %v2041, 48
    %v2471 = vpop.permute.xlu0 %2470
    %v2474 = vsel %vm381, %v2443, 0
    %2476 = vmatpush.msra.mxu0 0.0
    %2477 = vmatpush.msra.mxu0 0.0
    %2478 = vmatpush.msra.mxu0 0.0
    %2479 = vmatpush.msra.mxu0 0.0
    %2480 = vmatpush.msra.mxu0 0.0
    %2481 = vmatpush.msra.mxu0 0.0
    %2482 = vmatpush.msra.mxu0 0.0
    %2483 = vmatpush.msra.mxu0 0.0
    %2484 = vmatpush.msra.mxu0 0.0
    %2485 = vmatpush.msra.mxu0 0.0
    %2486 = vmatpush.msra.mxu0 0.0
    %2487 = vmatpush.msra.mxu0 0.0
    %2488 = vmatpush.msra.mxu0 0.0
    %2489 = vmatpush.msra.mxu0 0.0
    %2490 = vmatpush.msra.mxu0 0.0
    %2491 = vmatpush.msra.mxu0 %v2471
    %2492 = vmatmul.f32.gmra.mxu0 %v2474
    %v2493 = vpop.f32.mrf.mxu0
    %v2494 = vadd.f32 0.0, %v2493
    %2495 = vdwg.mxu0
    %v2497 = vsel %vm381, %v2468, 0
    %v2500 = vsel %vm381, %v2494, 0
    %2502 = vmatpush.msra.mxu0 0.0
    %2503 = vmatpush.msra.mxu0 0.0
    %2504 = vmatpush.msra.mxu0 0.0
    %2505 = vmatpush.msra.mxu0 0.0
    %2506 = vmatpush.msra.mxu0 0.0
    %2507 = vmatpush.msra.mxu0 0.0
    %2508 = vmatpush.msra.mxu0 0.0
    %2509 = vmatpush.msra.mxu0 0.0
    %2510 = vmatpush.msra.mxu0 0.0
    %2511 = vmatpush.msra.mxu0 0.0
    %2512 = vmatpush.msra.mxu0 0.0
    %2513 = vmatpush.msra.mxu0 0.0
    %2514 = vmatpush.msra.mxu0 0.0
    %2515 = vmatpush.msra.mxu0 0.0
    %2516 = vmatpush.msra.mxu0 0.0
    %2517 = vmatpush.msra.mxu0 %v2046
    %2518 = vmatmul.f32.gmra.mxu0 %v2497
    %v2519 = vpop.f32.mrf.mxu0
    %v2520 = vadd.f32 0.0, %v2519
    %2521 = vmatmul.f32.gmra.mxu0 %v2500
    %v2522 = vpop.f32.mrf.mxu0
    %v2523 = vadd.f32 0.0, %v2522
    %2524 = vdwg.mxu0
    %v2525 = vadd.f32 %v2361, %v2520
    %v2526 = vadd.f32 %v2364, %v2523
    %2527 = vrot.lane.b32.xlu0 %v2038, 104
    %v2528 = vpop.permute.xlu0 %2527
    %2529 = vrot.lane.b32.xlu0 %v2038, 72
    %v2530 = vpop.permute.xlu0 %2529
    %v2531 = vsel %vm381, %v2528, 0
    %v2533 = vsel %vm381, %v2530, 0
    %2535 = vmatpush.xpose.msra.mxu0 0.0
    %2536 = vmatpush.xpose.msra.mxu0 0.0
    %2537 = vmatpush.xpose.msra.mxu0 0.0
    %2538 = vmatpush.xpose.msra.mxu0 0.0
    %2539 = vmatpush.xpose.msra.mxu0 0.0
    %2540 = vmatpush.xpose.msra.mxu0 0.0
    %2541 = vmatpush.xpose.msra.mxu0 0.0
    %2542 = vmatpush.xpose.msra.mxu0 0.0
    %2543 = vmatpush.xpose.msra.mxu0 0.0
    %2544 = vmatpush.xpose.msra.mxu0 0.0
    %2545 = vmatpush.xpose.msra.mxu0 0.0
    %2546 = vmatpush.xpose.msra.mxu0 0.0
    %2547 = vmatpush.xpose.msra.mxu0 0.0
    %2548 = vmatpush.xpose.msra.mxu0 0.0
    %2549 = vmatpush.xpose.msra.mxu0 0.0
    %2550 = vmatpush.xpose.msra.mxu0 %v2533
    %2551 = vmatmul.f32.gmra.mxu0 %v2531
    %v2552 = vpop.f32.mrf.mxu0
    %v2553 = vadd.f32 0.0, %v2552
    %2554 = vdwg.mxu0
    %2555 = vrot.lane.b32.xlu0 %v2041, 104
    %v2556 = vpop.permute.xlu0 %2555
    %2557 = vrot.lane.b32.xlu0 %v2041, 72
    %v2558 = vpop.permute.xlu0 %2557
    %v2559 = vsel %vm381, %v2556, 0
    %v2561 = vsel %vm381, %v2558, 0
    %2563 = vmatpush.xpose.msra.mxu0 0.0
    %2564 = vmatpush.xpose.msra.mxu0 0.0
    %2565 = vmatpush.xpose.msra.mxu0 0.0
    %2566 = vmatpush.xpose.msra.mxu0 0.0
    %2567 = vmatpush.xpose.msra.mxu0 0.0
    %2568 = vmatpush.xpose.msra.mxu0 0.0
    %2569 = vmatpush.xpose.msra.mxu0 0.0
    %2570 = vmatpush.xpose.msra.mxu0 0.0
    %2571 = vmatpush.xpose.msra.mxu0 0.0
    %2572 = vmatpush.xpose.msra.mxu0 0.0
    %2573 = vmatpush.xpose.msra.mxu0 0.0
    %2574 = vmatpush.xpose.msra.mxu0 0.0
    %2575 = vmatpush.xpose.msra.mxu0 0.0
    %2576 = vmatpush.xpose.msra.mxu0 0.0
    %2577 = vmatpush.xpose.msra.mxu0 0.0
    %2578 = vmatpush.xpose.msra.mxu0 %v2561
    %2579 = vmatmul.f32.gmra.mxu0 %v2559
    %v2580 = vpop.f32.mrf.mxu0
    %v2581 = vadd.f32 0.0, %v2580
    %2582 = vdwg.mxu0
    %v2583 = vsel %vm381, %v2553, -inf
    %2584 = vmax.xlane.f32.xlu0 %v2583
    %v2585 = vpop.xlane.xlu0 %2584
    %v2586 = vsel %vm381, %v2581, -inf
    %2587 = vmax.xlane.f32.xlu0 %v2586
    %v2588 = vpop.xlane.xlu0 %2587
    %v2589 = vsub.f32 %v2553, %v2585
    %v2590 = vsub.f32 %v2581, %v2588
    %v2591 = vmul.f32 %v2589, 1.442695
    %v2592 = vpow.pop %v2591
    %v2593 = vmul.f32 %v2590, 1.442695
    %v2594 = vpow.pop %v2593
    %v2595 = vsel %vm381, %v2592, 0.0
    %2596 = vadd.xlane.f32.xlu0 %v2595
    %v2597 = vpop.xlane.xlu0 %2596
    %v2598 = vsel %vm381, %v2594, 0.0
    %2599 = vadd.xlane.f32.xlu0 %v2598
    %v2600 = vpop.xlane.xlu0 %2599
    %v2601 = vrcp.pop %v2597
    %v2602 = vrcp.pop %v2600
    %v2603 = vmul.f32 %v2592, %v2601
    %v2604 = vmul.f32 %v2594, %v2602
    %2605 = vrot.lane.b32.xlu0 %v2038, 40
    %v2606 = vpop.permute.xlu0 %2605
    %v2609 = vsel %vm381, %v2603, 0
    %2611 = vmatpush.msra.mxu0 0.0
    %2612 = vmatpush.msra.mxu0 0.0
    %2613 = vmatpush.msra.mxu0 0.0
    %2614 = vmatpush.msra.mxu0 0.0
    %2615 = vmatpush.msra.mxu0 0.0
    %2616 = vmatpush.msra.mxu0 0.0
    %2617 = vmatpush.msra.mxu0 0.0
    %2618 = vmatpush.msra.mxu0 0.0
    %2619 = vmatpush.msra.mxu0 0.0
    %2620 = vmatpush.msra.mxu0 0.0
    %2621 = vmatpush.msra.mxu0 0.0
    %2622 = vmatpush.msra.mxu0 0.0
    %2623 = vmatpush.msra.mxu0 0.0
    %2624 = vmatpush.msra.mxu0 0.0
    %2625 = vmatpush.msra.mxu0 0.0
    %2626 = vmatpush.msra.mxu0 %v2606
    %2627 = vmatmul.f32.gmra.mxu0 %v2609
    %v2628 = vpop.f32.mrf.mxu0
    %v2629 = vadd.f32 0.0, %v2628
    %2630 = vdwg.mxu0
    %2631 = vrot.lane.b32.xlu0 %v2041, 40
    %v2632 = vpop.permute.xlu0 %2631
    %v2635 = vsel %vm381, %v2604, 0
    %2637 = vmatpush.msra.mxu0 0.0
    %2638 = vmatpush.msra.mxu0 0.0
    %2639 = vmatpush.msra.mxu0 0.0
    %2640 = vmatpush.msra.mxu0 0.0
    %2641 = vmatpush.msra.mxu0 0.0
    %2642 = vmatpush.msra.mxu0 0.0
    %2643 = vmatpush.msra.mxu0 0.0
    %2644 = vmatpush.msra.mxu0 0.0
    %2645 = vmatpush.msra.mxu0 0.0
    %2646 = vmatpush.msra.mxu0 0.0
    %2647 = vmatpush.msra.mxu0 0.0
    %2648 = vmatpush.msra.mxu0 0.0
    %2649 = vmatpush.msra.mxu0 0.0
    %2650 = vmatpush.msra.mxu0 0.0
    %2651 = vmatpush.msra.mxu0 0.0
    %2652 = vmatpush.msra.mxu0 %v2632
    %2653 = vmatmul.f32.gmra.mxu0 %v2635
    %v2654 = vpop.f32.mrf.mxu0
    %v2655 = vadd.f32 0.0, %v2654
    %2656 = vdwg.mxu0
    %v2658 = vsel %vm381, %v2629, 0
    %v2661 = vsel %vm381, %v2655, 0
    %2663 = vmatpush.msra.mxu0 0.0
    %2664 = vmatpush.msra.mxu0 0.0
    %2665 = vmatpush.msra.mxu0 0.0
    %2666 = vmatpush.msra.mxu0 0.0
    %2667 = vmatpush.msra.mxu0 0.0
    %2668 = vmatpush.msra.mxu0 0.0
    %2669 = vmatpush.msra.mxu0 0.0
    %2670 = vmatpush.msra.mxu0 0.0
    %2671 = vmatpush.msra.mxu0 0.0
    %2672 = vmatpush.msra.mxu0 0.0
    %2673 = vmatpush.msra.mxu0 0.0
    %2674 = vmatpush.msra.mxu0 0.0
    %2675 = vmatpush.msra.mxu0 0.0
    %2676 = vmatpush.msra.mxu0 0.0
    %2677 = vmatpush.msra.mxu0 0.0
    %2678 = vmatpush.msra.mxu0 %v2047
    %2679 = vmatmul.f32.gmra.mxu0 %v2658
    %v2680 = vpop.f32.mrf.mxu0
    %v2681 = vadd.f32 0.0, %v2680
    %2682 = vmatmul.f32.gmra.mxu0 %v2661
    %v2683 = vpop.f32.mrf.mxu0
    %v2684 = vadd.f32 0.0, %v2683
    %2685 = vdwg.mxu0
    %v2686 = vadd.f32 %v2525, %v2681
    %v2687 = vadd.f32 %v2526, %v2684
    %v2689 = vperm.slane %v2049, 0
    %v2691 = vadd.f32 %v2686, %v2689
    %v2692 = vadd.f32 %v2687, %v2689
    %v2693 = vadd.f32 %v2691, %v2002
    %v2694 = vadd.f32 %v2692, %v2003
    %s2695 = scalar_lea.vmem [#allocation10], 1
    %v2696 = vld [vmem:[%s2695] sm:$0x1]
    %s2697 = scalar_lea.vmem [#allocation11], 1
    %v2698 = vld [vmem:[%s2697] sm:$0x1]
    %v2699 = vsel %vm343, %v2693, 0.0
    %2700 = vadd.xlane.f32.xlu0 %v2699
    %v2701 = vpop.xlane.xlu0 %2700
    %v2702 = vsel %vm343, %v2694, 0.0
    %2703 = vadd.xlane.f32.xlu0 %v2702
    %v2704 = vpop.xlane.xlu0 %2703
    %v2705 = vmul.f32 %v2701, %v1038
    %v2706 = vmul.f32 %v2704, %v1038
    %v2707 = vsub.f32 %v2693, %v2705
    %v2708 = vsub.f32 %v2694, %v2706
    %v2709 = vmul.f32 %v2707, %v2707
    %v2710 = vmul.f32 %v2708, %v2708
    %v2711 = vsel %vm343, %v2709, 0.0
    %2712 = vadd.xlane.f32.xlu0 %v2711
    %v2713 = vpop.xlane.xlu0 %2712
    %v2714 = vsel %vm343, %v2710, 0.0
    %2715 = vadd.xlane.f32.xlu0 %v2714
    %v2716 = vpop.xlane.xlu0 %2715
    %v2717 = vmul.f32 %v2713, %v1038
    %v2718 = vmul.f32 %v2716, %v1038
    %v2719 = vadd.f32 %v2717, 1e-05
    %v2720 = vadd.f32 %v2718, 1e-05
    %v2721 = vrsqrt.pop %v2719
    %v2722 = vmul.f32 %v2721, %v2719
    %v2723 = vmul.f32 %v2722, %v2721
    %v2724 = vmul.f32 0.5, %v2723
    %v2725 = vsub.f32 1.5, %v2724
    %v2726 = vmul.f32 %v2721, %v2725
    %vm2727 = vweird.f32 %v2719
    %vm2728 = vweird.f32 %v2721
    %vm2729 = vmor %vm2727, %vm2728
    %v2730 = vsel %vm2729, %v2721, %v2726
    %v2731 = vrsqrt.pop %v2720
    %v2732 = vmul.f32 %v2731, %v2720
    %v2733 = vmul.f32 %v2732, %v2731
    %v2734 = vmul.f32 0.5, %v2733
    %v2735 = vsub.f32 1.5, %v2734
    %v2736 = vmul.f32 %v2731, %v2735
    %vm2737 = vweird.f32 %v2720
    %vm2738 = vweird.f32 %v2731
    %vm2739 = vmor %vm2737, %vm2738
    %v2740 = vsel %vm2739, %v2731, %v2736
    %v2741 = vmul.f32 %v2707, %v2730
    %v2742 = vmul.f32 %v2708, %v2740
    %v2744 = vperm.slane %v2696, 0
    %v2746 = vmul.f32 %v2741, %v2744
    %v2747 = vmul.f32 %v2742, %v2744
    %v2749 = vperm.slane %v2698, 0
    %v2751 = vadd.f32 %v2746, %v2749
    %v2752 = vadd.f32 %v2747, %v2749
    %s2753 = scalar_lea.vmem %s9, 32
    %v2754 = vld [vmem:[%s2753] sm:$0xff]
    %v2755 = vld [vmem:[%s2753 + $0x8] sm:$0xff]
    %v2756 = vld [vmem:[%s2753 + $0x10] sm:$0xff]
    %v2757 = vld [vmem:[%s2753 + $0x18] sm:$0xff]
    %s2758 = scalar_lea.vmem [#allocation13], 1
    %v2759 = vld [vmem:[%s2758] sm:$0x1]
    %v2761 = vperm.slane %v2759, 0
    %v2764 = vsel %vm343, %v2751, 0
    %v2767 = vsel %vm343, %v2752, 0
    %2769 = vmatpush.msra.mxu0 0.0
    %2770 = vmatpush.msra.mxu0 0.0
    %2771 = vmatpush.msra.mxu0 0.0
    %2772 = vmatpush.msra.mxu0 0.0
    %2773 = vmatpush.msra.mxu0 0.0
    %2774 = vmatpush.msra.mxu0 0.0
    %2775 = vmatpush.msra.mxu0 0.0
    %2776 = vmatpush.msra.mxu0 0.0
    %2777 = vmatpush.msra.mxu0 0.0
    %2778 = vmatpush.msra.mxu0 0.0
    %2779 = vmatpush.msra.mxu0 0.0
    %2780 = vmatpush.msra.mxu0 0.0
    %2781 = vmatpush.msra.mxu0 %v2757
    %2782 = vmatpush.msra.mxu0 %v2756
    %2783 = vmatpush.msra.mxu0 %v2755
    %2784 = vmatpush.msra.mxu0 %v2754
    %2785 = vmatmul.f32.gmra.mxu0 %v2764
    %v2786 = vpop.f32.mrf.mxu0
    %v2787 = vadd.f32 %v2761, %v2786
    %2788 = vmatmul.f32.gmra.mxu0 %v2767
    %v2789 = vpop.f32.mrf.mxu0
    %v2790 = vadd.f32 %v2761, %v2789
    %2791 = vdwg.mxu0
    %s2792 = scalar_lea.vmem [#allocation14], 32
    %v2793 = vld [vmem:[%s2792] sm:$0xff]
    %v2794 = vld [vmem:[%s2792 + $0x8] sm:$0xff]
    %v2795 = vld [vmem:[%s2792 + $0x10] sm:$0xff]
    %v2796 = vld [vmem:[%s2792 + $0x18] sm:$0xff]
    %s2797 = scalar_lea.vmem [#allocation16], 1
    %v2798 = vld [vmem:[%s2797] sm:$0x1]
    %v2800 = vperm.slane %v2798, 0
    %2802 = vmatpush.msra.mxu0 0.0
    %2803 = vmatpush.msra.mxu0 0.0
    %2804 = vmatpush.msra.mxu0 0.0
    %2805 = vmatpush.msra.mxu0 0.0
    %2806 = vmatpush.msra.mxu0 0.0
    %2807 = vmatpush.msra.mxu0 0.0
    %2808 = vmatpush.msra.mxu0 0.0
    %2809 = vmatpush.msra.mxu0 0.0
    %2810 = vmatpush.msra.mxu0 0.0
    %2811 = vmatpush.msra.mxu0 0.0
    %2812 = vmatpush.msra.mxu0 0.0
    %2813 = vmatpush.msra.mxu0 0.0
    %2814 = vmatpush.msra.mxu0 %v2796
    %2815 = vmatpush.msra.mxu0 %v2795
    %2816 = vmatpush.msra.mxu0 %v2794
    %2817 = vmatpush.msra.mxu0 %v2793
    %2818 = vmatmul.f32.gmra.mxu0 %v1133
    %v2819 = vpop.f32.mrf.mxu0
    %v2820 = vadd.f32 %v2800, %v2819
    %2821 = vmatmul.f32.gmra.mxu0 %v1136
    %v2822 = vpop.f32.mrf.mxu0
    %v2823 = vadd.f32 %v2800, %v2822
    %2824 = vdwg.mxu0
    %s2825 = scalar_lea.vmem [#allocation17], 32
    %v2826 = vld [vmem:[%s2825] sm:$0xff]
    %v2827 = vld [vmem:[%s2825 + $0x8] sm:$0xff]
    %v2828 = vld [vmem:[%s2825 + $0x10] sm:$0xff]
    %v2829 = vld [vmem:[%s2825 + $0x18] sm:$0xff]
    %s2830 = scalar_lea.vmem [#allocation19], 1
    %v2831 = vld [vmem:[%s2830] sm:$0x1]
    %v2833 = vsel %vm381, %v2787, 0
    %v2836 = vsel %vm381, %v2820, 0
    %2838 = vmatpush.xpose.msra.mxu0 0.0
    %2839 = vmatpush.xpose.msra.mxu0 0.0
    %2840 = vmatpush.xpose.msra.mxu0 0.0
    %2841 = vmatpush.xpose.msra.mxu0 0.0
    %2842 = vmatpush.xpose.msra.mxu0 0.0
    %2843 = vmatpush.xpose.msra.mxu0 0.0
    %2844 = vmatpush.xpose.msra.mxu0 0.0
    %2845 = vmatpush.xpose.msra.mxu0 0.0
    %2846 = vmatpush.xpose.msra.mxu0 0.0
    %2847 = vmatpush.xpose.msra.mxu0 0.0
    %2848 = vmatpush.xpose.msra.mxu0 0.0
    %2849 = vmatpush.xpose.msra.mxu0 0.0
    %2850 = vmatpush.xpose.msra.mxu0 0.0
    %2851 = vmatpush.xpose.msra.mxu0 0.0
    %2852 = vmatpush.xpose.msra.mxu0 0.0
    %2853 = vmatpush.xpose.msra.mxu0 %v2836
    %2854 = vmatmul.f32.gmra.mxu0 %v2833
    %v2855 = vpop.f32.mrf.mxu0
    %v2856 = vadd.f32 0.0, %v2855
    %2857 = vdwg.mxu0
    %v2859 = vsel %vm381, %v2790, 0
    %v2862 = vsel %vm381, %v2823, 0
    %2864 = vmatpush.xpose.msra.mxu0 0.0
    %2865 = vmatpush.xpose.msra.mxu0 0.0
    %2866 = vmatpush.xpose.msra.mxu0 0.0
    %2867 = vmatpush.xpose.msra.mxu0 0.0
    %2868 = vmatpush.xpose.msra.mxu0 0.0
    %2869 = vmatpush.xpose.msra.mxu0 0.0
    %2870 = vmatpush.xpose.msra.mxu0 0.0
    %2871 = vmatpush.xpose.msra.mxu0 0.0
    %2872 = vmatpush.xpose.msra.mxu0 0.0
    %2873 = vmatpush.xpose.msra.mxu0 0.0
    %2874 = vmatpush.xpose.msra.mxu0 0.0
    %2875 = vmatpush.xpose.msra.mxu0 0.0
    %2876 = vmatpush.xpose.msra.mxu0 0.0
    %2877 = vmatpush.xpose.msra.mxu0 0.0
    %2878 = vmatpush.xpose.msra.mxu0 0.0
    %2879 = vmatpush.xpose.msra.mxu0 %v2862
    %2880 = vmatmul.f32.gmra.mxu0 %v2859
    %v2881 = vpop.f32.mrf.mxu0
    %v2882 = vadd.f32 0.0, %v2881
    %2883 = vdwg.mxu0
    %v2884 = vsel %vm381, %v2856, -inf
    %2885 = vmax.xlane.f32.xlu0 %v2884
    %v2886 = vpop.xlane.xlu0 %2885
    %v2887 = vsel %vm381, %v2882, -inf
    %2888 = vmax.xlane.f32.xlu0 %v2887
    %v2889 = vpop.xlane.xlu0 %2888
    %v2890 = vsub.f32 %v2856, %v2886
    %v2891 = vsub.f32 %v2882, %v2889
    %v2892 = vmul.f32 %v2890, 1.442695
    %v2893 = vpow.pop %v2892
    %v2894 = vmul.f32 %v2891, 1.442695
    %v2895 = vpow.pop %v2894
    %v2896 = vsel %vm381, %v2893, 0.0
    %2897 = vadd.xlane.f32.xlu0 %v2896
    %v2898 = vpop.xlane.xlu0 %2897
    %v2899 = vsel %vm381, %v2895, 0.0
    %2900 = vadd.xlane.f32.xlu0 %v2899
    %v2901 = vpop.xlane.xlu0 %2900
    %v2902 = vrcp.pop %v2898
    %v2903 = vrcp.pop %v2901
    %v2904 = vmul.f32 %v2893, %v2902
    %v2905 = vmul.f32 %v2895, %v2903
    %2906 = vrot.lane.b32.xlu0 %v2820, 96
    %v2907 = vpop.permute.xlu0 %2906
    %v2910 = vsel %vm381, %v2904, 0
    %2912 = vmatpush.msra.mxu0 0.0
    %2913 = vmatpush.msra.mxu0 0.0
    %2914 = vmatpush.msra.mxu0 0.0
    %2915 = vmatpush.msra.mxu0 0.0
    %2916 = vmatpush.msra.mxu0 0.0
    %2917 = vmatpush.msra.mxu0 0.0
    %2918 = vmatpush.msra.mxu0 0.0
    %2919 = vmatpush.msra.mxu0 0.0
    %2920 = vmatpush.msra.mxu0 0.0
    %2921 = vmatpush.msra.mxu0 0.0
    %2922 = vmatpush.msra.mxu0 0.0
    %2923 = vmatpush.msra.mxu0 0.0
    %2924 = vmatpush.msra.mxu0 0.0
    %2925 = vmatpush.msra.mxu0 0.0
    %2926 = vmatpush.msra.mxu0 0.0
    %2927 = vmatpush.msra.mxu0 %v2907
    %2928 = vmatmul.f32.gmra.mxu0 %v2910
    %v2929 = vpop.f32.mrf.mxu0
    %v2930 = vadd.f32 0.0, %v2929
    %2931 = vdwg.mxu0
    %2932 = vrot.lane.b32.xlu0 %v2823, 96
    %v2933 = vpop.permute.xlu0 %2932
    %v2936 = vsel %vm381, %v2905, 0
    %2938 = vmatpush.msra.mxu0 0.0
    %2939 = vmatpush.msra.mxu0 0.0
    %2940 = vmatpush.msra.mxu0 0.0
    %2941 = vmatpush.msra.mxu0 0.0
    %2942 = vmatpush.msra.mxu0 0.0
    %2943 = vmatpush.msra.mxu0 0.0
    %2944 = vmatpush.msra.mxu0 0.0
    %2945 = vmatpush.msra.mxu0 0.0
    %2946 = vmatpush.msra.mxu0 0.0
    %2947 = vmatpush.msra.mxu0 0.0
    %2948 = vmatpush.msra.mxu0 0.0
    %2949 = vmatpush.msra.mxu0 0.0
    %2950 = vmatpush.msra.mxu0 0.0
    %2951 = vmatpush.msra.mxu0 0.0
    %2952 = vmatpush.msra.mxu0 0.0
    %2953 = vmatpush.msra.mxu0 %v2933
    %2954 = vmatmul.f32.gmra.mxu0 %v2936
    %v2955 = vpop.f32.mrf.mxu0
    %v2956 = vadd.f32 0.0, %v2955
    %2957 = vdwg.mxu0
    %2958 = vrot.lane.b32.xlu0 %v2787, 120
    %v2959 = vpop.permute.xlu0 %2958
    %2960 = vrot.lane.b32.xlu0 %v2820, 120
    %v2961 = vpop.permute.xlu0 %2960
    %v2962 = vsel %vm381, %v2959, 0
    %v2964 = vsel %vm381, %v2961, 0
    %2966 = vmatpush.xpose.msra.mxu0 0.0
    %2967 = vmatpush.xpose.msra.mxu0 0.0
    %2968 = vmatpush.xpose.msra.mxu0 0.0
    %2969 = vmatpush.xpose.msra.mxu0 0.0
    %2970 = vmatpush.xpose.msra.mxu0 0.0
    %2971 = vmatpush.xpose.msra.mxu0 0.0
    %2972 = vmatpush.xpose.msra.mxu0 0.0
    %2973 = vmatpush.xpose.msra.mxu0 0.0
    %2974 = vmatpush.xpose.msra.mxu0 0.0
    %2975 = vmatpush.xpose.msra.mxu0 0.0
    %2976 = vmatpush.xpose.msra.mxu0 0.0
    %2977 = vmatpush.xpose.msra.mxu0 0.0
    %2978 = vmatpush.xpose.msra.mxu0 0.0
    %2979 = vmatpush.xpose.msra.mxu0 0.0
    %2980 = vmatpush.xpose.msra.mxu0 0.0
    %2981 = vmatpush.xpose.msra.mxu0 %v2964
    %2982 = vmatmul.f32.gmra.mxu0 %v2962
    %v2983 = vpop.f32.mrf.mxu0
    %v2984 = vadd.f32 0.0, %v2983
    %2985 = vdwg.mxu0
    %2986 = vrot.lane.b32.xlu0 %v2790, 120
    %v2987 = vpop.permute.xlu0 %2986
    %2988 = vrot.lane.b32.xlu0 %v2823, 120
    %v2989 = vpop.permute.xlu0 %2988
    %v2990 = vsel %vm381, %v2987, 0
    %v2992 = vsel %vm381, %v2989, 0
    %2994 = vmatpush.xpose.msra.mxu0 0.0
    %2995 = vmatpush.xpose.msra.mxu0 0.0
    %2996 = vmatpush.xpose.msra.mxu0 0.0
    %2997 = vmatpush.xpose.msra.mxu0 0.0
    %2998 = vmatpush.xpose.msra.mxu0 0.0
    %2999 = vmatpush.xpose.msra.mxu0 0.0
    %3000 = vmatpush.xpose.msra.mxu0 0.0
    %3001 = vmatpush.xpose.msra.mxu0 0.0
    %3002 = vmatpush.xpose.msra.mxu0 0.0
    %3003 = vmatpush.xpose.msra.mxu0 0.0
    %3004 = vmatpush.xpose.msra.mxu0 0.0
    %3005 = vmatpush.xpose.msra.mxu0 0.0
    %3006 = vmatpush.xpose.msra.mxu0 0.0
    %3007 = vmatpush.xpose.msra.mxu0 0.0
    %3008 = vmatpush.xpose.msra.mxu0 0.0
    %3009 = vmatpush.xpose.msra.mxu0 %v2992
    %3010 = vmatmul.f32.gmra.mxu0 %v2990
    %v3011 = vpop.f32.mrf.mxu0
    %v3012 = vadd.f32 0.0, %v3011
    %3013 = vdwg.mxu0
    %v3014 = vsel %vm381, %v2984, -inf
    %3015 = vmax.xlane.f32.xlu0 %v3014
    %v3016 = vpop.xlane.xlu0 %3015
    %v3017 = vsel %vm381, %v3012, -inf
    %3018 = vmax.xlane.f32.xlu0 %v3017
    %v3019 = vpop.xlane.xlu0 %3018
    %v3020 = vsub.f32 %v2984, %v3016
    %v3021 = vsub.f32 %v3012, %v3019
    %v3022 = vmul.f32 %v3020, 1.442695
    %v3023 = vpow.pop %v3022
    %v3024 = vmul.f32 %v3021, 1.442695
    %v3025 = vpow.pop %v3024
    %v3026 = vsel %vm381, %v3023, 0.0
    %3027 = vadd.xlane.f32.xlu0 %v3026
    %v3028 = vpop.xlane.xlu0 %3027
    %v3029 = vsel %vm381, %v3025, 0.0
    %3030 = vadd.xlane.f32.xlu0 %v3029
    %v3031 = vpop.xlane.xlu0 %3030
    %v3032 = vrcp.pop %v3028
    %v3033 = vrcp.pop %v3031
    %v3034 = vmul.f32 %v3023, %v3032
    %v3035 = vmul.f32 %v3025, %v3033
    %3036 = vrot.lane.b32.xlu0 %v2820, 88
    %v3037 = vpop.permute.xlu0 %3036
    %v3040 = vsel %vm381, %v3034, 0
    %3042 = vmatpush.msra.mxu0 0.0
    %3043 = vmatpush.msra.mxu0 0.0
    %3044 = vmatpush.msra.mxu0 0.0
    %3045 = vmatpush.msra.mxu0 0.0
    %3046 = vmatpush.msra.mxu0 0.0
    %3047 = vmatpush.msra.mxu0 0.0
    %3048 = vmatpush.msra.mxu0 0.0
    %3049 = vmatpush.msra.mxu0 0.0
    %3050 = vmatpush.msra.mxu0 0.0
    %3051 = vmatpush.msra.mxu0 0.0
    %3052 = vmatpush.msra.mxu0 0.0
    %3053 = vmatpush.msra.mxu0 0.0
    %3054 = vmatpush.msra.mxu0 0.0
    %3055 = vmatpush.msra.mxu0 0.0
    %3056 = vmatpush.msra.mxu0 0.0
    %3057 = vmatpush.msra.mxu0 %v3037
    %3058 = vmatmul.f32.gmra.mxu0 %v3040
    %v3059 = vpop.f32.mrf.mxu0
    %v3060 = vadd.f32 0.0, %v3059
    %3061 = vdwg.mxu0
    %3062 = vrot.lane.b32.xlu0 %v2823, 88
    %v3063 = vpop.permute.xlu0 %3062
    %v3066 = vsel %vm381, %v3035, 0
    %3068 = vmatpush.msra.mxu0 0.0
    %3069 = vmatpush.msra.mxu0 0.0
    %3070 = vmatpush.msra.mxu0 0.0
    %3071 = vmatpush.msra.mxu0 0.0
    %3072 = vmatpush.msra.mxu0 0.0
    %3073 = vmatpush.msra.mxu0 0.0
    %3074 = vmatpush.msra.mxu0 0.0
    %3075 = vmatpush.msra.mxu0 0.0
    %3076 = vmatpush.msra.mxu0 0.0
    %3077 = vmatpush.msra.mxu0 0.0
    %3078 = vmatpush.msra.mxu0 0.0
    %3079 = vmatpush.msra.mxu0 0.0
    %3080 = vmatpush.msra.mxu0 0.0
    %3081 = vmatpush.msra.mxu0 0.0
    %3082 = vmatpush.msra.mxu0 0.0
    %3083 = vmatpush.msra.mxu0 %v3063
    %3084 = vmatmul.f32.gmra.mxu0 %v3066
    %v3085 = vpop.f32.mrf.mxu0
    %v3086 = vadd.f32 0.0, %v3085
    %3087 = vdwg.mxu0
    %v3089 = vsel %vm381, %v3060, 0
    %v3092 = vsel %vm381, %v3086, 0
    %3094 = vmatpush.msra.mxu0 0.0
    %3095 = vmatpush.msra.mxu0 0.0
    %3096 = vmatpush.msra.mxu0 0.0
    %3097 = vmatpush.msra.mxu0 0.0
    %3098 = vmatpush.msra.mxu0 0.0
    %3099 = vmatpush.msra.mxu0 0.0
    %3100 = vmatpush.msra.mxu0 0.0
    %3101 = vmatpush.msra.mxu0 0.0
    %3102 = vmatpush.msra.mxu0 0.0
    %3103 = vmatpush.msra.mxu0 0.0
    %3104 = vmatpush.msra.mxu0 0.0
    %3105 = vmatpush.msra.mxu0 0.0
    %3106 = vmatpush.msra.mxu0 0.0
    %3107 = vmatpush.msra.mxu0 0.0
    %3108 = vmatpush.msra.mxu0 0.0
    %3109 = vmatpush.msra.mxu0 %v2827
    %3110 = vmatmul.f32.gmra.mxu0 %v3089
    %v3111 = vpop.f32.mrf.mxu0
    %v3112 = vadd.f32 0.0, %v3111
    %3113 = vmatmul.f32.gmra.mxu0 %v3092
    %v3114 = vpop.f32.mrf.mxu0
    %v3115 = vadd.f32 0.0, %v3114
    %3116 = vdwg.mxu0
    %v3118 = vsel %vm381, %v2930, 0
    %v3121 = vsel %vm381, %v2956, 0
    %3123 = vmatpush.msra.mxu0 0.0
    %3124 = vmatpush.msra.mxu0 0.0
    %3125 = vmatpush.msra.mxu0 0.0
    %3126 = vmatpush.msra.mxu0 0.0
    %3127 = vmatpush.msra.mxu0 0.0
    %3128 = vmatpush.msra.mxu0 0.0
    %3129 = vmatpush.msra.mxu0 0.0
    %3130 = vmatpush.msra.mxu0 0.0
    %3131 = vmatpush.msra.mxu0 0.0
    %3132 = vmatpush.msra.mxu0 0.0
    %3133 = vmatpush.msra.mxu0 0.0
    %3134 = vmatpush.msra.mxu0 0.0
    %3135 = vmatpush.msra.mxu0 0.0
    %3136 = vmatpush.msra.mxu0 0.0
    %3137 = vmatpush.msra.mxu0 0.0
    %3138 = vmatpush.msra.mxu0 %v2826
    %3139 = vmatmul.f32.gmra.mxu0 %v3118
    %v3140 = vpop.f32.mrf.mxu0
    %v3141 = vadd.f32 %v3112, %v3140
    %3142 = vmatmul.f32.gmra.mxu0 %v3121
    %v3143 = vpop.f32.mrf.mxu0
    %v3144 = vadd.f32 %v3115, %v3143
    %3145 = vdwg.mxu0
    %3146 = vrot.lane.b32.xlu0 %v2787, 112
    %v3147 = vpop.permute.xlu0 %3146
    %3148 = vrot.lane.b32.xlu0 %v2820, 112
    %v3149 = vpop.permute.xlu0 %3148
    %v3150 = vsel %vm381, %v3147, 0
    %v3152 = vsel %vm381, %v3149, 0
    %3154 = vmatpush.xpose.msra.mxu0 0.0
    %3155 = vmatpush.xpose.msra.mxu0 0.0
    %3156 = vmatpush.xpose.msra.mxu0 0.0
    %3157 = vmatpush.xpose.msra.mxu0 0.0
    %3158 = vmatpush.xpose.msra.mxu0 0.0
    %3159 = vmatpush.xpose.msra.mxu0 0.0
    %3160 = vmatpush.xpose.msra.mxu0 0.0
    %3161 = vmatpush.xpose.msra.mxu0 0.0
    %3162 = vmatpush.xpose.msra.mxu0 0.0
    %3163 = vmatpush.xpose.msra.mxu0 0.0
    %3164 = vmatpush.xpose.msra.mxu0 0.0
    %3165 = vmatpush.xpose.msra.mxu0 0.0
    %3166 = vmatpush.xpose.msra.mxu0 0.0
    %3167 = vmatpush.xpose.msra.mxu0 0.0
    %3168 = vmatpush.xpose.msra.mxu0 0.0
    %3169 = vmatpush.xpose.msra.mxu0 %v3152
    %3170 = vmatmul.f32.gmra.mxu0 %v3150
    %v3171 = vpop.f32.mrf.mxu0
    %v3172 = vadd.f32 0.0, %v3171
    %3173 = vdwg.mxu0
    %3174 = vrot.lane.b32.xlu0 %v2790, 112
    %v3175 = vpop.permute.xlu0 %3174
    %3176 = vrot.lane.b32.xlu0 %v2823, 112
    %v3177 = vpop.permute.xlu0 %3176
    %v3178 = vsel %vm381, %v3175, 0
    %v3180 = vsel %vm381, %v3177, 0
    %3182 = vmatpush.xpose.msra.mxu0 0.0
    %3183 = vmatpush.xpose.msra.mxu0 0.0
    %3184 = vmatpush.xpose.msra.mxu0 0.0
    %3185 = vmatpush.xpose.msra.mxu0 0.0
    %3186 = vmatpush.xpose.msra.mxu0 0.0
    %3187 = vmatpush.xpose.msra.mxu0 0.0
    %3188 = vmatpush.xpose.msra.mxu0 0.0
    %3189 = vmatpush.xpose.msra.mxu0 0.0
    %3190 = vmatpush.xpose.msra.mxu0 0.0
    %3191 = vmatpush.xpose.msra.mxu0 0.0
    %3192 = vmatpush.xpose.msra.mxu0 0.0
    %3193 = vmatpush.xpose.msra.mxu0 0.0
    %3194 = vmatpush.xpose.msra.mxu0 0.0
    %3195 = vmatpush.xpose.msra.mxu0 0.0
    %3196 = vmatpush.xpose.msra.mxu0 0.0
    %3197 = vmatpush.xpose.msra.mxu0 %v3180
    %3198 = vmatmul.f32.gmra.mxu0 %v3178
    %v3199 = vpop.f32.mrf.mxu0
    %v3200 = vadd.f32 0.0, %v3199
    %3201 = vdwg.mxu0
    %v3202 = vsel %vm381, %v3172, -inf
    %3203 = vmax.xlane.f32.xlu0 %v3202
    %v3204 = vpop.xlane.xlu0 %3203
    %v3205 = vsel %vm381, %v3200, -inf
    %3206 = vmax.xlane.f32.xlu0 %v3205
    %v3207 = vpop.xlane.xlu0 %3206
    %v3208 = vsub.f32 %v3172, %v3204
    %v3209 = vsub.f32 %v3200, %v3207
    %v3210 = vmul.f32 %v3208, 1.442695
    %v3211 = vpow.pop %v3210
    %v3212 = vmul.f32 %v3209, 1.442695
    %v3213 = vpow.pop %v3212
    %v3214 = vsel %vm381, %v3211, 0.0
    %3215 = vadd.xlane.f32.xlu0 %v3214
    %v3216 = vpop.xlane.xlu0 %3215
    %v3217 = vsel %vm381, %v3213, 0.0
    %3218 = vadd.xlane.f32.xlu0 %v3217
    %v3219 = vpop.xlane.xlu0 %3218
    %v3220 = vrcp.pop %v3216
    %v3221 = vrcp.pop %v3219
    %v3222 = vmul.f32 %v3211, %v3220
    %v3223 = vmul.f32 %v3213, %v3221
    %3224 = vrot.lane.b32.xlu0 %v2820, 80
    %v3225 = vpop.permute.xlu0 %3224
    %v3228 = vsel %vm381, %v3222, 0
    %3230 = vmatpush.msra.mxu0 0.0
    %3231 = vmatpush.msra.mxu0 0.0
    %3232 = vmatpush.msra.mxu0 0.0
    %3233 = vmatpush.msra.mxu0 0.0
    %3234 = vmatpush.msra.mxu0 0.0
    %3235 = vmatpush.msra.mxu0 0.0
    %3236 = vmatpush.msra.mxu0 0.0
    %3237 = vmatpush.msra.mxu0 0.0
    %3238 = vmatpush.msra.mxu0 0.0
    %3239 = vmatpush.msra.mxu0 0.0
    %3240 = vmatpush.msra.mxu0 0.0
    %3241 = vmatpush.msra.mxu0 0.0
    %3242 = vmatpush.msra.mxu0 0.0
    %3243 = vmatpush.msra.mxu0 0.0
    %3244 = vmatpush.msra.mxu0 0.0
    %3245 = vmatpush.msra.mxu0 %v3225
    %3246 = vmatmul.f32.gmra.mxu0 %v3228
    %v3247 = vpop.f32.mrf.mxu0
    %v3248 = vadd.f32 0.0, %v3247
    %3249 = vdwg.mxu0
    %3250 = vrot.lane.b32.xlu0 %v2823, 80
    %v3251 = vpop.permute.xlu0 %3250
    %v3254 = vsel %vm381, %v3223, 0
    %3256 = vmatpush.msra.mxu0 0.0
    %3257 = vmatpush.msra.mxu0 0.0
    %3258 = vmatpush.msra.mxu0 0.0
    %3259 = vmatpush.msra.mxu0 0.0
    %3260 = vmatpush.msra.mxu0 0.0
    %3261 = vmatpush.msra.mxu0 0.0
    %3262 = vmatpush.msra.mxu0 0.0
    %3263 = vmatpush.msra.mxu0 0.0
    %3264 = vmatpush.msra.mxu0 0.0
    %3265 = vmatpush.msra.mxu0 0.0
    %3266 = vmatpush.msra.mxu0 0.0
    %3267 = vmatpush.msra.mxu0 0.0
    %3268 = vmatpush.msra.mxu0 0.0
    %3269 = vmatpush.msra.mxu0 0.0
    %3270 = vmatpush.msra.mxu0 0.0
    %3271 = vmatpush.msra.mxu0 %v3251
    %3272 = vmatmul.f32.gmra.mxu0 %v3254
    %v3273 = vpop.f32.mrf.mxu0
    %v3274 = vadd.f32 0.0, %v3273
    %3275 = vdwg.mxu0
    %v3277 = vsel %vm381, %v3248, 0
    %v3280 = vsel %vm381, %v3274, 0
    %3282 = vmatpush.msra.mxu0 0.0
    %3283 = vmatpush.msra.mxu0 0.0
    %3284 = vmatpush.msra.mxu0 0.0
    %3285 = vmatpush.msra.mxu0 0.0
    %3286 = vmatpush.msra.mxu0 0.0
    %3287 = vmatpush.msra.mxu0 0.0
    %3288 = vmatpush.msra.mxu0 0.0
    %3289 = vmatpush.msra.mxu0 0.0
    %3290 = vmatpush.msra.mxu0 0.0
    %3291 = vmatpush.msra.mxu0 0.0
    %3292 = vmatpush.msra.mxu0 0.0
    %3293 = vmatpush.msra.mxu0 0.0
    %3294 = vmatpush.msra.mxu0 0.0
    %3295 = vmatpush.msra.mxu0 0.0
    %3296 = vmatpush.msra.mxu0 0.0
    %3297 = vmatpush.msra.mxu0 %v2828
    %3298 = vmatmul.f32.gmra.mxu0 %v3277
    %v3299 = vpop.f32.mrf.mxu0
    %v3300 = vadd.f32 0.0, %v3299
    %3301 = vmatmul.f32.gmra.mxu0 %v3280
    %v3302 = vpop.f32.mrf.mxu0
    %v3303 = vadd.f32 0.0, %v3302
    %3304 = vdwg.mxu0
    %v3305 = vadd.f32 %v3141, %v3300
    %v3306 = vadd.f32 %v3144, %v3303
    %3307 = vrot.lane.b32.xlu0 %v2787, 104
    %v3308 = vpop.permute.xlu0 %3307
    %3309 = vrot.lane.b32.xlu0 %v2820, 104
    %v3310 = vpop.permute.xlu0 %3309
    %v3311 = vsel %vm381, %v3308, 0
    %v3313 = vsel %vm381, %v3310, 0
    %3315 = vmatpush.xpose.msra.mxu0 0.0
    %3316 = vmatpush.xpose.msra.mxu0 0.0
    %3317 = vmatpush.xpose.msra.mxu0 0.0
    %3318 = vmatpush.xpose.msra.mxu0 0.0
    %3319 = vmatpush.xpose.msra.mxu0 0.0
    %3320 = vmatpush.xpose.msra.mxu0 0.0
    %3321 = vmatpush.xpose.msra.mxu0 0.0
    %3322 = vmatpush.xpose.msra.mxu0 0.0
    %3323 = vmatpush.xpose.msra.mxu0 0.0
    %3324 = vmatpush.xpose.msra.mxu0 0.0
    %3325 = vmatpush.xpose.msra.mxu0 0.0
    %3326 = vmatpush.xpose.msra.mxu0 0.0
    %3327 = vmatpush.xpose.msra.mxu0 0.0
    %3328 = vmatpush.xpose.msra.mxu0 0.0
    %3329 = vmatpush.xpose.msra.mxu0 0.0
    %3330 = vmatpush.xpose.msra.mxu0 %v3313
    %3331 = vmatmul.f32.gmra.mxu0 %v3311
    %v3332 = vpop.f32.mrf.mxu0
    %v3333 = vadd.f32 0.0, %v3332
    %3334 = vdwg.mxu0
    %3335 = vrot.lane.b32.xlu0 %v2790, 104
    %v3336 = vpop.permute.xlu0 %3335
    %3337 = vrot.lane.b32.xlu0 %v2823, 104
    %v3338 = vpop.permute.xlu0 %3337
    %v3339 = vsel %vm381, %v3336, 0
    %v3341 = vsel %vm381, %v3338, 0
    %3343 = vmatpush.xpose.msra.mxu0 0.0
    %3344 = vmatpush.xpose.msra.mxu0 0.0
    %3345 = vmatpush.xpose.msra.mxu0 0.0
    %3346 = vmatpush.xpose.msra.mxu0 0.0
    %3347 = vmatpush.xpose.msra.mxu0 0.0
    %3348 = vmatpush.xpose.msra.mxu0 0.0
    %3349 = vmatpush.xpose.msra.mxu0 0.0
    %3350 = vmatpush.xpose.msra.mxu0 0.0
    %3351 = vmatpush.xpose.msra.mxu0 0.0
    %3352 = vmatpush.xpose.msra.mxu0 0.0
    %3353 = vmatpush.xpose.msra.mxu0 0.0
    %3354 = vmatpush.xpose.msra.mxu0 0.0
    %3355 = vmatpush.xpose.msra.mxu0 0.0
    %3356 = vmatpush.xpose.msra.mxu0 0.0
    %3357 = vmatpush.xpose.msra.mxu0 0.0
    %3358 = vmatpush.xpose.msra.mxu0 %v3341
    %3359 = vmatmul.f32.gmra.mxu0 %v3339
    %v3360 = vpop.f32.mrf.mxu0
    %v3361 = vadd.f32 0.0, %v3360
    %3362 = vdwg.mxu0
    %v3363 = vsel %vm381, %v3333, -inf
    %3364 = vmax.xlane.f32.xlu0 %v3363
    %v3365 = vpop.xlane.xlu0 %3364
    %v3366 = vsel %vm381, %v3361, -inf
    %3367 = vmax.xlane.f32.xlu0 %v3366
    %v3368 = vpop.xlane.xlu0 %3367
    %v3369 = vsub.f32 %v3333, %v3365
    %v3370 = vsub.f32 %v3361, %v3368
    %v3371 = vmul.f32 %v3369, 1.442695
    %v3372 = vpow.pop %v3371
    %v3373 = vmul.f32 %v3370, 1.442695
    %v3374 = vpow.pop %v3373
    %v3375 = vsel %vm381, %v3372, 0.0
    %3376 = vadd.xlane.f32.xlu0 %v3375
    %v3377 = vpop.xlane.xlu0 %3376
    %v3378 = vsel %vm381, %v3374, 0.0
    %3379 = vadd.xlane.f32.xlu0 %v3378
    %v3380 = vpop.xlane.xlu0 %3379
    %v3381 = vrcp.pop %v3377
    %v3382 = vrcp.pop %v3380
    %v3383 = vmul.f32 %v3372, %v3381
    %v3384 = vmul.f32 %v3374, %v3382
    %3385 = vrot.lane.b32.xlu0 %v2820, 72
    %v3386 = vpop.permute.xlu0 %3385
    %v3389 = vsel %vm381, %v3383, 0
    %3391 = vmatpush.msra.mxu0 0.0
    %3392 = vmatpush.msra.mxu0 0.0
    %3393 = vmatpush.msra.mxu0 0.0
    %3394 = vmatpush.msra.mxu0 0.0
    %3395 = vmatpush.msra.mxu0 0.0
    %3396 = vmatpush.msra.mxu0 0.0
    %3397 = vmatpush.msra.mxu0 0.0
    %3398 = vmatpush.msra.mxu0 0.0
    %3399 = vmatpush.msra.mxu0 0.0
    %3400 = vmatpush.msra.mxu0 0.0
    %3401 = vmatpush.msra.mxu0 0.0
    %3402 = vmatpush.msra.mxu0 0.0
    %3403 = vmatpush.msra.mxu0 0.0
    %3404 = vmatpush.msra.mxu0 0.0
    %3405 = vmatpush.msra.mxu0 0.0
    %3406 = vmatpush.msra.mxu0 %v3386
    %3407 = vmatmul.f32.gmra.mxu0 %v3389
    %v3408 = vpop.f32.mrf.mxu0
    %v3409 = vadd.f32 0.0, %v3408
    %3410 = vdwg.mxu0
    %3411 = vrot.lane.b32.xlu0 %v2823, 72
    %v3412 = vpop.permute.xlu0 %3411
    %v3415 = vsel %vm381, %v3384, 0
    %3417 = vmatpush.msra.mxu0 0.0
    %3418 = vmatpush.msra.mxu0 0.0
    %3419 = vmatpush.msra.mxu0 0.0
    %3420 = vmatpush.msra.mxu0 0.0
    %3421 = vmatpush.msra.mxu0 0.0
    %3422 = vmatpush.msra.mxu0 0.0
    %3423 = vmatpush.msra.mxu0 0.0
    %3424 = vmatpush.msra.mxu0 0.0
    %3425 = vmatpush.msra.mxu0 0.0
    %3426 = vmatpush.msra.mxu0 0.0
    %3427 = vmatpush.msra.mxu0 0.0
    %3428 = vmatpush.msra.mxu0 0.0
    %3429 = vmatpush.msra.mxu0 0.0
    %3430 = vmatpush.msra.mxu0 0.0
    %3431 = vmatpush.msra.mxu0 0.0
    %3432 = vmatpush.msra.mxu0 %v3412
    %3433 = vmatmul.f32.gmra.mxu0 %v3415
    %v3434 = vpop.f32.mrf.mxu0
    %v3435 = vadd.f32 0.0, %v3434
    %3436 = vdwg.mxu0
    %v3438 = vsel %vm381, %v3409, 0
    %v3441 = vsel %vm381, %v3435, 0
    %3443 = vmatpush.msra.mxu0 0.0
    %3444 = vmatpush.msra.mxu0 0.0
    %3445 = vmatpush.msra.mxu0 0.0
    %3446 = vmatpush.msra.mxu0 0.0
    %3447 = vmatpush.msra.mxu0 0.0
    %3448 = vmatpush.msra.mxu0 0.0
    %3449 = vmatpush.msra.mxu0 0.0
    %3450 = vmatpush.msra.mxu0 0.0
    %3451 = vmatpush.msra.mxu0 0.0
    %3452 = vmatpush.msra.mxu0 0.0
    %3453 = vmatpush.msra.mxu0 0.0
    %3454 = vmatpush.msra.mxu0 0.0
    %3455 = vmatpush.msra.mxu0 0.0
    %3456 = vmatpush.msra.mxu0 0.0
    %3457 = vmatpush.msra.mxu0 0.0
    %3458 = vmatpush.msra.mxu0 %v2829
    %3459 = vmatmul.f32.gmra.mxu0 %v3438
    %v3460 = vpop.f32.mrf.mxu0
    %v3461 = vadd.f32 0.0, %v3460
    %3462 = vmatmul.f32.gmra.mxu0 %v3441
    %v3463 = vpop.f32.mrf.mxu0
    %v3464 = vadd.f32 0.0, %v3463
    %3465 = vdwg.mxu0
    %v3466 = vadd.f32 %v3305, %v3461
    %v3467 = vadd.f32 %v3306, %v3464
    %v3469 = vperm.slane %v2831, 0
    %v3471 = vadd.f32 %v3466, %v3469
    %v3472 = vadd.f32 %v3467, %v3469
    %v3473 = vadd.f32 %v3471, %v2751
    %v3474 = vadd.f32 %v3472, %v2752
    %s3475 = scalar_lea.vmem %s15, 1
    %v3476 = vld [vmem:[%s3475] sm:$0x1]
    %s3477 = scalar_lea.vmem [#allocation20], 1
    %v3478 = vld [vmem:[%s3477] sm:$0x1]
    %v3479 = vsel %vm343, %v3473, 0.0
    %3480 = vadd.xlane.f32.xlu0 %v3479
    %v3481 = vpop.xlane.xlu0 %3480
    %v3482 = vsel %vm343, %v3474, 0.0
    %3483 = vadd.xlane.f32.xlu0 %v3482
    %v3484 = vpop.xlane.xlu0 %3483
    %v3485 = vmul.f32 %v3481, %v1038
    %v3486 = vmul.f32 %v3484, %v1038
    %v3487 = vsub.f32 %v3473, %v3485
    %v3488 = vsub.f32 %v3474, %v3486
    %v3489 = vmul.f32 %v3487, %v3487
    %v3490 = vmul.f32 %v3488, %v3488
    %v3491 = vsel %vm343, %v3489, 0.0
    %3492 = vadd.xlane.f32.xlu0 %v3491
    %v3493 = vpop.xlane.xlu0 %3492
    %v3494 = vsel %vm343, %v3490, 0.0
    %3495 = vadd.xlane.f32.xlu0 %v3494
    %v3496 = vpop.xlane.xlu0 %3495
    %v3497 = vmul.f32 %v3493, %v1038
    %v3498 = vmul.f32 %v3496, %v1038
    %v3499 = vadd.f32 %v3497, 1e-05
    %v3500 = vadd.f32 %v3498, 1e-05
    %v3501 = vrsqrt.pop %v3499
    %v3502 = vmul.f32 %v3501, %v3499
    %v3503 = vmul.f32 %v3502, %v3501
    %v3504 = vmul.f32 0.5, %v3503
    %v3505 = vsub.f32 1.5, %v3504
    %v3506 = vmul.f32 %v3501, %v3505
    %vm3507 = vweird.f32 %v3499
    %vm3508 = vweird.f32 %v3501
    %vm3509 = vmor %vm3507, %vm3508
    %v3510 = vsel %vm3509, %v3501, %v3506
    %v3511 = vrsqrt.pop %v3500
    %v3512 = vmul.f32 %v3511, %v3500
    %v3513 = vmul.f32 %v3512, %v3511
    %v3514 = vmul.f32 0.5, %v3513
    %v3515 = vsub.f32 1.5, %v3514
    %v3516 = vmul.f32 %v3511, %v3515
    %vm3517 = vweird.f32 %v3500
    %vm3518 = vweird.f32 %v3511
    %vm3519 = vmor %vm3517, %vm3518
    %v3520 = vsel %vm3519, %v3511, %v3516
    %v3521 = vmul.f32 %v3487, %v3510
    %v3522 = vmul.f32 %v3488, %v3520
    %v3524 = vperm.slane %v3476, 0
    %v3526 = vmul.f32 %v3521, %v3524
    %v3527 = vmul.f32 %v3522, %v3524
    %v3529 = vperm.slane %v3478, 0
    %v3531 = vadd.f32 %v3526, %v3529
    %v3532 = vadd.f32 %v3527, %v3529
    %s3533 = scalar_lea.vmem [#allocation22], 32
    %v3534 = vld [vmem:[%s3533] sm:$0xff]
    %v3535 = vld [vmem:[%s3533 + $0x8] sm:$0xff]
    %v3536 = vld [vmem:[%s3533 + $0x10] sm:$0xff]
    %v3537 = vld [vmem:[%s3533 + $0x18] sm:$0xff]
    %s3538 = scalar_lea.vmem %s18, 1
    %v3539 = vld [vmem:[%s3538] sm:$0x1]
    %v3541 = vperm.slane %v3539, 0
    %v3544 = vsel %vm343, %v3531, 0
    %v3547 = vsel %vm343, %v3532, 0
    %3549 = vmatpush.msra.mxu0 0.0
    %3550 = vmatpush.msra.mxu0 0.0
    %3551 = vmatpush.msra.mxu0 0.0
    %3552 = vmatpush.msra.mxu0 0.0
    %3553 = vmatpush.msra.mxu0 0.0
    %3554 = vmatpush.msra.mxu0 0.0
    %3555 = vmatpush.msra.mxu0 0.0
    %3556 = vmatpush.msra.mxu0 0.0
    %3557 = vmatpush.msra.mxu0 0.0
    %3558 = vmatpush.msra.mxu0 0.0
    %3559 = vmatpush.msra.mxu0 0.0
    %3560 = vmatpush.msra.mxu0 0.0
    %3561 = vmatpush.msra.mxu0 %v3537
    %3562 = vmatpush.msra.mxu0 %v3536
    %3563 = vmatpush.msra.mxu0 %v3535
    %3564 = vmatpush.msra.mxu0 %v3534
    %3565 = vmatmul.f32.gmra.mxu0 %v3544
    %v3566 = vpop.f32.mrf.mxu0
    %v3567 = vadd.f32 %v3541, %v3566
    %3568 = vmatmul.f32.gmra.mxu0 %v3547
    %v3569 = vpop.f32.mrf.mxu0
    %v3570 = vadd.f32 %v3541, %v3569
    %3571 = vdwg.mxu0
    %v3572 = vmax.f32 %v3567, 0.0
    %v3573 = vmax.f32 %v3570, 0.0
    %s3574 = scalar_lea.vmem %s19, 64
    %v3575 = vld [vmem:[%s3574] sm:$0xff]
    %v3576 = vld [vmem:[%s3574 + $0x8] sm:$0xff]
    %v3577 = vld [vmem:[%s3574 + $0x10] sm:$0xff]
    %v3578 = vld [vmem:[%s3574 + $0x18] sm:$0xff]
    %v3579 = vld [vmem:[%s3574 + $0x20] sm:$0xff]
    %v3580 = vld [vmem:[%s3574 + $0x28] sm:$0xff]
    %v3581 = vld [vmem:[%s3574 + $0x30] sm:$0xff]
    %v3582 = vld [vmem:[%s3574 + $0x38] sm:$0xff]
    %s3583 = scalar_lea.vmem %s20, 1
    %v3584 = vld [vmem:[%s3583] sm:$0x1]
    %v3586 = vperm.slane %v3584, 0
    %v3589 = vsel %vm1916, %v3572, 0
    %v3592 = vsel %vm1916, %v3573, 0
    %3594 = vmatpush.msra.mxu0 0.0
    %3595 = vmatpush.msra.mxu0 0.0
    %3596 = vmatpush.msra.mxu0 0.0
    %3597 = vmatpush.msra.mxu0 0.0
    %3598 = vmatpush.msra.mxu0 0.0
    %3599 = vmatpush.msra.mxu0 0.0
    %3600 = vmatpush.msra.mxu0 0.0
    %3601 = vmatpush.msra.mxu0 0.0
    %3602 = vmatpush.msra.mxu0 %v3582
    %3603 = vmatpush.msra.mxu0 %v3581
    %3604 = vmatpush.msra.mxu0 %v3580
    %3605 = vmatpush.msra.mxu0 %v3579
    %3606 = vmatpush.msra.mxu0 %v3578
    %3607 = vmatpush.msra.mxu0 %v3577
    %3608 = vmatpush.msra.mxu0 %v3576
    %3609 = vmatpush.msra.mxu0 %v3575
    %3610 = vmatmul.f32.gmra.mxu0 %v3589
    %v3611 = vpop.f32.mrf.mxu0
    %v3612 = vadd.f32 %v3586, %v3611
    %3613 = vmatmul.f32.gmra.mxu0 %v3592
    %v3614 = vpop.f32.mrf.mxu0
    %v3615 = vadd.f32 %v3586, %v3614
    %3616 = vdwg.mxu0
    %v3617 = vadd.f32 %v3612, %v3531
    %v3618 = vadd.f32 %v3615, %v3532
    %s3619 = scalar_lea.vmem %s21, 1
    %v3620 = vld [vmem:[%s3619] sm:$0x1]
    %s3621 = scalar_lea.vmem [#allocation23], 1
    %v3622 = vld [vmem:[%s3621] sm:$0x1]
    %v3623 = vsel %vm343, %v3617, 0.0
    %3624 = vadd.xlane.f32.xlu0 %v3623
    %v3625 = vpop.xlane.xlu0 %3624
    %v3626 = vsel %vm343, %v3618, 0.0
    %3627 = vadd.xlane.f32.xlu0 %v3626
    %v3628 = vpop.xlane.xlu0 %3627
    %v3629 = vmul.f32 %v3625, %v1038
    %v3630 = vmul.f32 %v3628, %v1038
    %v3631 = vsub.f32 %v3617, %v3629
    %v3632 = vsub.f32 %v3618, %v3630
    %v3633 = vmul.f32 %v3631, %v3631
    %v3634 = vmul.f32 %v3632, %v3632
    %v3635 = vsel %vm343, %v3633, 0.0
    %3636 = vadd.xlane.f32.xlu0 %v3635
    %v3637 = vpop.xlane.xlu0 %3636
    %v3638 = vsel %vm343, %v3634, 0.0
    %3639 = vadd.xlane.f32.xlu0 %v3638
    %v3640 = vpop.xlane.xlu0 %3639
    %v3641 = vmul.f32 %v3637, %v1038
    %v3642 = vmul.f32 %v3640, %v1038
    %v3643 = vadd.f32 %v3641, 1e-05
    %v3644 = vadd.f32 %v3642, 1e-05
    %v3645 = vrsqrt.pop %v3643
    %v3646 = vmul.f32 %v3645, %v3643
    %v3647 = vmul.f32 %v3646, %v3645
    %v3648 = vmul.f32 0.5, %v3647
    %v3649 = vsub.f32 1.5, %v3648
    %v3650 = vmul.f32 %v3645, %v3649
    %vm3651 = vweird.f32 %v3643
    %vm3652 = vweird.f32 %v3645
    %vm3653 = vmor %vm3651, %vm3652
    %v3654 = vsel %vm3653, %v3645, %v3650
    %v3655 = vrsqrt.pop %v3644
    %v3656 = vmul.f32 %v3655, %v3644
    %v3657 = vmul.f32 %v3656, %v3655
    %v3658 = vmul.f32 0.5, %v3657
    %v3659 = vsub.f32 1.5, %v3658
    %v3660 = vmul.f32 %v3655, %v3659
    %vm3661 = vweird.f32 %v3644
    %vm3662 = vweird.f32 %v3655
    %vm3663 = vmor %vm3661, %vm3662
    %v3664 = vsel %vm3663, %v3655, %v3660
    %v3665 = vmul.f32 %v3631, %v3654
    %v3666 = vmul.f32 %v3632, %v3664
    %v3668 = vperm.slane %v3620, 0
    %v3670 = vmul.f32 %v3665, %v3668
    %v3671 = vmul.f32 %v3666, %v3668
    %v3673 = vperm.slane %v3622, 0
    %v3675 = vadd.f32 %v3670, %v3673
    %v3676 = vadd.f32 %v3671, %v3673
    %v3677 = vld [vmem:[#allocation25] sm:$0xff]
    %v3678 = vld [vmem:[#allocation25 + $0x8] sm:$0xff]
    %v3679 = vld [vmem:[#allocation25 + $0x10] sm:$0xff]
    %v3680 = vld [vmem:[#allocation25 + $0x18] sm:$0xff]
    %v3681 = vld [vmem:[#allocation26] sm:$0x1]
    %v3683 = vperm.slane %v3681, 0
    %v3686 = vsel %vm343, %v3675, 0
    %v3689 = vsel %vm343, %v3676, 0
    %3691 = vmatpush.msra.mxu0 0.0
    %3692 = vmatpush.msra.mxu0 0.0
    %3693 = vmatpush.msra.mxu0 0.0
    %3694 = vmatpush.msra.mxu0 0.0
    %3695 = vmatpush.msra.mxu0 0.0
    %3696 = vmatpush.msra.mxu0 0.0
    %3697 = vmatpush.msra.mxu0 0.0
    %3698 = vmatpush.msra.mxu0 0.0
    %3699 = vmatpush.msra.mxu0 0.0
    %3700 = vmatpush.msra.mxu0 0.0
    %3701 = vmatpush.msra.mxu0 0.0
    %3702 = vmatpush.msra.mxu0 0.0
    %3703 = vmatpush.msra.mxu0 %v3680
    %3704 = vmatpush.msra.mxu0 %v3679
    %3705 = vmatpush.msra.mxu0 %v3678
    %3706 = vmatpush.msra.mxu0 %v3677
    %3707 = vmatmul.f32.gmra.mxu0 %v3686
    %v3708 = vpop.f32.mrf.mxu0
    %v3709 = vadd.f32 %v3683, %v3708
    %3710 = vmatmul.f32.gmra.mxu0 %v3689
    %v3711 = vpop.f32.mrf.mxu0
    %v3712 = vadd.f32 %v3683, %v3711
    %3713 = vdwg.mxu0
    %3714 = vst.msk [vmem:[#allocation28] sm:$0xff] %vm343, %v3709
    %3715 = vst.msk [vmem:[#allocation28 + $0x8] sm:$0xff] %vm343, %v3712
    // Predicated region
    $region166: #{transformer_decoder_forward.1} parent=1 // pred_check
      _
    $region167: #{transformer_decoder_forward.1} parent=1 // pred_check_branch
      %3717 = sbr.rel (0) target = $region169
    $region168: #{transformer_decoder_forward.1} parent=1 // pred_region
      %3719 = vsyncadd [#allocation4], 0
      %s3720 = sshll.u32 [#allocation28], 4
      %s3721 = int_to_ptr.vmem [resolvable:$true] %s3720
      %s3722 = sshll.u32 %s25, 4
      %s3723 = int_to_ptr.hbm [resolvable:$true] %s3722
      %3728 = dma.vmem_to_hbm [thread:$0]  %s3721, 256, %s3723, [#allocation4], 128, 128, 8
    $region169: #{transformer_decoder_forward.1} parent=1 // pred_fallthru
      _
    // Predicated region
    $region170: #{transformer_decoder_forward.1} parent=1 // pred_check
      _
    $region171: #{transformer_decoder_forward.1} parent=1 // pred_check_branch
      %3730 = sbr.rel (0) target = $region173
    $region172: #{transformer_decoder_forward.1} parent=1 // pred_region
      %3732 = dma.done [#allocation4], 256
    $region173: #{transformer_decoder_forward.1} parent=1 // pred_fallthru
      _
    %3733 = vsyncpa [#allocation3], 1
    %3734 = vsyncpa [#allocation6], 1
    %3735 = vsyncpa [#allocation9], 1
    %3736 = vsyncpa [#allocation12], 1
    %3737 = vsyncpa [#allocation15], 1
    %3738 = vsyncpa [#allocation18], 1
    %3739 = vsyncpa [#allocation21], 1
    %3740 = vsyncpa [#allocation24], 1
    %3741 = vsyncpa [#allocation27], 1
    %3742 = vsyncpa [#allocation4], 1

</llo_original>
